<compile_context>
chip_gen: v5e
topology: v5e:2x2
jax: 0.10.0
libtpu: 0.0.40
codegen_flags: <defaults>
</compile_context>

<pallas_src>
import functools
import math

import jax
import jax.numpy as jnp
from jax.experimental import pallas as pl
from jax.experimental.pallas import tpu as pltpu

ANCESTOR_INDEX = [
    [], [0], [0], [0], [0, 1], [0, 2], [0, 3], [0, 1, 4], [0, 2, 5], [0, 3, 6],
    [0, 1, 4, 7], [0, 2, 5, 8], [0, 3, 6, 9], [0, 3, 6, 9], [0, 3, 6, 9],
    [0, 3, 6, 9, 12], [0, 3, 6, 9, 13], [0, 3, 6, 9, 14], [0, 3, 6, 9, 13, 16],
    [0, 3, 6, 9, 14, 17], [0, 3, 6, 9, 13, 16, 18], [0, 3, 6, 9, 14, 17, 19],
    [0, 3, 6, 9, 13, 16, 18, 20], [0, 3, 6, 9, 14, 17, 19, 21],
]

NJOINT = 24
NP6 = 6                      # pose params per joint (6D rotation)
NPOSE = NJOINT * NP6         # 144
NSHAPE = 10
NCAM = 3
XFEAT = 256                  # feature dim of x (fixed by the module)

OUT_W = 256                  # fused, lane-dense output width (multiple of 128)
POSE_OFF = 0                 # out[:,   0:144] = pred_pose
SHAPE_OFF = NPOSE            # out[:, 144:154] = pred_shape
CAM_OFF = NPOSE + NSHAPE     # out[:, 154:157] = pred_cam ; 157:256 zero pad


# ----------------------------------------------------------------------------
# Pallas kernel: 4 dense GEMMs (K>=256, N in {2H, 256}), no concats, no loops.
# ----------------------------------------------------------------------------
def hscr_kernel(x_ref, p0_ref,
                w12x_ref, w12p_ref, b12_ref,
                wout_ref, wres_ref, bout_ref,
                out_ref, *, add_residual):
    cd = w12x_ref.dtype                    # MXU operand dtype (f32 or bf16)

    p0_f32 = p0_ref[...]                   # [pose0|shape0|cam0|0], fp32 residual
    p0 = p0_f32.astype(cd)                 # no-op when cd == f32

    # Merged fc1/fc2 (dropout in eval == identity):
    #   h12[:, :H] = h_shape = [x|shape0] @ W1 + b1
    #   h12[:, H:] = h_pose  = [x|pose0]  @ W2 + b2
    h12 = (jnp.dot(x_ref[...], w12x_ref[...], preferred_element_type=jnp.float32)
           + jnp.dot(p0, w12p_ref[...], preferred_element_type=jnp.float32)
           + b12_ref[...])
    h12 = h12.astype(cd)

    # Merged output heads (KTD folded + decshape + deccam), lane-dense width 256.
    out = (jnp.dot(h12, wout_ref[...], preferred_element_type=jnp.float32)
           + jnp.dot(p0, wres_ref[...], preferred_element_type=jnp.float32)
           + bout_ref[...])
    if add_residual:                       # bf16 path: exact fp32 residual add
        out = out + p0_f32
    out_ref[...] = out


# ----------------------------------------------------------------------------
# Parameter construction: PyTorch-equivalent init + weight folding/merging.
# ----------------------------------------------------------------------------
def init_params(key, hidden_dim, compute_dtype=jnp.float32):
    H = hidden_dim
    ks = jax.random.split(key, 4 + NJOINT)

    def linear(k, fan_in, fan_out):
        kw, kb = jax.random.split(k)
        bound = 1.0 / math.sqrt(fan_in)
        w = jax.random.uniform(kw, (fan_in, fan_out), jnp.float32, -bound, bound)
        b = jax.random.uniform(kb, (1, fan_out), jnp.float32, -bound, bound)
        return w, b

    w1, b1 = linear(ks[0], XFEAT + NSHAPE, H)            # fc1
    w2, b2 = linear(ks[1], XFEAT + NPOSE, H)              # fc2
    wds, bds = linear(ks[2], H, NSHAPE)                   # decshape
    wdc, bdc = linear(ks[3], H * 2 + NCAM, NCAM)          # deccam

    # KTD joint regressors: Linear(H + 6*len(anc) + 6, 6), xavier gain=0.01.
    full_ws, full_bs = [], []
    wkx = jnp.zeros((H, NPOSE), jnp.float32)              # h_pose -> all joints
    wgp_full = jnp.zeros((NPOSE, NPOSE), jnp.float32)     # sliding global-pose window
    wanc = jnp.zeros((NPOSE, NPOSE), jnp.float32)         # ancestor feedback blocks
    bk = jnp.zeros((1, NPOSE), jnp.float32)

    for j, anc in enumerate(ANCESTOR_INDEX):
        in_j = H + NP6 * len(anc) + NP6
        kw, kb = jax.random.split(ks[4 + j])
        gain = 0.01
        bound = gain * math.sqrt(6.0 / (in_j + NP6))
        wj = jax.random.uniform(kw, (in_j, NP6), jnp.float32, -bound, bound)
        bbound = 1.0 / math.sqrt(in_j)
        bj = jax.random.uniform(kb, (NP6,), jnp.float32, -bbound, bbound)
        full_ws.append(wj)
        full_bs.append(bj)

        wkx = wkx.at[:, NP6 * j:NP6 * (j + 1)].set(wj[:H])
        for k_anc, i in enumerate(anc):
            blk = wj[H + NP6 * k_anc:H + NP6 * (k_anc + 1)]
            wanc = wanc.at[NP6 * i:NP6 * (i + 1), NP6 * j:NP6 * (j + 1)].set(blk)
        # original code advances cnt by 1 per joint: global_pose[..., j:j+6]
        wgp_full = wgp_full.at[j:j + NP6, NP6 * j:NP6 * (j + 1)].set(wj[-NP6:])
        bk = bk.at[0, NP6 * j:NP6 * (j + 1)].set(bj)

    # Fold the kinematic tree exactly: P = B + P @ Wanc  =>  P = B @ (I-Wanc)^-1.
    # Wanc is nilpotent (ancestors have smaller joint index), Neumann is exact.
    M = jnp.eye(NPOSE, dtype=jnp.float32)
    Wp = wanc
    for _ in range(NJOINT - 1):
        M = M + Wp
        Wp = Wp @ wanc
    wkx_eff = wkx @ M
    wgp_eff = wgp_full @ M
    bk_eff = bk @ M

    # --- merged kernel weights --------------------------------------------
    P, S, C = NPOSE, NSHAPE, NCAM
    # x (256) -> h12 (2H):  [h_shape | h_pose]
    w12x = jnp.concatenate([w1[:XFEAT], w2[:XFEAT]], axis=1)        # (256, 2H)
    b12 = jnp.concatenate([b1, b2], axis=1)                          # (1, 2H)
    # p0 slab (256) -> h12 (2H): block-diagonal shape0->h_shape, pose0->h_pose
    w12p = jnp.zeros((OUT_W, 2 * H), jnp.float32)
    w12p = w12p.at[SHAPE_OFF:SHAPE_OFF + S, :H].set(w1[XFEAT:])
    w12p = w12p.at[:P, H:].set(w2[XFEAT:])
    # h12 (2H) -> out slab (256): folded KTD + decshape + deccam(h parts)
    wout = jnp.zeros((2 * H, OUT_W), jnp.float32)
    wout = wout.at[H:, POSE_OFF:POSE_OFF + P].set(wkx_eff)           # h_pose -> pose
    wout = wout.at[:H, SHAPE_OFF:SHAPE_OFF + S].set(wds)             # h_shape -> shape
    wout = wout.at[H:, CAM_OFF:CAM_OFF + C].set(wdc[:H])             # h_pose -> cam
    wout = wout.at[:H, CAM_OFF:CAM_OFF + C].set(wdc[H:2 * H])        # h_shape -> cam
    # p0 slab (256) -> out slab (256): global-pose feed + cam0 -> cam
    wres = jnp.zeros((OUT_W, OUT_W), jnp.float32)
    wres = wres.at[:P, :P].set(wgp_eff)
    wres = wres.at[CAM_OFF:CAM_OFF + C, CAM_OFF:CAM_OFF + C].set(wdc[2 * H:])
    bout = jnp.zeros((1, OUT_W), jnp.float32)
    bout = bout.at[:, POSE_OFF:POSE_OFF + P].set(bk_eff)
    bout = bout.at[:, SHAPE_OFF:SHAPE_OFF + S].set(bds)
    bout = bout.at[:, CAM_OFF:CAM_OFF + C].set(bdc)

    cd = jnp.dtype(compute_dtype)
    fold_residual = (cd == jnp.dtype(jnp.float32))
    if fold_residual:
        # fp32-weight path: fold "+ p0" into Wres (p0 lanes >= 157 are zero,
        # so adding the full identity is equivalent and exact).
        wres = wres + jnp.eye(OUT_W, dtype=jnp.float32)

    kernel_params = dict(
        w12x=w12x.astype(cd), w12p=w12p.astype(cd), b12=b12,
        wout=wout.astype(cd), wres=wres.astype(cd), bout=bout,
        add_residual=not fold_residual)
    ref_params = (w1, b1, w2, b2, wds, bds, wdc, bdc, full_ws, full_bs)
    return kernel_params, ref_params


# ----------------------------------------------------------------------------
# Wrapper: row-tiled grid, resident single-buffered weights, pipelined rows.
# ----------------------------------------------------------------------------
def _round_up(n, m):
    return ((n + m - 1) // m) * m


def hscr_forward(x, init_pose, init_shape, init_cam, params, *,
                 tm=256, vmem_limit_bytes=48 * 1024 * 1024):
    compute_dtype = params["w12x"].dtype
    B, T, _ = x.shape
    bt = B * T

    # Cast x in the wrapper (bf16 mode: halves the largest per-step DMA).
    x2 = x.reshape(bt, XFEAT).astype(compute_dtype)
    # fp32 residual/input slab matching the output lane layout.
    p0 = jnp.concatenate(
        [init_pose.reshape(bt, NPOSE).astype(jnp.float32),
         init_shape.reshape(bt, NSHAPE).astype(jnp.float32),
         init_cam.reshape(bt, NCAM).astype(jnp.float32),
         jnp.zeros((bt, OUT_W - NPOSE - NSHAPE - NCAM), jnp.float32)], axis=-1)

    # Row tile: multiple of 8 sublanes; keep >= 2 grid steps so a "parallel"
    # row axis can be sharded across v7x's two TensorCores.
    half = -(-bt // 2)
    tm = max(8, min(tm, _round_up(half, 8)))
    bt_pad = _round_up(bt, tm)
    pad = bt_pad - bt
    if pad:
        x2 = jnp.pad(x2, ((0, pad), (0, 0)))
        p0 = jnp.pad(p0, ((0, pad), (0, 0)))
    grid = (bt_pad // tm,)

    weights = (params["w12x"], params["w12p"], params["b12"],
               params["wout"], params["wres"], params["bout"])
    kernel = functools.partial(hscr_kernel, add_residual=params["add_residual"])
    out_shape = jax.ShapeDtypeStruct((bt_pad, OUT_W), jnp.float32)

    def rows(f):
        return pl.BlockSpec((tm, f), lambda i: (i, 0))

    def resident(arr, single_buffer):
        # Whole weight, same block every grid step (stays resident in VMEM).
        if single_buffer and hasattr(pl, "Buffered"):
            return pl.BlockSpec(arr.shape, lambda i: (0, 0),
                                pipeline_mode=pl.Buffered(1))
        return pl.BlockSpec(arr.shape, lambda i: (0, 0))

    def run(single_buffer_weights):
        return pl.pallas_call(
            kernel,
            grid_spec=pltpu.PrefetchScalarGridSpec(
                num_scalar_prefetch=0,
                grid=grid,
                in_specs=[rows(XFEAT), rows(OUT_W)]
                + [resident(w, single_buffer_weights) for w in weights],
                out_specs=rows(OUT_W)),
            out_shape=out_shape,
            compiler_params=pltpu.CompilerParams(
                dimension_semantics=("parallel",),
                vmem_limit_bytes=vmem_limit_bytes),
        )(x2, p0, *weights)

    try:
        out = run(True)          # single-buffered resident weights
        out.block_until_ready()
    except Exception:            # pipeline_mode unsupported -> default buffering
        out = run(False)

    pred_pose = out[:bt, POSE_OFF:POSE_OFF + NPOSE]
    pred_shape = out[:bt, SHAPE_OFF:SHAPE_OFF + NSHAPE]
    pred_cam = out[:bt, CAM_OFF:CAM_OFF + NCAM]
    return pred_pose, pred_shape, pred_cam


# ----------------------------------------------------------------------------
# Pure-JAX reference (mirrors the PyTorch forward: per-joint loop, fp32).
# ----------------------------------------------------------------------------
def hscr_reference(x, init_pose, init_shape, init_cam, ref_params):
    w1, b1, w2, b2, wds, bds, wdc, bdc, full_ws, full_bs = ref_params
    B, T, _ = x.shape
    bt = B * T
    x2 = x.reshape(bt, XFEAT)
    pose0 = init_pose.reshape(bt, NPOSE)
    shape0 = init_shape.reshape(bt, NSHAPE)
    cam0 = init_cam.reshape(bt, NCAM)

    mm = lambda a, b: jnp.dot(a, b, precision=jax.lax.Precision.HIGHEST)

    h_shape = mm(jnp.concatenate([x2, shape0], -1), w1) + b1
    h_pose = mm(jnp.concatenate([x2, pose0], -1), w2) + b2

    pose = []
    for cnt, (anc, wj, bj) in enumerate(zip(ANCESTOR_INDEX, full_ws, full_bs)):
        ances = jnp.concatenate([h_pose] + [pose[i] for i in anc], -1)
        ances = jnp.concatenate([ances, pose0[:, cnt:cnt + NP6]], -1)
        pose.append(mm(ances, wj) + bj)
    pred_pose = jnp.concatenate(pose, -1) + pose0
    pred_shape = mm(h_shape, wds) + bds + shape0
    pred_cam = mm(jnp.concatenate([h_pose, h_shape, cam0], -1), wdc) + bdc + cam0
    return pred_pose, pred_shape, pred_cam


# ----------------------------------------------------------------------------
if __name__ == "__main__":
    B, T = 2, 8
    HIDDEN = 256   # small hidden_dim for the synthetic test (module default: 1024)

    key = jax.random.PRNGKey(0)
    k_x, k_p, k_s, k_c, k_params = jax.random.split(key, 5)
    x = jax.random.normal(k_x, (B, T, XFEAT), jnp.float32)
    init_pose = 0.1 * jax.random.normal(k_p, (B, T, NPOSE), jnp.float32)
    init_shape = 0.1 * jax.random.normal(k_s, (B, T, NSHAPE), jnp.float32)
    init_cam = 0.1 * jax.random.normal(k_c, (B, T, NCAM), jnp.float32)

    # fp32-weight path: folded KTD, merged GEMMs, residual folded into Wres.
    # Tolerance allows for MXU f32-matmul pass decomposition.
    params_f32, ref_params = init_params(k_params, HIDDEN, jnp.float32)
    ref_pose, ref_shape, ref_cam = hscr_reference(
        x, init_pose, init_shape, init_cam, ref_params)

    pred_pose, pred_shape, pred_cam = hscr_forward(
        x, init_pose, init_shape, init_cam, params_f32)
    jax.block_until_ready((pred_pose, pred_shape, pred_cam))
    assert jnp.allclose(pred_pose, ref_pose, rtol=1e-2, atol=2e-3)
    assert jnp.allclose(pred_shape, ref_shape, rtol=1e-2, atol=2e-3)
    assert jnp.allclose(pred_cam, ref_cam, rtol=1e-2, atol=2e-3)

    # bf16 path (MXU-rate operands, fp32 accumulation + fp32 residual add).
    params_bf16, _ = init_params(k_params, HIDDEN, jnp.bfloat16)
    p16, s16, c16 = hscr_forward(x, init_pose, init_shape, init_cam, params_bf16)
    jax.block_until_ready((p16, s16, c16))
    assert jnp.allclose(p16, ref_pose, rtol=5e-2, atol=1e-2)
    assert jnp.allclose(s16, ref_shape, rtol=5e-2, atol=1e-2)
    assert jnp.allclose(c16, ref_cam, rtol=5e-2, atol=1e-2)

    print("KERNEL_OK")
</pallas_src>

<mosaic_0001>
module attributes {stable_mosaic.version = 11 : i64} {
  func.func @hscr_kernel(%arg0: i32, %arg1: memref<8x256xf32, #tpu.memory_space<vmem>>, %arg2: memref<8x256xf32, #tpu.memory_space<vmem>>, %arg3: memref<256x512xf32, #tpu.memory_space<vmem>>, %arg4: memref<256x512xf32, #tpu.memory_space<vmem>>, %arg5: memref<1x512xf32, #tpu.memory_space<vmem>>, %arg6: memref<512x256xf32, #tpu.memory_space<vmem>>, %arg7: memref<256x256xf32, #tpu.memory_space<vmem>>, %arg8: memref<1x256xf32, #tpu.memory_space<vmem>>, %arg9: memref<8x256xf32, #tpu.memory_space<vmem>>) attributes {dimension_semantics = [#tpu.dimension_semantics<parallel>], iteration_bounds = array<i64: 2>, scalar_prefetch = 0 : i64, scratch_operands = 0 : i64, tpu.core_type = #tpu.core_type<tc>, window_params = [{transform_indices = @transform_0, window_bounds = array<i64: 8, 256>}, {transform_indices = @transform_1, window_bounds = array<i64: 8, 256>}, {pipeline_mode = #tpu.pipeline_mode<synchronous>, transform_indices = @transform_2, window_bounds = array<i64: 256, 512>}, {pipeline_mode = #tpu.pipeline_mode<synchronous>, transform_indices = @transform_3, window_bounds = array<i64: 256, 512>}, {pipeline_mode = #tpu.pipeline_mode<synchronous>, transform_indices = @transform_4, window_bounds = array<i64: 1, 512>}, {pipeline_mode = #tpu.pipeline_mode<synchronous>, transform_indices = @transform_5, window_bounds = array<i64: 512, 256>}, {pipeline_mode = #tpu.pipeline_mode<synchronous>, transform_indices = @transform_6, window_bounds = array<i64: 256, 256>}, {pipeline_mode = #tpu.pipeline_mode<synchronous>, transform_indices = @transform_7, window_bounds = array<i64: 1, 256>}, {transform_indices = @transform_8, window_bounds = array<i64: 8, 256>}]} {
    %c0 = arith.constant 0 : index
    %c0_0 = arith.constant 0 : index
    %0 = vector.load %arg2[%c0, %c0_0] : memref<8x256xf32, #tpu.memory_space<vmem>>, vector<8x256xf32>
    %c0_1 = arith.constant 0 : index
    %c0_2 = arith.constant 0 : index
    %1 = vector.load %arg1[%c0_1, %c0_2] : memref<8x256xf32, #tpu.memory_space<vmem>>, vector<8x256xf32>
    %c0_3 = arith.constant 0 : index
    %c0_4 = arith.constant 0 : index
    %2 = vector.load %arg3[%c0_3, %c0_4] : memref<256x512xf32, #tpu.memory_space<vmem>>, vector<256x512xf32>
    %cst = arith.constant dense<0.000000e+00> : vector<8x512xf32>
    %3 = tpu.matmul %1, %2, %cst {dimension_numbers = #tpu.dot_dimension_numbers<[1], [0], [0], [1], [0, 0, 1, 1], [], []>} : vector<8x256xf32>, vector<256x512xf32>, vector<8x512xf32> -> vector<8x512xf32>
    %c0_5 = arith.constant 0 : index
    %c0_6 = arith.constant 0 : index
    %4 = vector.load %arg4[%c0_5, %c0_6] : memref<256x512xf32, #tpu.memory_space<vmem>>, vector<256x512xf32>
    %cst_7 = arith.constant dense<0.000000e+00> : vector<8x512xf32>
    %5 = tpu.matmul %0, %4, %cst_7 {dimension_numbers = #tpu.dot_dimension_numbers<[1], [0], [0], [1], [0, 0, 1, 1], [], []>} : vector<8x256xf32>, vector<256x512xf32>, vector<8x512xf32> -> vector<8x512xf32>
    %6 = arith.addf %3, %5 : vector<8x512xf32>
    %c0_8 = arith.constant 0 : index
    %c0_9 = arith.constant 0 : index
    %7 = vector.load %arg5[%c0_8, %c0_9] : memref<1x512xf32, #tpu.memory_space<vmem>>, vector<1x512xf32>
    %8 = vector.broadcast %7 : vector<1x512xf32> to vector<8x512xf32>
    %9 = arith.addf %6, %8 : vector<8x512xf32>
    %c0_10 = arith.constant 0 : index
    %c0_11 = arith.constant 0 : index
    %10 = vector.load %arg6[%c0_10, %c0_11] : memref<512x256xf32, #tpu.memory_space<vmem>>, vector<512x256xf32>
    %cst_12 = arith.constant dense<0.000000e+00> : vector<8x256xf32>
    %11 = tpu.matmul %9, %10, %cst_12 {dimension_numbers = #tpu.dot_dimension_numbers<[1], [0], [0], [1], [0, 0, 1, 1], [], []>} : vector<8x512xf32>, vector<512x256xf32>, vector<8x256xf32> -> vector<8x256xf32>
    %c0_13 = arith.constant 0 : index
    %c0_14 = arith.constant 0 : index
    %12 = vector.load %arg7[%c0_13, %c0_14] : memref<256x256xf32, #tpu.memory_space<vmem>>, vector<256x256xf32>
    %cst_15 = arith.constant dense<0.000000e+00> : vector<8x256xf32>
    %13 = tpu.matmul %0, %12, %cst_15 {dimension_numbers = #tpu.dot_dimension_numbers<[1], [0], [0], [1], [0, 0, 1, 1], [], []>} : vector<8x256xf32>, vector<256x256xf32>, vector<8x256xf32> -> vector<8x256xf32>
    %14 = arith.addf %11, %13 : vector<8x256xf32>
    %c0_16 = arith.constant 0 : index
    %c0_17 = arith.constant 0 : index
    %15 = vector.load %arg8[%c0_16, %c0_17] : memref<1x256xf32, #tpu.memory_space<vmem>>, vector<1x256xf32>
    %16 = vector.broadcast %15 : vector<1x256xf32> to vector<8x256xf32>
    %17 = arith.addf %14, %16 : vector<8x256xf32>
    %c0_18 = arith.constant 0 : index
    %c0_19 = arith.constant 0 : index
    %18 = vector.load %arg9[%c0_18, %c0_19] : memref<8x256xf32, #tpu.memory_space<vmem>>, vector<8x256xf32>
    tpu.vector_store %arg9[%c0_18, %c0_19], %17 {strides = array<i32>} : memref<8x256xf32, #tpu.memory_space<vmem>>, vector<8x256xf32>,
    return
  }
  func.func @transform_0(%arg0: i32) -> (i32, i32) {
    %c0_i32 = arith.constant 0 : i32
    %c0_i32_0 = arith.constant 0 : i32
    return %arg0, %c0_i32 : i32, i32
  }
  func.func @transform_1(%arg0: i32) -> (i32, i32) {
    %c0_i32 = arith.constant 0 : i32
    %c0_i32_0 = arith.constant 0 : i32
    return %arg0, %c0_i32 : i32, i32
  }
  func.func @transform_2(%arg0: i32) -> (i32, i32) {
    %c0_i32 = arith.constant 0 : i32
    %c0_i32_0 = arith.constant 0 : i32
    %c0_i32_1 = arith.constant 0 : i32
    return %c0_i32, %c0_i32_0 : i32, i32
  }
  func.func @transform_3(%arg0: i32) -> (i32, i32) {
    %c0_i32 = arith.constant 0 : i32
    %c0_i32_0 = arith.constant 0 : i32
    %c0_i32_1 = arith.constant 0 : i32
    return %c0_i32, %c0_i32_0 : i32, i32
  }
  func.func @transform_4(%arg0: i32) -> (i32, i32) {
    %c0_i32 = arith.constant 0 : i32
    %c0_i32_0 = arith.constant 0 : i32
    %c0_i32_1 = arith.constant 0 : i32
    return %c0_i32, %c0_i32_0 : i32, i32
  }
  func.func @transform_5(%arg0: i32) -> (i32, i32) {
    %c0_i32 = arith.constant 0 : i32
    %c0_i32_0 = arith.constant 0 : i32
    %c0_i32_1 = arith.constant 0 : i32
    return %c0_i32, %c0_i32_0 : i32, i32
  }
  func.func @transform_6(%arg0: i32) -> (i32, i32) {
    %c0_i32 = arith.constant 0 : i32
    %c0_i32_0 = arith.constant 0 : i32
    %c0_i32_1 = arith.constant 0 : i32
    return %c0_i32, %c0_i32_0 : i32, i32
  }
  func.func @transform_7(%arg0: i32) -> (i32, i32) {
    %c0_i32 = arith.constant 0 : i32
    %c0_i32_0 = arith.constant 0 : i32
    %c0_i32_1 = arith.constant 0 : i32
    return %c0_i32, %c0_i32_0 : i32, i32
  }
  func.func @transform_8(%arg0: i32) -> (i32, i32) {
    %c0_i32 = arith.constant 0 : i32
    %c0_i32_0 = arith.constant 0 : i32
    return %arg0, %c0_i32 : i32, i32
  }
}

module attributes {stable_mosaic.version = 11 : i64} {
  func.func @hscr_kernel(%arg0: i32, %arg1: memref<8x256xf32, #tpu.memory_space<vmem>>, %arg2: memref<8x256xf32, #tpu.memory_space<vmem>>, %arg3: memref<256x512xf32, #tpu.memory_space<vmem>>, %arg4: memref<256x512xf32, #tpu.memory_space<vmem>>, %arg5: memref<1x512xf32, #tpu.memory_space<vmem>>, %arg6: memref<512x256xf32, #tpu.memory_space<vmem>>, %arg7: memref<256x256xf32, #tpu.memory_space<vmem>>, %arg8: memref<1x256xf32, #tpu.memory_space<vmem>>, %arg9: memref<8x256xf32, #tpu.memory_space<vmem>>) attributes {dimension_semantics = [#tpu.dimension_semantics<parallel>], iteration_bounds = array<i64: 2>, scalar_prefetch = 0 : i64, scratch_operands = 0 : i64, tpu.core_type = #tpu.core_type<tc>, window_params = [{transform_indices = @transform_0, window_bounds = array<i64: 8, 256>}, {transform_indices = @transform_1, window_bounds = array<i64: 8, 256>}, {pipeline_mode = #tpu.pipeline_mode<synchronous>, transform_indices = @transform_2, window_bounds = array<i64: 256, 512>}, {pipeline_mode = #tpu.pipeline_mode<synchronous>, transform_indices = @transform_3, window_bounds = array<i64: 256, 512>}, {pipeline_mode = #tpu.pipeline_mode<synchronous>, transform_indices = @transform_4, window_bounds = array<i64: 1, 512>}, {pipeline_mode = #tpu.pipeline_mode<synchronous>, transform_indices = @transform_5, window_bounds = array<i64: 512, 256>}, {pipeline_mode = #tpu.pipeline_mode<synchronous>, transform_indices = @transform_6, window_bounds = array<i64: 256, 256>}, {pipeline_mode = #tpu.pipeline_mode<synchronous>, transform_indices = @transform_7, window_bounds = array<i64: 1, 256>}, {transform_indices = @transform_8, window_bounds = array<i64: 8, 256>}]} {
    %c0 = arith.constant 0 : index
    %c0_0 = arith.constant 0 : index
    %0 = vector.load %arg2[%c0, %c0_0] : memref<8x256xf32, #tpu.memory_space<vmem>>, vector<8x256xf32>
    %c0_1 = arith.constant 0 : index
    %c0_2 = arith.constant 0 : index
    %1 = vector.load %arg1[%c0_1, %c0_2] : memref<8x256xf32, #tpu.memory_space<vmem>>, vector<8x256xf32>
    %c0_3 = arith.constant 0 : index
    %c0_4 = arith.constant 0 : index
    %2 = vector.load %arg3[%c0_3, %c0_4] : memref<256x512xf32, #tpu.memory_space<vmem>>, vector<256x512xf32>
    %cst = arith.constant dense<0.000000e+00> : vector<8x512xf32>
    %3 = tpu.matmul %1, %2, %cst {dimension_numbers = #tpu.dot_dimension_numbers<[1], [0], [0], [1], [0, 0, 1, 1], [], []>} : vector<8x256xf32>, vector<256x512xf32>, vector<8x512xf32> -> vector<8x512xf32>
    %c0_5 = arith.constant 0 : index
    %c0_6 = arith.constant 0 : index
    %4 = vector.load %arg4[%c0_5, %c0_6] : memref<256x512xf32, #tpu.memory_space<vmem>>, vector<256x512xf32>
    %cst_7 = arith.constant dense<0.000000e+00> : vector<8x512xf32>
    %5 = tpu.matmul %0, %4, %cst_7 {dimension_numbers = #tpu.dot_dimension_numbers<[1], [0], [0], [1], [0, 0, 1, 1], [], []>} : vector<8x256xf32>, vector<256x512xf32>, vector<8x512xf32> -> vector<8x512xf32>
    %6 = arith.addf %3, %5 : vector<8x512xf32>
    %c0_8 = arith.constant 0 : index
    %c0_9 = arith.constant 0 : index
    %7 = vector.load %arg5[%c0_8, %c0_9] : memref<1x512xf32, #tpu.memory_space<vmem>>, vector<1x512xf32>
    %8 = vector.broadcast %7 : vector<1x512xf32> to vector<8x512xf32>
    %9 = arith.addf %6, %8 : vector<8x512xf32>
    %c0_10 = arith.constant 0 : index
    %c0_11 = arith.constant 0 : index
    %10 = vector.load %arg6[%c0_10, %c0_11] : memref<512x256xf32, #tpu.memory_space<vmem>>, vector<512x256xf32>
    %cst_12 = arith.constant dense<0.000000e+00> : vector<8x256xf32>
    %11 = tpu.matmul %9, %10, %cst_12 {dimension_numbers = #tpu.dot_dimension_numbers<[1], [0], [0], [1], [0, 0, 1, 1], [], []>} : vector<8x512xf32>, vector<512x256xf32>, vector<8x256xf32> -> vector<8x256xf32>
    %c0_13 = arith.constant 0 : index
    %c0_14 = arith.constant 0 : index
    %12 = vector.load %arg7[%c0_13, %c0_14] : memref<256x256xf32, #tpu.memory_space<vmem>>, vector<256x256xf32>
    %cst_15 = arith.constant dense<0.000000e+00> : vector<8x256xf32>
    %13 = tpu.matmul %0, %12, %cst_15 {dimension_numbers = #tpu.dot_dimension_numbers<[1], [0], [0], [1], [0, 0, 1, 1], [], []>} : vector<8x256xf32>, vector<256x256xf32>, vector<8x256xf32> -> vector<8x256xf32>
    %14 = arith.addf %11, %13 : vector<8x256xf32>
    %c0_16 = arith.constant 0 : index
    %c0_17 = arith.constant 0 : index
    %15 = vector.load %arg8[%c0_16, %c0_17] : memref<1x256xf32, #tpu.memory_space<vmem>>, vector<1x256xf32>
    %16 = vector.broadcast %15 : vector<1x256xf32> to vector<8x256xf32>
    %17 = arith.addf %14, %16 : vector<8x256xf32>
    %c0_18 = arith.constant 0 : index
    %c0_19 = arith.constant 0 : index
    %18 = vector.load %arg9[%c0_18, %c0_19] : memref<8x256xf32, #tpu.memory_space<vmem>>, vector<8x256xf32>
    tpu.vector_store %arg9[%c0_18, %c0_19], %17 {strides = array<i32>} : memref<8x256xf32, #tpu.memory_space<vmem>>, vector<8x256xf32>,
    return
  }
  func.func @transform_0(%arg0: i32) -> (i32, i32) {
    %c0_i32 = arith.constant 0 : i32
    %c0_i32_0 = arith.constant 0 : i32
    return %arg0, %c0_i32 : i32, i32
  }
  func.func @transform_1(%arg0: i32) -> (i32, i32) {
    %c0_i32 = arith.constant 0 : i32
    %c0_i32_0 = arith.constant 0 : i32
    return %arg0, %c0_i32 : i32, i32
  }
  func.func @transform_2(%arg0: i32) -> (i32, i32) {
    %c0_i32 = arith.constant 0 : i32
    %c0_i32_0 = arith.constant 0 : i32
    %c0_i32_1 = arith.constant 0 : i32
    return %c0_i32, %c0_i32_0 : i32, i32
  }
  func.func @transform_3(%arg0: i32) -> (i32, i32) {
    %c0_i32 = arith.constant 0 : i32
    %c0_i32_0 = arith.constant 0 : i32
    %c0_i32_1 = arith.constant 0 : i32
    return %c0_i32, %c0_i32_0 : i32, i32
  }
  func.func @transform_4(%arg0: i32) -> (i32, i32) {
    %c0_i32 = arith.constant 0 : i32
    %c0_i32_0 = arith.constant 0 : i32
    %c0_i32_1 = arith.constant 0 : i32
    return %c0_i32, %c0_i32_0 : i32, i32
  }
  func.func @transform_5(%arg0: i32) -> (i32, i32) {
    %c0_i32 = arith.constant 0 : i32
    %c0_i32_0 = arith.constant 0 : i32
    %c0_i32_1 = arith.constant 0 : i32
    return %c0_i32, %c0_i32_0 : i32, i32
  }
  func.func @transform_6(%arg0: i32) -> (i32, i32) {
    %c0_i32 = arith.constant 0 : i32
    %c0_i32_0 = arith.constant 0 : i32
    %c0_i32_1 = arith.constant 0 : i32
    return %c0_i32, %c0_i32_0 : i32, i32
  }
  func.func @transform_7(%arg0: i32) -> (i32, i32) {
    %c0_i32 = arith.constant 0 : i32
    %c0_i32_0 = arith.constant 0 : i32
    %c0_i32_1 = arith.constant 0 : i32
    return %c0_i32, %c0_i32_0 : i32, i32
  }
  func.func @transform_8(%arg0: i32) -> (i32, i32) {
    %c0_i32 = arith.constant 0 : i32
    %c0_i32_0 = arith.constant 0 : i32
    return %arg0, %c0_i32 : i32, i32
  }
}

</mosaic_0001>

<llo_original>
// kernel: tpu_custom_call.1
$region0: #{tpu_custom_call.1}
  #allocation0 [shape = 'u32[]', space=smem, size = 0x4, offset = 0x4, fixed_abs, tag = 'smem constant byte address 0x4 - core index']
  #allocation1 [shape = 'u32[72,128]{1,0:T(1,128)}', space=vmem, size = 0x9000, scoped, tag = 'internal scratch']
  %s0 = inlined_call_operand.hbm [shape: f32[16,256], index: 0, kind: input, shape index: {}]
  %s1 = inlined_call_operand.hbm [shape: f32[16,256], index: 1, kind: input, shape index: {}]
  %s2 = inlined_call_operand.hbm [shape: f32[256,512], index: 2, kind: input, shape index: {}]
  %s3 = inlined_call_operand.hbm [shape: f32[256,512], index: 3, kind: input, shape index: {}]
  %s4 = inlined_call_operand.hbm [shape: f32[1,512], index: 4, kind: input, shape index: {}]
  %s5 = inlined_call_operand.hbm [shape: f32[512,256], index: 5, kind: input, shape index: {}]
  %s6 = inlined_call_operand.hbm [shape: f32[256,256], index: 6, kind: input, shape index: {}]
  %s7 = inlined_call_operand.vmem [shape: f32[1,256], index: 7, kind: input, shape index: {}]
  %s8 = inlined_call_operand.hbm [shape: f32[16,256], index: 8, kind: output, shape index: {}]
  %s9 = sld [smem:[#allocation0]]
  $region93: #{tpu_custom_call.1} parent=0
    _
  %s11 = ssub.s32 1, %s9
  %s12 = scalar_select 0, %s11, %s9
  $region1: #{tpu_custom_call.1} parent=0
    #allocation2 [shape = 'u8[16384]{0}', space=vmem, size = 0x4000, scoped, tag = 'input window, operand 0']
    #allocation3 [shape = 's32[2]{0}', space=sflag, size = 0x8, scoped, tag = 'scoped memory for tpu_custom_call.1']
    #allocation4 [shape = 's32[2]{0}', space=sflag, size = 0x8, scoped, tag = 'scoped memory for tpu_custom_call.1']
    #allocation5 [shape = 'u8[16384]{0}', space=vmem, size = 0x4000, scoped, tag = 'input window, operand 1']
    #allocation6 [shape = 's32[2]{0}', space=sflag, size = 0x8, scoped, tag = 'scoped memory for tpu_custom_call.1']
    #allocation7 [shape = 'u8[524288]{0}', space=vmem, size = 0x80000, scoped, tag = 'input window, operand 2, single buffered']
    #allocation8 [shape = 'u8[524288]{0}', space=vmem, size = 0x80000, scoped, tag = 'input window, operand 3, single buffered']
    #allocation9 [shape = 's32[1]{0}', space=sflag, size = 0x4, scoped, tag = 'scoped memory for tpu_custom_call.1']
    #allocation10 [shape = 'u8[2048]{0}', space=vmem, size = 0x800, scoped, tag = 'input window, operand 4, single buffered']
    #allocation11 [shape = 'u8[524288]{0}', space=vmem, size = 0x80000, scoped, tag = 'input window, operand 5, single buffered']
    #allocation12 [shape = 's32[1]{0}', space=sflag, size = 0x4, scoped, tag = 'scoped memory for tpu_custom_call.1']
    #allocation13 [shape = 'u8[262144]{0}', space=vmem, size = 0x40000, scoped, tag = 'input window, operand 6, single buffered']
    #allocation14 [shape = 'u8[16384]{0}', space=vmem, size = 0x4000, scoped, tag = 'output window, operand 0']
    %13 = vsyncpa [#allocation3], 0
    %s14 = scalar_lea.sflag [#allocation3], 1
    %15 = vsyncpa %s14, 0
    %16 = vsyncpa [#allocation6], 0
    %s17 = scalar_lea.sflag [#allocation6], 1
    %18 = vsyncpa %s17, 0
    %19 = vsyncpa [#allocation9], 0
    %20 = vsyncpa [#allocation12], 0
    %21 = vsyncpa [#allocation4], 0
    %s22 = scalar_lea.sflag [#allocation4], 1
    %23 = vsyncpa %s22, 0
    loop: start=0, step=1, limit=4
    $region2: #{tpu_custom_call.1} parent=1 // loop_pre_header
      _
    $region3: #{tpu_custom_call.1} parent=1 // loop_header
      %s25 = sphi 0, %s29
      %p26 = scmp.ge.s32.totalorder %s25, 4
      %s35 = sphi 0, %s37
      %s38 = sphi 0, %s35
      %s39 = sphi 0, %s38
      %s55 = sphi 0, %s39
      %s61 = sphi 0, %s63
      %s64 = sphi 0, %s61
      %s65 = sphi 0, %s64
      %s81 = sphi 0, %s65
      %s85 = sphi 0, %s85
      %s87 = sphi 0, %s85
      %s88 = sphi 0, %s87
      %s102 = sphi 0, %s88
      %s106 = sphi 0, %s106
      %s108 = sphi 0, %s106
      %s109 = sphi 0, %s108
      %s123 = sphi 0, %s109
      %s127 = sphi 0, %s127
      %s129 = sphi 0, %s127
      %s130 = sphi 0, %s129
      %s144 = sphi 0, %s130
      %s148 = sphi 0, %s148
      %s150 = sphi 0, %s148
      %s151 = sphi 0, %s150
      %s165 = sphi 0, %s151
      %s169 = sphi 0, %s169
      %s171 = sphi 0, %s169
      %s172 = sphi 0, %s171
      %s186 = sphi 0, %s172
      %s190 = sphi 0, %s190
      %s192 = sphi 0, %s190
      %s193 = sphi 0, %s192
      %s207 = sphi 0, %s193
      %s213 = sphi 0, %s215
      %s216 = sphi 0, %s213
      %s217 = sphi 0, %s216
      %s233 = sphi 0, %s217
    $region4: #{tpu_custom_call.1} parent=1 // loop_header_branch
      %28 = sbr.rel (%p26) target = $region8
    $region5: #{tpu_custom_call.1} parent=1 // loop_body
      %s30 = ssub.s32 %s25, 1
      %s31 = ssub.s32 %s25, 2
      %s32 = sadd.s32 %s25, 1
      %s33 = ssub.s32 %s25, %s32
      %p34 = scmp.eq.s32.totalorder %s33, 0
      %s36 = sadd.s32 %s35, 1
      %s37 = scalar_select %p34, %s35, %s36
      %p40 = pneg %p34
      %p41 = scmp.eq.s32.totalorder %s25, 1
      %p42 = por %p40, %p41
      %p43 = scmp.ne.s32.totalorder %s35, %s38
      %p44 = scmp.eq.s32.totalorder %s25, 0
      %p45 = por %p43, %p44
      %p46 = scmp.ne.s32.totalorder %s35, %s38
      %p47 = scmp.eq.s32.totalorder %s30, 1
      %p48 = por %p46, %p47
      %p49 = scmp.ne.s32.totalorder %s38, %s39
      %p50 = scmp.eq.s32.totalorder %s30, 0
      %p51 = por %p49, %p50
      %p52 = scmp.ne.s32.totalorder %s38, %s39
      %p53 = scmp.eq.s32.totalorder %s31, 1
      %p54 = por %p52, %p53
      %p56 = scmp.ne.s32.totalorder %s39, %s55
      %p57 = scmp.eq.s32.totalorder %s31, 0
      %p58 = por %p56, %p57
      %s59 = ssub.s32 %s25, %s32
      %p60 = scmp.eq.s32.totalorder %s59, 0
      %s62 = sadd.s32 %s61, 1
      %s63 = scalar_select %p60, %s61, %s62
      %p66 = pneg %p60
      %p67 = scmp.eq.s32.totalorder %s25, 1
      %p68 = por %p66, %p67
      %p69 = scmp.ne.s32.totalorder %s61, %s64
      %p70 = scmp.eq.s32.totalorder %s25, 0
      %p71 = por %p69, %p70
      %p72 = scmp.ne.s32.totalorder %s61, %s64
      %p73 = scmp.eq.s32.totalorder %s30, 1
      %p74 = por %p72, %p73
      %p75 = scmp.ne.s32.totalorder %s64, %s65
      %p76 = scmp.eq.s32.totalorder %s30, 0
      %p77 = por %p75, %p76
      %p78 = scmp.ne.s32.totalorder %s64, %s65
      %p79 = scmp.eq.s32.totalorder %s31, 1
      %p80 = por %p78, %p79
      %p82 = scmp.ne.s32.totalorder %s65, %s81
      %p83 = scmp.eq.s32.totalorder %s31, 0
      %p84 = por %p82, %p83
      %s86 = sadd.s32 %s85, 1
      %p89 = scmp.eq.s32.totalorder %s25, 1
      %p90 = scmp.ne.s32.totalorder %s85, %s87
      %p91 = scmp.eq.s32.totalorder %s25, 0
      %p92 = por %p90, %p91
      %p93 = scmp.ne.s32.totalorder %s85, %s87
      %p94 = scmp.eq.s32.totalorder %s30, 1
      %p95 = por %p93, %p94
      %p96 = scmp.ne.s32.totalorder %s87, %s88
      %p97 = scmp.eq.s32.totalorder %s30, 0
      %p98 = por %p96, %p97
      %p99 = scmp.ne.s32.totalorder %s87, %s88
      %p100 = scmp.eq.s32.totalorder %s31, 1
      %p101 = por %p99, %p100
      %p103 = scmp.ne.s32.totalorder %s88, %s102
      %p104 = scmp.eq.s32.totalorder %s31, 0
      %p105 = por %p103, %p104
      %s107 = sadd.s32 %s106, 1
      %p110 = scmp.eq.s32.totalorder %s25, 1
      %p111 = scmp.ne.s32.totalorder %s106, %s108
      %p112 = scmp.eq.s32.totalorder %s25, 0
      %p113 = por %p111, %p112
      %p114 = scmp.ne.s32.totalorder %s106, %s108
      %p115 = scmp.eq.s32.totalorder %s30, 1
      %p116 = por %p114, %p115
      %p117 = scmp.ne.s32.totalorder %s108, %s109
      %p118 = scmp.eq.s32.totalorder %s30, 0
      %p119 = por %p117, %p118
      %p120 = scmp.ne.s32.totalorder %s108, %s109
      %p121 = scmp.eq.s32.totalorder %s31, 1
      %p122 = por %p120, %p121
      %p124 = scmp.ne.s32.totalorder %s109, %s123
      %p125 = scmp.eq.s32.totalorder %s31, 0
      %p126 = por %p124, %p125
      %s128 = sadd.s32 %s127, 1
      %p131 = scmp.eq.s32.totalorder %s25, 1
      %p132 = scmp.ne.s32.totalorder %s127, %s129
      %p133 = scmp.eq.s32.totalorder %s25, 0
      %p134 = por %p132, %p133
      %p135 = scmp.ne.s32.totalorder %s127, %s129
      %p136 = scmp.eq.s32.totalorder %s30, 1
      %p137 = por %p135, %p136
      %p138 = scmp.ne.s32.totalorder %s129, %s130
      %p139 = scmp.eq.s32.totalorder %s30, 0
      %p140 = por %p138, %p139
      %p141 = scmp.ne.s32.totalorder %s129, %s130
      %p142 = scmp.eq.s32.totalorder %s31, 1
      %p143 = por %p141, %p142
      %p145 = scmp.ne.s32.totalorder %s130, %s144
      %p146 = scmp.eq.s32.totalorder %s31, 0
      %p147 = por %p145, %p146
      %s149 = sadd.s32 %s148, 1
      %p152 = scmp.eq.s32.totalorder %s25, 1
      %p153 = scmp.ne.s32.totalorder %s148, %s150
      %p154 = scmp.eq.s32.totalorder %s25, 0
      %p155 = por %p153, %p154
      %p156 = scmp.ne.s32.totalorder %s148, %s150
      %p157 = scmp.eq.s32.totalorder %s30, 1
      %p158 = por %p156, %p157
      %p159 = scmp.ne.s32.totalorder %s150, %s151
      %p160 = scmp.eq.s32.totalorder %s30, 0
      %p161 = por %p159, %p160
      %p162 = scmp.ne.s32.totalorder %s150, %s151
      %p163 = scmp.eq.s32.totalorder %s31, 1
      %p164 = por %p162, %p163
      %p166 = scmp.ne.s32.totalorder %s151, %s165
      %p167 = scmp.eq.s32.totalorder %s31, 0
      %p168 = por %p166, %p167
      %s170 = sadd.s32 %s169, 1
      %p173 = scmp.eq.s32.totalorder %s25, 1
      %p174 = scmp.ne.s32.totalorder %s169, %s171
      %p175 = scmp.eq.s32.totalorder %s25, 0
      %p176 = por %p174, %p175
      %p177 = scmp.ne.s32.totalorder %s169, %s171
      %p178 = scmp.eq.s32.totalorder %s30, 1
      %p179 = por %p177, %p178
      %p180 = scmp.ne.s32.totalorder %s171, %s172
      %p181 = scmp.eq.s32.totalorder %s30, 0
      %p182 = por %p180, %p181
      %p183 = scmp.ne.s32.totalorder %s171, %s172
      %p184 = scmp.eq.s32.totalorder %s31, 1
      %p185 = por %p183, %p184
      %p187 = scmp.ne.s32.totalorder %s172, %s186
      %p188 = scmp.eq.s32.totalorder %s31, 0
      %p189 = por %p187, %p188
      %s191 = sadd.s32 %s190, 1
      %p194 = scmp.eq.s32.totalorder %s25, 1
      %p195 = scmp.ne.s32.totalorder %s190, %s192
      %p196 = scmp.eq.s32.totalorder %s25, 0
      %p197 = por %p195, %p196
      %p198 = scmp.ne.s32.totalorder %s190, %s192
      %p199 = scmp.eq.s32.totalorder %s30, 1
      %p200 = por %p198, %p199
      %p201 = scmp.ne.s32.totalorder %s192, %s193
      %p202 = scmp.eq.s32.totalorder %s30, 0
      %p203 = por %p201, %p202
      %p204 = scmp.ne.s32.totalorder %s192, %s193
      %p205 = scmp.eq.s32.totalorder %s31, 1
      %p206 = por %p204, %p205
      %p208 = scmp.ne.s32.totalorder %s193, %s207
      %p209 = scmp.eq.s32.totalorder %s31, 0
      %p210 = por %p208, %p209
      %s211 = ssub.s32 %s25, %s32
      %p212 = scmp.eq.s32.totalorder %s211, 0
      %s214 = sadd.s32 %s213, 1
      %s215 = scalar_select %p212, %s213, %s214
      %p218 = pneg %p212
      %p219 = scmp.eq.s32.totalorder %s25, 1
      %p220 = por %p218, %p219
      %p221 = scmp.ne.s32.totalorder %s213, %s216
      %p222 = scmp.eq.s32.totalorder %s25, 0
      %p223 = por %p221, %p222
      %p224 = scmp.ne.s32.totalorder %s213, %s216
      %p225 = scmp.eq.s32.totalorder %s30, 1
      %p226 = por %p224, %p225
      %p227 = scmp.ne.s32.totalorder %s216, %s217
      %p228 = scmp.eq.s32.totalorder %s30, 0
      %p229 = por %p227, %p228
      %p230 = scmp.ne.s32.totalorder %s216, %s217
      %p231 = scmp.eq.s32.totalorder %s31, 1
      %p232 = por %p230, %p231
      %p234 = scmp.ne.s32.totalorder %s217, %s233
      %p235 = scmp.eq.s32.totalorder %s31, 0
      %p236 = por %p234, %p235
      %p237 = scmp.le.s32.totalorder 1, %s25
      %p238 = scmp.lt.s32.totalorder %s25, 3
      %p239 = pnand %p237, %p238
      %p240 = pneg %p239
      // Predicated region
      $region9: #{tpu_custom_call.1} parent=5 // pred_check
        _
      $region10: #{tpu_custom_call.1} parent=5 // pred_check_branch
        %242 = sbr.rel (%p239) target = $region12
      $region11: #{tpu_custom_call.1} parent=5 // pred_region
        %s243 = ssub.s32 %s25, 1
        // Predicated region
        $region13: #{tpu_custom_call.1} parent=11 // pred_check
          %p244 = pneg %p98
        $region14: #{tpu_custom_call.1} parent=11 // pred_check_branch
          %246 = sbr.rel (%p244) target = $region16
        $region15: #{tpu_custom_call.1} parent=11 // pred_region
          %248 = vsyncadd [#allocation6], 0
          %s249 = sshll.u32 %s2, 4
          %s250 = int_to_ptr.hbm [resolvable:$true] %s249
          %s251 = sshll.u32 [#allocation7], 4
          %s252 = int_to_ptr.vmem [resolvable:$true] %s251
          %257 = dma.hbm_to_vmem [thread:$0]  %s250, 16384, %s252, [#allocation6], 512, 512, 32
        $region16: #{tpu_custom_call.1} parent=11 // pred_fallthru
          _
        // Predicated region
        $region17: #{tpu_custom_call.1} parent=11 // pred_check
          %p258 = pneg %p119
        $region18: #{tpu_custom_call.1} parent=11 // pred_check_branch
          %260 = sbr.rel (%p258) target = $region20
        $region19: #{tpu_custom_call.1} parent=11 // pred_region
          %262 = vsyncadd [#allocation9], 0
          %s263 = sshll.u32 %s3, 4
          %s264 = int_to_ptr.hbm [resolvable:$true] %s263
          %s265 = sshll.u32 [#allocation8], 4
          %s266 = int_to_ptr.vmem [resolvable:$true] %s265
          %271 = dma.hbm_to_vmem [thread:$0]  %s264, 16384, %s266, [#allocation9], 512, 512, 32
        $region20: #{tpu_custom_call.1} parent=11 // pred_fallthru
          _
        // Predicated region
        $region21: #{tpu_custom_call.1} parent=11 // pred_check
          %p272 = pneg %p140
        $region22: #{tpu_custom_call.1} parent=11 // pred_check_branch
          %274 = sbr.rel (%p272) target = $region24
        $region23: #{tpu_custom_call.1} parent=11 // pred_region
          %276 = vsyncadd [#allocation9], 0
          %s278 = sshll.u32 %s4, 4
          %s279 = int_to_ptr.hbm [resolvable:$true] %s278
          %s280 = sshll.u32 [#allocation10], 4
          %s281 = int_to_ptr.vmem [resolvable:$true] %s280
          %283 = dma.hbm_to_vmem [thread:$0]  %s279, 64, %s281, [#allocation9]
        $region24: #{tpu_custom_call.1} parent=11 // pred_fallthru
          _
        // Predicated region
        $region25: #{tpu_custom_call.1} parent=11 // pred_check
          %p284 = pneg %p161
        $region26: #{tpu_custom_call.1} parent=11 // pred_check_branch
          %286 = sbr.rel (%p284) target = $region28
        $region27: #{tpu_custom_call.1} parent=11 // pred_region
          %288 = vsyncadd [#allocation12], 0
          %s289 = sshll.u32 %s5, 4
          %s290 = int_to_ptr.hbm [resolvable:$true] %s289
          %s291 = sshll.u32 [#allocation11], 4
          %s292 = int_to_ptr.vmem [resolvable:$true] %s291
          %297 = dma.hbm_to_vmem [thread:$0]  %s290, 16384, %s292, [#allocation12], 256, 256, 16
        $region28: #{tpu_custom_call.1} parent=11 // pred_fallthru
          _
        // Predicated region
        $region29: #{tpu_custom_call.1} parent=11 // pred_check
          %p298 = pneg %p182
        $region30: #{tpu_custom_call.1} parent=11 // pred_check_branch
          %300 = sbr.rel (%p298) target = $region32
        $region31: #{tpu_custom_call.1} parent=11 // pred_region
          %302 = vsyncadd [#allocation12], 0
          %s303 = sshll.u32 %s6, 4
          %s304 = int_to_ptr.hbm [resolvable:$true] %s303
          %s305 = sshll.u32 [#allocation13], 4
          %s306 = int_to_ptr.vmem [resolvable:$true] %s305
          %311 = dma.hbm_to_vmem [thread:$0]  %s304, 8192, %s306, [#allocation12], 256, 256, 16
        $region32: #{tpu_custom_call.1} parent=11 // pred_fallthru
          _
        // Predicated region
        $region33: #{tpu_custom_call.1} parent=11 // pred_check
          %p312 = pneg %p203
        $region34: #{tpu_custom_call.1} parent=11 // pred_check_branch
          %314 = sbr.rel (%p312) target = $region36
        $region35: #{tpu_custom_call.1} parent=11 // pred_region
          _
        $region36: #{tpu_custom_call.1} parent=11 // pred_fallthru
          _
      $region12: #{tpu_custom_call.1} parent=5 // pred_fallthru
        _
      %p315 = scmp.lt.s32.totalorder %s25, 2
      // Predicated region
      $region37: #{tpu_custom_call.1} parent=5 // pred_check
        %p316 = pneg %p315
      $region38: #{tpu_custom_call.1} parent=5 // pred_check_branch
        %318 = sbr.rel (%p316) target = $region40
      $region39: #{tpu_custom_call.1} parent=5 // pred_region
        // Predicated region
        $region41: #{tpu_custom_call.1} parent=39 // pred_check
          %p319 = pneg %p45
        $region42: #{tpu_custom_call.1} parent=39 // pred_check_branch
          %321 = sbr.rel (%p319) target = $region44
        $region43: #{tpu_custom_call.1} parent=39 // pred_region
          %s322 = sand.u32 %s35, 1
          %s323 = scalar_lea.sflag [#allocation3], %s322
          %s324 = sand.u32 %s35, 1
          %s325 = smul.addr %s324, 16
          %s326 = scalar_lea.vmem [#allocation2], %s325
          %328 = vsyncadd %s323, 0
          %s329 = smul.addr %s25, 2
          %s330 = smul.addr %s329, 8
          %s331 = scalar_lea.hbm %s0, %s330
          %s333 = sshll.u32 %s331, 4
          %s334 = int_to_ptr.hbm [resolvable:$true] %s333
          %s335 = sshll.u32 %s326, 4
          %s336 = int_to_ptr.vmem [resolvable:$true] %s335
          %338 = dma.hbm_to_vmem [thread:$0]  %s334, 256, %s336, %s323
        $region44: #{tpu_custom_call.1} parent=39 // pred_fallthru
          _
        // Predicated region
        $region45: #{tpu_custom_call.1} parent=39 // pred_check
          %p339 = pneg %p71
        $region46: #{tpu_custom_call.1} parent=39 // pred_check_branch
          %341 = sbr.rel (%p339) target = $region48
        $region47: #{tpu_custom_call.1} parent=39 // pred_region
          %s342 = sand.u32 %s25, 1
          %s343 = scalar_lea.sflag [#allocation6], %s342
          %s344 = sand.u32 %s61, 1
          %s345 = smul.addr %s344, 16
          %s346 = scalar_lea.vmem [#allocation5], %s345
          %348 = vsyncadd %s343, 0
          %s349 = smul.addr %s25, 2
          %s350 = smul.addr %s349, 8
          %s351 = scalar_lea.hbm %s1, %s350
          %s353 = sshll.u32 %s351, 4
          %s354 = int_to_ptr.hbm [resolvable:$true] %s353
          %s355 = sshll.u32 %s346, 4
          %s356 = int_to_ptr.vmem [resolvable:$true] %s355
          %358 = dma.hbm_to_vmem [thread:$0]  %s354, 256, %s356, %s343
        $region48: #{tpu_custom_call.1} parent=39 // pred_fallthru
          _
      $region40: #{tpu_custom_call.1} parent=5 // pred_fallthru
        _
      %p359 = scmp.le.s32.totalorder 1, %s25
      %p360 = scmp.lt.s32.totalorder %s25, 3
      %p361 = pnand %p359, %p360
      %p362 = pneg %p361
      // Predicated region
      $region49: #{tpu_custom_call.1} parent=5 // pred_check
        _
      $region50: #{tpu_custom_call.1} parent=5 // pred_check_branch
        %364 = sbr.rel (%p361) target = $region52
      $region51: #{tpu_custom_call.1} parent=5 // pred_region
        %s365 = ssub.s32 %s25, 1
        %s366 = sand.u32 %s38, 1
        %s367 = scalar_lea.sflag [#allocation3], %s366
        %s368 = sand.u32 %s38, 1
        %s369 = smul.addr %s368, 16
        %s370 = scalar_lea.vmem [#allocation2], %s369
        // Predicated region
        $region53: #{tpu_custom_call.1} parent=51 // pred_check
          %p371 = pneg %p51
        $region54: #{tpu_custom_call.1} parent=51 // pred_check_branch
          %373 = sbr.rel (%p371) target = $region56
        $region55: #{tpu_custom_call.1} parent=51 // pred_region
          %375 = dma.done %s367, 256
        $region56: #{tpu_custom_call.1} parent=51 // pred_fallthru
          _
        %s376 = sand.u32 %s30, 1
        %s377 = scalar_lea.sflag [#allocation6], %s376
        %s378 = sand.u32 %s64, 1
        %s379 = smul.addr %s378, 16
        %s380 = scalar_lea.vmem [#allocation5], %s379
        // Predicated region
        $region57: #{tpu_custom_call.1} parent=51 // pred_check
          %p381 = pneg %p77
        $region58: #{tpu_custom_call.1} parent=51 // pred_check_branch
          %383 = sbr.rel (%p381) target = $region60
        $region59: #{tpu_custom_call.1} parent=51 // pred_region
          %385 = dma.done %s377, 256
        $region60: #{tpu_custom_call.1} parent=51 // pred_fallthru
          _
        // Predicated region
        $region61: #{tpu_custom_call.1} parent=51 // pred_check
          %p386 = pneg %p98
        $region62: #{tpu_custom_call.1} parent=51 // pred_check_branch
          %388 = sbr.rel (%p386) target = $region64
        $region63: #{tpu_custom_call.1} parent=51 // pred_region
          %390 = dma.done [#allocation6], 16384
        $region64: #{tpu_custom_call.1} parent=51 // pred_fallthru
          _
        // Predicated region
        $region65: #{tpu_custom_call.1} parent=51 // pred_check
          %p391 = pneg %p119
        $region66: #{tpu_custom_call.1} parent=51 // pred_check_branch
          %393 = sbr.rel (%p391) target = $region68
        $region67: #{tpu_custom_call.1} parent=51 // pred_region
          %395 = dma.done [#allocation9], 16384
        $region68: #{tpu_custom_call.1} parent=51 // pred_fallthru
          _
        // Predicated region
        $region69: #{tpu_custom_call.1} parent=51 // pred_check
          %p396 = pneg %p140
        $region70: #{tpu_custom_call.1} parent=51 // pred_check_branch
          %398 = sbr.rel (%p396) target = $region72
        $region71: #{tpu_custom_call.1} parent=51 // pred_region
          %400 = dma.done [#allocation9], 64
        $region72: #{tpu_custom_call.1} parent=51 // pred_fallthru
          _
        // Predicated region
        $region73: #{tpu_custom_call.1} parent=51 // pred_check
          %p401 = pneg %p161
        $region74: #{tpu_custom_call.1} parent=51 // pred_check_branch
          %403 = sbr.rel (%p401) target = $region76
        $region75: #{tpu_custom_call.1} parent=51 // pred_region
          %405 = dma.done [#allocation12], 16384
        $region76: #{tpu_custom_call.1} parent=51 // pred_fallthru
          _
        // Predicated region
        $region77: #{tpu_custom_call.1} parent=51 // pred_check
          %p406 = pneg %p182
        $region78: #{tpu_custom_call.1} parent=51 // pred_check_branch
          %408 = sbr.rel (%p406) target = $region80
        $region79: #{tpu_custom_call.1} parent=51 // pred_region
          %410 = dma.done [#allocation12], 8192
        $region80: #{tpu_custom_call.1} parent=51 // pred_fallthru
          _
        %s411 = sand.u32 %s38, 1
        %s412 = scalar_lea.sflag [#allocation3], %s411
        %s413 = sand.u32 %s38, 1
        %s414 = smul.addr %s413, 16
        %s415 = scalar_lea.vmem [#allocation2], %s414
        %p416 = pneg %p51
        %p417 = pneg %p48
        %s418 = sand.u32 %s30, 1
        %s419 = scalar_lea.sflag [#allocation6], %s418
        %s420 = sand.u32 %s64, 1
        %s421 = smul.addr %s420, 16
        %s422 = scalar_lea.vmem [#allocation5], %s421
        %p423 = pneg %p77
        %p424 = pneg %p74
        %p425 = pneg %p98
        %p426 = pneg %p95
        %p427 = pneg %p119
        %p428 = pneg %p116
        %p429 = pneg %p140
        %p430 = pneg %p137
        %p431 = pneg %p161
        %p432 = pneg %p158
        %p433 = pneg %p182
        %p434 = pneg %p179
        %p435 = pneg %p203
        %p436 = pneg %p200
        %p437 = pneg %p229
        %p438 = pneg %p226
        %s439 = sand.u32 %s216, 1
        %s440 = scalar_lea.sflag [#allocation4], %s439
        %s441 = sand.u32 %s216, 1
        %s442 = smul.addr %s441, 16
        %s443 = scalar_lea.vmem [#allocation14], %s442
        %v444 = vld [vmem:[%s380] sm:$0xff]
        %v445 = vld [vmem:[%s380 + $0x8] sm:$0xff]
        %v446 = vld [vmem:[%s370] sm:$0xff]
        %v447 = vld [vmem:[%s370 + $0x8] sm:$0xff]
        %v448 = vld [vmem:[#allocation7] sm:$0xff]
        %v449 = vld [vmem:[#allocation7 + $0x8] sm:$0xff]
        %v450 = vld [vmem:[#allocation7 + $0x10] sm:$0xff]
        %v451 = vld [vmem:[#allocation7 + $0x18] sm:$0xff]
        %v452 = vld [vmem:[#allocation7 + $0x20] sm:$0xff]
        %v453 = vld [vmem:[#allocation7 + $0x28] sm:$0xff]
        %v454 = vld [vmem:[#allocation7 + $0x30] sm:$0xff]
        %v455 = vld [vmem:[#allocation7 + $0x38] sm:$0xff]
        %v456 = vld [vmem:[#allocation7 + $0x40] sm:$0xff]
        %v457 = vld [vmem:[#allocation7 + $0x48] sm:$0xff]
        %v458 = vld [vmem:[#allocation7 + $0x50] sm:$0xff]
        %v459 = vld [vmem:[#allocation7 + $0x58] sm:$0xff]
        %v460 = vld [vmem:[#allocation7 + $0x60] sm:$0xff]
        %v461 = vld [vmem:[#allocation7 + $0x68] sm:$0xff]
        %v462 = vld [vmem:[#allocation7 + $0x70] sm:$0xff]
        %v463 = vld [vmem:[#allocation7 + $0x78] sm:$0xff]
        %v464 = vld [vmem:[#allocation7 + $0x80] sm:$0xff]
        %v465 = vld [vmem:[#allocation7 + $0x88] sm:$0xff]
        %v466 = vld [vmem:[#allocation7 + $0x90] sm:$0xff]
        %v467 = vld [vmem:[#allocation7 + $0x98] sm:$0xff]
        %v468 = vld [vmem:[#allocation7 + $0xa0] sm:$0xff]
        %v469 = vld [vmem:[#allocation7 + $0xa8] sm:$0xff]
        %v470 = vld [vmem:[#allocation7 + $0xb0] sm:$0xff]
        %v471 = vld [vmem:[#allocation7 + $0xb8] sm:$0xff]
        %v472 = vld [vmem:[#allocation7 + $0xc0] sm:$0xff]
        %v473 = vld [vmem:[#allocation7 + $0xc8] sm:$0xff]
        %v474 = vld [vmem:[#allocation7 + $0xd0] sm:$0xff]
        %v475 = vld [vmem:[#allocation7 + $0xd8] sm:$0xff]
        %v476 = vld [vmem:[#allocation7 + $0xe0] sm:$0xff]
        %v477 = vld [vmem:[#allocation7 + $0xe8] sm:$0xff]
        %v478 = vld [vmem:[#allocation7 + $0xf0] sm:$0xff]
        %v479 = vld [vmem:[#allocation7 + $0xf8] sm:$0xff]
        %v480 = vld [vmem:[#allocation7 + $0x100] sm:$0xff]
        %v481 = vld [vmem:[#allocation7 + $0x108] sm:$0xff]
        %v482 = vld [vmem:[#allocation7 + $0x110] sm:$0xff]
        %v483 = vld [vmem:[#allocation7 + $0x118] sm:$0xff]
        %v484 = vld [vmem:[#allocation7 + $0x120] sm:$0xff]
        %v485 = vld [vmem:[#allocation7 + $0x128] sm:$0xff]
        %v486 = vld [vmem:[#allocation7 + $0x130] sm:$0xff]
        %v487 = vld [vmem:[#allocation7 + $0x138] sm:$0xff]
        %v488 = vld [vmem:[#allocation7 + $0x140] sm:$0xff]
        %v489 = vld [vmem:[#allocation7 + $0x148] sm:$0xff]
        %v490 = vld [vmem:[#allocation7 + $0x150] sm:$0xff]
        %v491 = vld [vmem:[#allocation7 + $0x158] sm:$0xff]
        %v492 = vld [vmem:[#allocation7 + $0x160] sm:$0xff]
        %v493 = vld [vmem:[#allocation7 + $0x168] sm:$0xff]
        %v494 = vld [vmem:[#allocation7 + $0x170] sm:$0xff]
        %v495 = vld [vmem:[#allocation7 + $0x178] sm:$0xff]
        %v496 = vld [vmem:[#allocation7 + $0x180] sm:$0xff]
        %v497 = vld [vmem:[#allocation7 + $0x188] sm:$0xff]
        %v498 = vld [vmem:[#allocation7 + $0x190] sm:$0xff]
        %v499 = vld [vmem:[#allocation7 + $0x198] sm:$0xff]
        %v500 = vld [vmem:[#allocation7 + $0x1a0] sm:$0xff]
        %v501 = vld [vmem:[#allocation7 + $0x1a8] sm:$0xff]
        %v502 = vld [vmem:[#allocation7 + $0x1b0] sm:$0xff]
        %v503 = vld [vmem:[#allocation7 + $0x1b8] sm:$0xff]
        %v504 = vld [vmem:[#allocation7 + $0x1c0] sm:$0xff]
        %v505 = vld [vmem:[#allocation7 + $0x1c8] sm:$0xff]
        %v506 = vld [vmem:[#allocation7 + $0x1d0] sm:$0xff]
        %v507 = vld [vmem:[#allocation7 + $0x1d8] sm:$0xff]
        %v508 = vld [vmem:[#allocation7 + $0x1e0] sm:$0xff]
        %v509 = vld [vmem:[#allocation7 + $0x1e8] sm:$0xff]
        %v510 = vld [vmem:[#allocation7 + $0x1f0] sm:$0xff]
        %v511 = vld [vmem:[#allocation7 + $0x1f8] sm:$0xff]
        %v512 = vld [vmem:[#allocation7 + $0x200] sm:$0xff]
        %v513 = vld [vmem:[#allocation7 + $0x208] sm:$0xff]
        %v514 = vld [vmem:[#allocation7 + $0x210] sm:$0xff]
        %v515 = vld [vmem:[#allocation7 + $0x218] sm:$0xff]
        %v516 = vld [vmem:[#allocation7 + $0x220] sm:$0xff]
        %v517 = vld [vmem:[#allocation7 + $0x228] sm:$0xff]
        %v518 = vld [vmem:[#allocation7 + $0x230] sm:$0xff]
        %v519 = vld [vmem:[#allocation7 + $0x238] sm:$0xff]
        %v520 = vld [vmem:[#allocation7 + $0x240] sm:$0xff]
        %v521 = vld [vmem:[#allocation7 + $0x248] sm:$0xff]
        %v522 = vld [vmem:[#allocation7 + $0x250] sm:$0xff]
        %v523 = vld [vmem:[#allocation7 + $0x258] sm:$0xff]
        %v524 = vld [vmem:[#allocation7 + $0x260] sm:$0xff]
        %v525 = vld [vmem:[#allocation7 + $0x268] sm:$0xff]
        %v526 = vld [vmem:[#allocation7 + $0x270] sm:$0xff]
        %v527 = vld [vmem:[#allocation7 + $0x278] sm:$0xff]
        %v528 = vld [vmem:[#allocation7 + $0x280] sm:$0xff]
        %v529 = vld [vmem:[#allocation7 + $0x288] sm:$0xff]
        %v530 = vld [vmem:[#allocation7 + $0x290] sm:$0xff]
        %v531 = vld [vmem:[#allocation7 + $0x298] sm:$0xff]
        %v532 = vld [vmem:[#allocation7 + $0x2a0] sm:$0xff]
        %v533 = vld [vmem:[#allocation7 + $0x2a8] sm:$0xff]
        %v534 = vld [vmem:[#allocation7 + $0x2b0] sm:$0xff]
        %v535 = vld [vmem:[#allocation7 + $0x2b8] sm:$0xff]
        %v536 = vld [vmem:[#allocation7 + $0x2c0] sm:$0xff]
        %v537 = vld [vmem:[#allocation7 + $0x2c8] sm:$0xff]
        %v538 = vld [vmem:[#allocation7 + $0x2d0] sm:$0xff]
        %v539 = vld [vmem:[#allocation7 + $0x2d8] sm:$0xff]
        %v540 = vld [vmem:[#allocation7 + $0x2e0] sm:$0xff]
        %v541 = vld [vmem:[#allocation7 + $0x2e8] sm:$0xff]
        %v542 = vld [vmem:[#allocation7 + $0x2f0] sm:$0xff]
        %v543 = vld [vmem:[#allocation7 + $0x2f8] sm:$0xff]
        %v544 = vld [vmem:[#allocation7 + $0x300] sm:$0xff]
        %v545 = vld [vmem:[#allocation7 + $0x308] sm:$0xff]
        %v546 = vld [vmem:[#allocation7 + $0x310] sm:$0xff]
        %v547 = vld [vmem:[#allocation7 + $0x318] sm:$0xff]
        %v548 = vld [vmem:[#allocation7 + $0x320] sm:$0xff]
        %v549 = vld [vmem:[#allocation7 + $0x328] sm:$0xff]
        %v550 = vld [vmem:[#allocation7 + $0x330] sm:$0xff]
        %v551 = vld [vmem:[#allocation7 + $0x338] sm:$0xff]
        %v552 = vld [vmem:[#allocation7 + $0x340] sm:$0xff]
        %v553 = vld [vmem:[#allocation7 + $0x348] sm:$0xff]
        %v554 = vld [vmem:[#allocation7 + $0x350] sm:$0xff]
        %v555 = vld [vmem:[#allocation7 + $0x358] sm:$0xff]
        %v556 = vld [vmem:[#allocation7 + $0x360] sm:$0xff]
        %v557 = vld [vmem:[#allocation7 + $0x368] sm:$0xff]
        %v558 = vld [vmem:[#allocation7 + $0x370] sm:$0xff]
        %v559 = vld [vmem:[#allocation7 + $0x378] sm:$0xff]
        %v560 = vld [vmem:[#allocation7 + $0x380] sm:$0xff]
        %v561 = vld [vmem:[#allocation7 + $0x388] sm:$0xff]
        %v562 = vld [vmem:[#allocation7 + $0x390] sm:$0xff]
        %v563 = vld [vmem:[#allocation7 + $0x398] sm:$0xff]
        %v564 = vld [vmem:[#allocation7 + $0x3a0] sm:$0xff]
        %v565 = vld [vmem:[#allocation7 + $0x3a8] sm:$0xff]
        %v566 = vld [vmem:[#allocation7 + $0x3b0] sm:$0xff]
        %v567 = vld [vmem:[#allocation7 + $0x3b8] sm:$0xff]
        %v568 = vld [vmem:[#allocation7 + $0x3c0] sm:$0xff]
        %v569 = vld [vmem:[#allocation7 + $0x3c8] sm:$0xff]
        %v570 = vld [vmem:[#allocation7 + $0x3d0] sm:$0xff]
        %v571 = vld [vmem:[#allocation7 + $0x3d8] sm:$0xff]
        %v572 = vld [vmem:[#allocation7 + $0x3e0] sm:$0xff]
        %v573 = vld [vmem:[#allocation7 + $0x3e8] sm:$0xff]
        %v574 = vld [vmem:[#allocation7 + $0x3f0] sm:$0xff]
        %v575 = vld [vmem:[#allocation7 + $0x3f8] sm:$0xff]
        %v576 = vld [vmem:[#allocation8] sm:$0xff]
        %v577 = vld [vmem:[#allocation8 + $0x8] sm:$0xff]
        %v578 = vld [vmem:[#allocation8 + $0x10] sm:$0xff]
        %v579 = vld [vmem:[#allocation8 + $0x18] sm:$0xff]
        %v580 = vld [vmem:[#allocation8 + $0x20] sm:$0xff]
        %v581 = vld [vmem:[#allocation8 + $0x28] sm:$0xff]
        %v582 = vld [vmem:[#allocation8 + $0x30] sm:$0xff]
        %v583 = vld [vmem:[#allocation8 + $0x38] sm:$0xff]
        %v584 = vld [vmem:[#allocation8 + $0x40] sm:$0xff]
        %v585 = vld [vmem:[#allocation8 + $0x48] sm:$0xff]
        %v586 = vld [vmem:[#allocation8 + $0x50] sm:$0xff]
        %v587 = vld [vmem:[#allocation8 + $0x58] sm:$0xff]
        %v588 = vld [vmem:[#allocation8 + $0x60] sm:$0xff]
        %v589 = vld [vmem:[#allocation8 + $0x68] sm:$0xff]
        %v590 = vld [vmem:[#allocation8 + $0x70] sm:$0xff]
        %v591 = vld [vmem:[#allocation8 + $0x78] sm:$0xff]
        %v592 = vld [vmem:[#allocation8 + $0x80] sm:$0xff]
        %v593 = vld [vmem:[#allocation8 + $0x88] sm:$0xff]
        %v594 = vld [vmem:[#allocation8 + $0x90] sm:$0xff]
        %v595 = vld [vmem:[#allocation8 + $0x98] sm:$0xff]
        %v596 = vld [vmem:[#allocation8 + $0xa0] sm:$0xff]
        %v597 = vld [vmem:[#allocation8 + $0xa8] sm:$0xff]
        %v598 = vld [vmem:[#allocation8 + $0xb0] sm:$0xff]
        %v599 = vld [vmem:[#allocation8 + $0xb8] sm:$0xff]
        %v600 = vld [vmem:[#allocation8 + $0xc0] sm:$0xff]
        %v601 = vld [vmem:[#allocation8 + $0xc8] sm:$0xff]
        %v602 = vld [vmem:[#allocation8 + $0xd0] sm:$0xff]
        %v603 = vld [vmem:[#allocation8 + $0xd8] sm:$0xff]
        %v604 = vld [vmem:[#allocation8 + $0xe0] sm:$0xff]
        %v605 = vld [vmem:[#allocation8 + $0xe8] sm:$0xff]
        %v606 = vld [vmem:[#allocation8 + $0xf0] sm:$0xff]
        %v607 = vld [vmem:[#allocation8 + $0xf8] sm:$0xff]
        %v608 = vld [vmem:[#allocation8 + $0x100] sm:$0xff]
        %v609 = vld [vmem:[#allocation8 + $0x108] sm:$0xff]
        %v610 = vld [vmem:[#allocation8 + $0x110] sm:$0xff]
        %v611 = vld [vmem:[#allocation8 + $0x118] sm:$0xff]
        %v612 = vld [vmem:[#allocation8 + $0x120] sm:$0xff]
        %v613 = vld [vmem:[#allocation8 + $0x128] sm:$0xff]
        %v614 = vld [vmem:[#allocation8 + $0x130] sm:$0xff]
        %v615 = vld [vmem:[#allocation8 + $0x138] sm:$0xff]
        %v616 = vld [vmem:[#allocation8 + $0x140] sm:$0xff]
        %v617 = vld [vmem:[#allocation8 + $0x148] sm:$0xff]
        %v618 = vld [vmem:[#allocation8 + $0x150] sm:$0xff]
        %v619 = vld [vmem:[#allocation8 + $0x158] sm:$0xff]
        %v620 = vld [vmem:[#allocation8 + $0x160] sm:$0xff]
        %v621 = vld [vmem:[#allocation8 + $0x168] sm:$0xff]
        %v622 = vld [vmem:[#allocation8 + $0x170] sm:$0xff]
        %v623 = vld [vmem:[#allocation8 + $0x178] sm:$0xff]
        %v624 = vld [vmem:[#allocation8 + $0x180] sm:$0xff]
        %v625 = vld [vmem:[#allocation8 + $0x188] sm:$0xff]
        %v626 = vld [vmem:[#allocation8 + $0x190] sm:$0xff]
        %v627 = vld [vmem:[#allocation8 + $0x198] sm:$0xff]
        %v628 = vld [vmem:[#allocation8 + $0x1a0] sm:$0xff]
        %v629 = vld [vmem:[#allocation8 + $0x1a8] sm:$0xff]
        %v630 = vld [vmem:[#allocation8 + $0x1b0] sm:$0xff]
        %v631 = vld [vmem:[#allocation8 + $0x1b8] sm:$0xff]
        %v632 = vld [vmem:[#allocation8 + $0x1c0] sm:$0xff]
        %v633 = vld [vmem:[#allocation8 + $0x1c8] sm:$0xff]
        %v634 = vld [vmem:[#allocation8 + $0x1d0] sm:$0xff]
        %v635 = vld [vmem:[#allocation8 + $0x1d8] sm:$0xff]
        %v636 = vld [vmem:[#allocation8 + $0x1e0] sm:$0xff]
        %v637 = vld [vmem:[#allocation8 + $0x1e8] sm:$0xff]
        %v638 = vld [vmem:[#allocation8 + $0x1f0] sm:$0xff]
        %v639 = vld [vmem:[#allocation8 + $0x1f8] sm:$0xff]
        %v640 = vld [vmem:[#allocation8 + $0x200] sm:$0xff]
        %v641 = vld [vmem:[#allocation8 + $0x208] sm:$0xff]
        %v642 = vld [vmem:[#allocation8 + $0x210] sm:$0xff]
        %v643 = vld [vmem:[#allocation8 + $0x218] sm:$0xff]
        %v644 = vld [vmem:[#allocation8 + $0x220] sm:$0xff]
        %v645 = vld [vmem:[#allocation8 + $0x228] sm:$0xff]
        %v646 = vld [vmem:[#allocation8 + $0x230] sm:$0xff]
        %v647 = vld [vmem:[#allocation8 + $0x238] sm:$0xff]
        %v648 = vld [vmem:[#allocation8 + $0x240] sm:$0xff]
        %v649 = vld [vmem:[#allocation8 + $0x248] sm:$0xff]
        %v650 = vld [vmem:[#allocation8 + $0x250] sm:$0xff]
        %v651 = vld [vmem:[#allocation8 + $0x258] sm:$0xff]
        %v652 = vld [vmem:[#allocation8 + $0x260] sm:$0xff]
        %v653 = vld [vmem:[#allocation8 + $0x268] sm:$0xff]
        %v654 = vld [vmem:[#allocation8 + $0x270] sm:$0xff]
        %v655 = vld [vmem:[#allocation8 + $0x278] sm:$0xff]
        %v656 = vld [vmem:[#allocation8 + $0x280] sm:$0xff]
        %v657 = vld [vmem:[#allocation8 + $0x288] sm:$0xff]
        %v658 = vld [vmem:[#allocation8 + $0x290] sm:$0xff]
        %v659 = vld [vmem:[#allocation8 + $0x298] sm:$0xff]
        %v660 = vld [vmem:[#allocation8 + $0x2a0] sm:$0xff]
        %v661 = vld [vmem:[#allocation8 + $0x2a8] sm:$0xff]
        %v662 = vld [vmem:[#allocation8 + $0x2b0] sm:$0xff]
        %v663 = vld [vmem:[#allocation8 + $0x2b8] sm:$0xff]
        %v664 = vld [vmem:[#allocation8 + $0x2c0] sm:$0xff]
        %v665 = vld [vmem:[#allocation8 + $0x2c8] sm:$0xff]
        %v666 = vld [vmem:[#allocation8 + $0x2d0] sm:$0xff]
        %v667 = vld [vmem:[#allocation8 + $0x2d8] sm:$0xff]
        %v668 = vld [vmem:[#allocation8 + $0x2e0] sm:$0xff]
        %v669 = vld [vmem:[#allocation8 + $0x2e8] sm:$0xff]
        %v670 = vld [vmem:[#allocation8 + $0x2f0] sm:$0xff]
        %v671 = vld [vmem:[#allocation8 + $0x2f8] sm:$0xff]
        %v672 = vld [vmem:[#allocation8 + $0x300] sm:$0xff]
        %v673 = vld [vmem:[#allocation8 + $0x308] sm:$0xff]
        %v674 = vld [vmem:[#allocation8 + $0x310] sm:$0xff]
        %v675 = vld [vmem:[#allocation8 + $0x318] sm:$0xff]
        %v676 = vld [vmem:[#allocation8 + $0x320] sm:$0xff]
        %v677 = vld [vmem:[#allocation8 + $0x328] sm:$0xff]
        %v678 = vld [vmem:[#allocation8 + $0x330] sm:$0xff]
        %v679 = vld [vmem:[#allocation8 + $0x338] sm:$0xff]
        %v680 = vld [vmem:[#allocation8 + $0x340] sm:$0xff]
        %v681 = vld [vmem:[#allocation8 + $0x348] sm:$0xff]
        %v682 = vld [vmem:[#allocation8 + $0x350] sm:$0xff]
        %v683 = vld [vmem:[#allocation8 + $0x358] sm:$0xff]
        %v684 = vld [vmem:[#allocation8 + $0x360] sm:$0xff]
        %v685 = vld [vmem:[#allocation8 + $0x368] sm:$0xff]
        %v686 = vld [vmem:[#allocation8 + $0x370] sm:$0xff]
        %v687 = vld [vmem:[#allocation8 + $0x378] sm:$0xff]
        %v688 = vld [vmem:[#allocation8 + $0x380] sm:$0xff]
        %v689 = vld [vmem:[#allocation8 + $0x388] sm:$0xff]
        %v690 = vld [vmem:[#allocation8 + $0x390] sm:$0xff]
        %v691 = vld [vmem:[#allocation8 + $0x398] sm:$0xff]
        %v692 = vld [vmem:[#allocation8 + $0x3a0] sm:$0xff]
        %v693 = vld [vmem:[#allocation8 + $0x3a8] sm:$0xff]
        %v694 = vld [vmem:[#allocation8 + $0x3b0] sm:$0xff]
        %v695 = vld [vmem:[#allocation8 + $0x3b8] sm:$0xff]
        %v696 = vld [vmem:[#allocation8 + $0x3c0] sm:$0xff]
        %v697 = vld [vmem:[#allocation8 + $0x3c8] sm:$0xff]
        %v698 = vld [vmem:[#allocation8 + $0x3d0] sm:$0xff]
        %v699 = vld [vmem:[#allocation8 + $0x3d8] sm:$0xff]
        %v700 = vld [vmem:[#allocation8 + $0x3e0] sm:$0xff]
        %v701 = vld [vmem:[#allocation8 + $0x3e8] sm:$0xff]
        %v702 = vld [vmem:[#allocation8 + $0x3f0] sm:$0xff]
        %v703 = vld [vmem:[#allocation8 + $0x3f8] sm:$0xff]
        %704 = vmatpush.msra.mxu0 %v636
        %705 = vmatpush.msra.mxu0 %v632
        %706 = vmatpush.msra.mxu0 %v628
        %707 = vmatpush.msra.mxu0 %v624
        %708 = vmatpush.msra.mxu0 %v620
        %709 = vmatpush.msra.mxu0 %v616
        %710 = vmatpush.msra.mxu0 %v612
        %711 = vmatpush.msra.mxu0 %v608
        %712 = vmatpush.msra.mxu0 %v604
        %713 = vmatpush.msra.mxu0 %v600
        %714 = vmatpush.msra.mxu0 %v596
        %715 = vmatpush.msra.mxu0 %v592
        %716 = vmatpush.msra.mxu0 %v588
        %717 = vmatpush.msra.mxu0 %v584
        %718 = vmatpush.msra.mxu0 %v580
        %719 = vmatpush.msra.mxu0 %v576
        %720 = vmatmul.f32.gmra.mxu0 %v444
        %v721 = vpop.f32.mrf.mxu0
        %v722 = vadd.f32 0.0, %v721
        %723 = vdwg.mxu0
        %724 = vmatpush.msra.mxu0 %v700
        %725 = vmatpush.msra.mxu0 %v696
        %726 = vmatpush.msra.mxu0 %v692
        %727 = vmatpush.msra.mxu0 %v688
        %728 = vmatpush.msra.mxu0 %v684
        %729 = vmatpush.msra.mxu0 %v680
        %730 = vmatpush.msra.mxu0 %v676
        %731 = vmatpush.msra.mxu0 %v672
        %732 = vmatpush.msra.mxu0 %v668
        %733 = vmatpush.msra.mxu0 %v664
        %734 = vmatpush.msra.mxu0 %v660
        %735 = vmatpush.msra.mxu0 %v656
        %736 = vmatpush.msra.mxu0 %v652
        %737 = vmatpush.msra.mxu0 %v648
        %738 = vmatpush.msra.mxu0 %v644
        %739 = vmatpush.msra.mxu0 %v640
        %740 = vmatmul.f32.gmra.mxu0 %v445
        %v741 = vpop.f32.mrf.mxu0
        %v742 = vadd.f32 %v722, %v741
        %743 = vdwg.mxu0
        %744 = vmatpush.msra.mxu0 %v637
        %745 = vmatpush.msra.mxu0 %v633
        %746 = vmatpush.msra.mxu0 %v629
        %747 = vmatpush.msra.mxu0 %v625
        %748 = vmatpush.msra.mxu0 %v621
        %749 = vmatpush.msra.mxu0 %v617
        %750 = vmatpush.msra.mxu0 %v613
        %751 = vmatpush.msra.mxu0 %v609
        %752 = vmatpush.msra.mxu0 %v605
        %753 = vmatpush.msra.mxu0 %v601
        %754 = vmatpush.msra.mxu0 %v597
        %755 = vmatpush.msra.mxu0 %v593
        %756 = vmatpush.msra.mxu0 %v589
        %757 = vmatpush.msra.mxu0 %v585
        %758 = vmatpush.msra.mxu0 %v581
        %759 = vmatpush.msra.mxu0 %v577
        %760 = vmatmul.f32.gmra.mxu0 %v444
        %v761 = vpop.f32.mrf.mxu0
        %v762 = vadd.f32 0.0, %v761
        %763 = vdwg.mxu0
        %764 = vmatpush.msra.mxu0 %v701
        %765 = vmatpush.msra.mxu0 %v697
        %766 = vmatpush.msra.mxu0 %v693
        %767 = vmatpush.msra.mxu0 %v689
        %768 = vmatpush.msra.mxu0 %v685
        %769 = vmatpush.msra.mxu0 %v681
        %770 = vmatpush.msra.mxu0 %v677
        %771 = vmatpush.msra.mxu0 %v673
        %772 = vmatpush.msra.mxu0 %v669
        %773 = vmatpush.msra.mxu0 %v665
        %774 = vmatpush.msra.mxu0 %v661
        %775 = vmatpush.msra.mxu0 %v657
        %776 = vmatpush.msra.mxu0 %v653
        %777 = vmatpush.msra.mxu0 %v649
        %778 = vmatpush.msra.mxu0 %v645
        %779 = vmatpush.msra.mxu0 %v641
        %780 = vmatmul.f32.gmra.mxu0 %v445
        %v781 = vpop.f32.mrf.mxu0
        %v782 = vadd.f32 %v762, %v781
        %783 = vdwg.mxu0
        %784 = vmatpush.msra.mxu0 %v638
        %785 = vmatpush.msra.mxu0 %v634
        %786 = vmatpush.msra.mxu0 %v630
        %787 = vmatpush.msra.mxu0 %v626
        %788 = vmatpush.msra.mxu0 %v622
        %789 = vmatpush.msra.mxu0 %v618
        %790 = vmatpush.msra.mxu0 %v614
        %791 = vmatpush.msra.mxu0 %v610
        %792 = vmatpush.msra.mxu0 %v606
        %793 = vmatpush.msra.mxu0 %v602
        %794 = vmatpush.msra.mxu0 %v598
        %795 = vmatpush.msra.mxu0 %v594
        %796 = vmatpush.msra.mxu0 %v590
        %797 = vmatpush.msra.mxu0 %v586
        %798 = vmatpush.msra.mxu0 %v582
        %799 = vmatpush.msra.mxu0 %v578
        %800 = vmatmul.f32.gmra.mxu0 %v444
        %v801 = vpop.f32.mrf.mxu0
        %v802 = vadd.f32 0.0, %v801
        %803 = vdwg.mxu0
        %804 = vmatpush.msra.mxu0 %v702
        %805 = vmatpush.msra.mxu0 %v698
        %806 = vmatpush.msra.mxu0 %v694
        %807 = vmatpush.msra.mxu0 %v690
        %808 = vmatpush.msra.mxu0 %v686
        %809 = vmatpush.msra.mxu0 %v682
        %810 = vmatpush.msra.mxu0 %v678
        %811 = vmatpush.msra.mxu0 %v674
        %812 = vmatpush.msra.mxu0 %v670
        %813 = vmatpush.msra.mxu0 %v666
        %814 = vmatpush.msra.mxu0 %v662
        %815 = vmatpush.msra.mxu0 %v658
        %816 = vmatpush.msra.mxu0 %v654
        %817 = vmatpush.msra.mxu0 %v650
        %818 = vmatpush.msra.mxu0 %v646
        %819 = vmatpush.msra.mxu0 %v642
        %820 = vmatmul.f32.gmra.mxu0 %v445
        %v821 = vpop.f32.mrf.mxu0
        %v822 = vadd.f32 %v802, %v821
        %823 = vdwg.mxu0
        %824 = vmatpush.msra.mxu0 %v639
        %825 = vmatpush.msra.mxu0 %v635
        %826 = vmatpush.msra.mxu0 %v631
        %827 = vmatpush.msra.mxu0 %v627
        %828 = vmatpush.msra.mxu0 %v623
        %829 = vmatpush.msra.mxu0 %v619
        %830 = vmatpush.msra.mxu0 %v615
        %831 = vmatpush.msra.mxu0 %v611
        %832 = vmatpush.msra.mxu0 %v607
        %833 = vmatpush.msra.mxu0 %v603
        %834 = vmatpush.msra.mxu0 %v599
        %835 = vmatpush.msra.mxu0 %v595
        %836 = vmatpush.msra.mxu0 %v591
        %837 = vmatpush.msra.mxu0 %v587
        %838 = vmatpush.msra.mxu0 %v583
        %839 = vmatpush.msra.mxu0 %v579
        %840 = vmatmul.f32.gmra.mxu0 %v444
        %v841 = vpop.f32.mrf.mxu0
        %v842 = vadd.f32 0.0, %v841
        %843 = vdwg.mxu0
        %844 = vmatpush.msra.mxu0 %v703
        %845 = vmatpush.msra.mxu0 %v699
        %846 = vmatpush.msra.mxu0 %v695
        %847 = vmatpush.msra.mxu0 %v691
        %848 = vmatpush.msra.mxu0 %v687
        %849 = vmatpush.msra.mxu0 %v683
        %850 = vmatpush.msra.mxu0 %v679
        %851 = vmatpush.msra.mxu0 %v675
        %852 = vmatpush.msra.mxu0 %v671
        %853 = vmatpush.msra.mxu0 %v667
        %854 = vmatpush.msra.mxu0 %v663
        %855 = vmatpush.msra.mxu0 %v659
        %856 = vmatpush.msra.mxu0 %v655
        %857 = vmatpush.msra.mxu0 %v651
        %858 = vmatpush.msra.mxu0 %v647
        %859 = vmatpush.msra.mxu0 %v643
        %860 = vmatmul.f32.gmra.mxu0 %v445
        %v861 = vpop.f32.mrf.mxu0
        %v862 = vadd.f32 %v842, %v861
        %863 = vdwg.mxu0
        %864 = vmatpush.msra.mxu0 %v508
        %865 = vmatpush.msra.mxu0 %v504
        %866 = vmatpush.msra.mxu0 %v500
        %867 = vmatpush.msra.mxu0 %v496
        %868 = vmatpush.msra.mxu0 %v492
        %869 = vmatpush.msra.mxu0 %v488
        %870 = vmatpush.msra.mxu0 %v484
        %871 = vmatpush.msra.mxu0 %v480
        %872 = vmatpush.msra.mxu0 %v476
        %873 = vmatpush.msra.mxu0 %v472
        %874 = vmatpush.msra.mxu0 %v468
        %875 = vmatpush.msra.mxu0 %v464
        %876 = vmatpush.msra.mxu0 %v460
        %877 = vmatpush.msra.mxu0 %v456
        %878 = vmatpush.msra.mxu0 %v452
        %879 = vmatpush.msra.mxu0 %v448
        %880 = vmatmul.f32.gmra.mxu0 %v446
        %v881 = vpop.f32.mrf.mxu0
        %v882 = vadd.f32 %v742, %v881
        %883 = vdwg.mxu0
        %884 = vmatpush.msra.mxu0 %v572
        %885 = vmatpush.msra.mxu0 %v568
        %886 = vmatpush.msra.mxu0 %v564
        %887 = vmatpush.msra.mxu0 %v560
        %888 = vmatpush.msra.mxu0 %v556
        %889 = vmatpush.msra.mxu0 %v552
        %890 = vmatpush.msra.mxu0 %v548
        %891 = vmatpush.msra.mxu0 %v544
        %892 = vmatpush.msra.mxu0 %v540
        %893 = vmatpush.msra.mxu0 %v536
        %894 = vmatpush.msra.mxu0 %v532
        %895 = vmatpush.msra.mxu0 %v528
        %896 = vmatpush.msra.mxu0 %v524
        %897 = vmatpush.msra.mxu0 %v520
        %898 = vmatpush.msra.mxu0 %v516
        %899 = vmatpush.msra.mxu0 %v512
        %900 = vmatmul.f32.gmra.mxu0 %v447
        %v901 = vpop.f32.mrf.mxu0
        %v902 = vadd.f32 %v882, %v901
        %903 = vdwg.mxu0
        %904 = vmatpush.msra.mxu0 %v509
        %905 = vmatpush.msra.mxu0 %v505
        %906 = vmatpush.msra.mxu0 %v501
        %907 = vmatpush.msra.mxu0 %v497
        %908 = vmatpush.msra.mxu0 %v493
        %909 = vmatpush.msra.mxu0 %v489
        %910 = vmatpush.msra.mxu0 %v485
        %911 = vmatpush.msra.mxu0 %v481
        %912 = vmatpush.msra.mxu0 %v477
        %913 = vmatpush.msra.mxu0 %v473
        %914 = vmatpush.msra.mxu0 %v469
        %915 = vmatpush.msra.mxu0 %v465
        %916 = vmatpush.msra.mxu0 %v461
        %917 = vmatpush.msra.mxu0 %v457
        %918 = vmatpush.msra.mxu0 %v453
        %919 = vmatpush.msra.mxu0 %v449
        %920 = vmatmul.f32.gmra.mxu0 %v446
        %v921 = vpop.f32.mrf.mxu0
        %v922 = vadd.f32 %v782, %v921
        %923 = vdwg.mxu0
        %924 = vmatpush.msra.mxu0 %v573
        %925 = vmatpush.msra.mxu0 %v569
        %926 = vmatpush.msra.mxu0 %v565
        %927 = vmatpush.msra.mxu0 %v561
        %928 = vmatpush.msra.mxu0 %v557
        %929 = vmatpush.msra.mxu0 %v553
        %930 = vmatpush.msra.mxu0 %v549
        %931 = vmatpush.msra.mxu0 %v545
        %932 = vmatpush.msra.mxu0 %v541
        %933 = vmatpush.msra.mxu0 %v537
        %934 = vmatpush.msra.mxu0 %v533
        %935 = vmatpush.msra.mxu0 %v529
        %936 = vmatpush.msra.mxu0 %v525
        %937 = vmatpush.msra.mxu0 %v521
        %938 = vmatpush.msra.mxu0 %v517
        %939 = vmatpush.msra.mxu0 %v513
        %940 = vmatmul.f32.gmra.mxu0 %v447
        %v941 = vpop.f32.mrf.mxu0
        %v942 = vadd.f32 %v922, %v941
        %943 = vdwg.mxu0
        %944 = vmatpush.msra.mxu0 %v510
        %945 = vmatpush.msra.mxu0 %v506
        %946 = vmatpush.msra.mxu0 %v502
        %947 = vmatpush.msra.mxu0 %v498
        %948 = vmatpush.msra.mxu0 %v494
        %949 = vmatpush.msra.mxu0 %v490
        %950 = vmatpush.msra.mxu0 %v486
        %951 = vmatpush.msra.mxu0 %v482
        %952 = vmatpush.msra.mxu0 %v478
        %953 = vmatpush.msra.mxu0 %v474
        %954 = vmatpush.msra.mxu0 %v470
        %955 = vmatpush.msra.mxu0 %v466
        %956 = vmatpush.msra.mxu0 %v462
        %957 = vmatpush.msra.mxu0 %v458
        %958 = vmatpush.msra.mxu0 %v454
        %959 = vmatpush.msra.mxu0 %v450
        %960 = vmatmul.f32.gmra.mxu0 %v446
        %v961 = vpop.f32.mrf.mxu0
        %v962 = vadd.f32 %v822, %v961
        %963 = vdwg.mxu0
        %964 = vmatpush.msra.mxu0 %v574
        %965 = vmatpush.msra.mxu0 %v570
        %966 = vmatpush.msra.mxu0 %v566
        %967 = vmatpush.msra.mxu0 %v562
        %968 = vmatpush.msra.mxu0 %v558
        %969 = vmatpush.msra.mxu0 %v554
        %970 = vmatpush.msra.mxu0 %v550
        %971 = vmatpush.msra.mxu0 %v546
        %972 = vmatpush.msra.mxu0 %v542
        %973 = vmatpush.msra.mxu0 %v538
        %974 = vmatpush.msra.mxu0 %v534
        %975 = vmatpush.msra.mxu0 %v530
        %976 = vmatpush.msra.mxu0 %v526
        %977 = vmatpush.msra.mxu0 %v522
        %978 = vmatpush.msra.mxu0 %v518
        %979 = vmatpush.msra.mxu0 %v514
        %980 = vmatmul.f32.gmra.mxu0 %v447
        %v981 = vpop.f32.mrf.mxu0
        %v982 = vadd.f32 %v962, %v981
        %983 = vdwg.mxu0
        %984 = vmatpush.msra.mxu0 %v511
        %985 = vmatpush.msra.mxu0 %v507
        %986 = vmatpush.msra.mxu0 %v503
        %987 = vmatpush.msra.mxu0 %v499
        %988 = vmatpush.msra.mxu0 %v495
        %989 = vmatpush.msra.mxu0 %v491
        %990 = vmatpush.msra.mxu0 %v487
        %991 = vmatpush.msra.mxu0 %v483
        %992 = vmatpush.msra.mxu0 %v479
        %993 = vmatpush.msra.mxu0 %v475
        %994 = vmatpush.msra.mxu0 %v471
        %995 = vmatpush.msra.mxu0 %v467
        %996 = vmatpush.msra.mxu0 %v463
        %997 = vmatpush.msra.mxu0 %v459
        %998 = vmatpush.msra.mxu0 %v455
        %999 = vmatpush.msra.mxu0 %v451
        %1000 = vmatmul.f32.gmra.mxu0 %v446
        %v1001 = vpop.f32.mrf.mxu0
        %v1002 = vadd.f32 %v862, %v1001
        %1003 = vdwg.mxu0
        %1004 = vmatpush.msra.mxu0 %v575
        %1005 = vmatpush.msra.mxu0 %v571
        %1006 = vmatpush.msra.mxu0 %v567
        %1007 = vmatpush.msra.mxu0 %v563
        %1008 = vmatpush.msra.mxu0 %v559
        %1009 = vmatpush.msra.mxu0 %v555
        %1010 = vmatpush.msra.mxu0 %v551
        %1011 = vmatpush.msra.mxu0 %v547
        %1012 = vmatpush.msra.mxu0 %v543
        %1013 = vmatpush.msra.mxu0 %v539
        %1014 = vmatpush.msra.mxu0 %v535
        %1015 = vmatpush.msra.mxu0 %v531
        %1016 = vmatpush.msra.mxu0 %v527
        %1017 = vmatpush.msra.mxu0 %v523
        %1018 = vmatpush.msra.mxu0 %v519
        %1019 = vmatpush.msra.mxu0 %v515
        %1020 = vmatmul.f32.gmra.mxu0 %v447
        %v1021 = vpop.f32.mrf.mxu0
        %v1022 = vadd.f32 %v1002, %v1021
        %1023 = vdwg.mxu0
        %v1024 = vld [vmem:[#allocation10] sm:$0xf]
        %v1026 = vperm.slane %v1024, 0
        %v1027 = vperm.slane %v1024, 1
        %v1028 = vperm.slane %v1024, 2
        %v1029 = vperm.slane %v1024, 3
        %v1034 = vadd.f32 %v902, %v1026
        %v1035 = vadd.f32 %v942, %v1027
        %v1036 = vadd.f32 %v982, %v1028
        %v1037 = vadd.f32 %v1022, %v1029
        %v1038 = vld [vmem:[#allocation11] sm:$0xff]
        %v1039 = vld [vmem:[#allocation11 + $0x8] sm:$0xff]
        %v1040 = vld [vmem:[#allocation11 + $0x10] sm:$0xff]
        %v1041 = vld [vmem:[#allocation11 + $0x18] sm:$0xff]
        %v1042 = vld [vmem:[#allocation11 + $0x20] sm:$0xff]
        %v1043 = vld [vmem:[#allocation11 + $0x28] sm:$0xff]
        %v1044 = vld [vmem:[#allocation11 + $0x30] sm:$0xff]
        %v1045 = vld [vmem:[#allocation11 + $0x38] sm:$0xff]
        %v1046 = vld [vmem:[#allocation11 + $0x40] sm:$0xff]
        %v1047 = vld [vmem:[#allocation11 + $0x48] sm:$0xff]
        %v1048 = vld [vmem:[#allocation11 + $0x50] sm:$0xff]
        %v1049 = vld [vmem:[#allocation11 + $0x58] sm:$0xff]
        %v1050 = vld [vmem:[#allocation11 + $0x60] sm:$0xff]
        %v1051 = vld [vmem:[#allocation11 + $0x68] sm:$0xff]
        %v1052 = vld [vmem:[#allocation11 + $0x70] sm:$0xff]
        %v1053 = vld [vmem:[#allocation11 + $0x78] sm:$0xff]
        %v1054 = vld [vmem:[#allocation11 + $0x80] sm:$0xff]
        %v1055 = vld [vmem:[#allocation11 + $0x88] sm:$0xff]
        %v1056 = vld [vmem:[#allocation11 + $0x90] sm:$0xff]
        %v1057 = vld [vmem:[#allocation11 + $0x98] sm:$0xff]
        %v1058 = vld [vmem:[#allocation11 + $0xa0] sm:$0xff]
        %v1059 = vld [vmem:[#allocation11 + $0xa8] sm:$0xff]
        %v1060 = vld [vmem:[#allocation11 + $0xb0] sm:$0xff]
        %v1061 = vld [vmem:[#allocation11 + $0xb8] sm:$0xff]
        %v1062 = vld [vmem:[#allocation11 + $0xc0] sm:$0xff]
        %v1063 = vld [vmem:[#allocation11 + $0xc8] sm:$0xff]
        %v1064 = vld [vmem:[#allocation11 + $0xd0] sm:$0xff]
        %v1065 = vld [vmem:[#allocation11 + $0xd8] sm:$0xff]
        %v1066 = vld [vmem:[#allocation11 + $0xe0] sm:$0xff]
        %v1067 = vld [vmem:[#allocation11 + $0xe8] sm:$0xff]
        %v1068 = vld [vmem:[#allocation11 + $0xf0] sm:$0xff]
        %v1069 = vld [vmem:[#allocation11 + $0xf8] sm:$0xff]
        %v1070 = vld [vmem:[#allocation11 + $0x100] sm:$0xff]
        %v1071 = vld [vmem:[#allocation11 + $0x108] sm:$0xff]
        %v1072 = vld [vmem:[#allocation11 + $0x110] sm:$0xff]
        %v1073 = vld [vmem:[#allocation11 + $0x118] sm:$0xff]
        %v1074 = vld [vmem:[#allocation11 + $0x120] sm:$0xff]
        %v1075 = vld [vmem:[#allocation11 + $0x128] sm:$0xff]
        %v1076 = vld [vmem:[#allocation11 + $0x130] sm:$0xff]
        %v1077 = vld [vmem:[#allocation11 + $0x138] sm:$0xff]
        %v1078 = vld [vmem:[#allocation11 + $0x140] sm:$0xff]
        %v1079 = vld [vmem:[#allocation11 + $0x148] sm:$0xff]
        %v1080 = vld [vmem:[#allocation11 + $0x150] sm:$0xff]
        %v1081 = vld [vmem:[#allocation11 + $0x158] sm:$0xff]
        %v1082 = vld [vmem:[#allocation11 + $0x160] sm:$0xff]
        %v1083 = vld [vmem:[#allocation11 + $0x168] sm:$0xff]
        %v1084 = vld [vmem:[#allocation11 + $0x170] sm:$0xff]
        %v1085 = vld [vmem:[#allocation11 + $0x178] sm:$0xff]
        %v1086 = vld [vmem:[#allocation11 + $0x180] sm:$0xff]
        %v1087 = vld [vmem:[#allocation11 + $0x188] sm:$0xff]
        %v1088 = vld [vmem:[#allocation11 + $0x190] sm:$0xff]
        %v1089 = vld [vmem:[#allocation11 + $0x198] sm:$0xff]
        %v1090 = vld [vmem:[#allocation11 + $0x1a0] sm:$0xff]
        %v1091 = vld [vmem:[#allocation11 + $0x1a8] sm:$0xff]
        %v1092 = vld [vmem:[#allocation11 + $0x1b0] sm:$0xff]
        %v1093 = vld [vmem:[#allocation11 + $0x1b8] sm:$0xff]
        %v1094 = vld [vmem:[#allocation11 + $0x1c0] sm:$0xff]
        %v1095 = vld [vmem:[#allocation11 + $0x1c8] sm:$0xff]
        %v1096 = vld [vmem:[#allocation11 + $0x1d0] sm:$0xff]
        %v1097 = vld [vmem:[#allocation11 + $0x1d8] sm:$0xff]
        %v1098 = vld [vmem:[#allocation11 + $0x1e0] sm:$0xff]
        %v1099 = vld [vmem:[#allocation11 + $0x1e8] sm:$0xff]
        %v1100 = vld [vmem:[#allocation11 + $0x1f0] sm:$0xff]
        %v1101 = vld [vmem:[#allocation11 + $0x1f8] sm:$0xff]
        %v1102 = vld [vmem:[#allocation11 + $0x200] sm:$0xff]
        %v1103 = vld [vmem:[#allocation11 + $0x208] sm:$0xff]
        %v1104 = vld [vmem:[#allocation11 + $0x210] sm:$0xff]
        %v1105 = vld [vmem:[#allocation11 + $0x218] sm:$0xff]
        %v1106 = vld [vmem:[#allocation11 + $0x220] sm:$0xff]
        %v1107 = vld [vmem:[#allocation11 + $0x228] sm:$0xff]
        %v1108 = vld [vmem:[#allocation11 + $0x230] sm:$0xff]
        %v1109 = vld [vmem:[#allocation11 + $0x238] sm:$0xff]
        %v1110 = vld [vmem:[#allocation11 + $0x240] sm:$0xff]
        %v1111 = vld [vmem:[#allocation11 + $0x248] sm:$0xff]
        %v1112 = vld [vmem:[#allocation11 + $0x250] sm:$0xff]
        %v1113 = vld [vmem:[#allocation11 + $0x258] sm:$0xff]
        %v1114 = vld [vmem:[#allocation11 + $0x260] sm:$0xff]
        %v1115 = vld [vmem:[#allocation11 + $0x268] sm:$0xff]
        %v1116 = vld [vmem:[#allocation11 + $0x270] sm:$0xff]
        %v1117 = vld [vmem:[#allocation11 + $0x278] sm:$0xff]
        %v1118 = vld [vmem:[#allocation11 + $0x280] sm:$0xff]
        %v1119 = vld [vmem:[#allocation11 + $0x288] sm:$0xff]
        %v1120 = vld [vmem:[#allocation11 + $0x290] sm:$0xff]
        %v1121 = vld [vmem:[#allocation11 + $0x298] sm:$0xff]
        %v1122 = vld [vmem:[#allocation11 + $0x2a0] sm:$0xff]
        %v1123 = vld [vmem:[#allocation11 + $0x2a8] sm:$0xff]
        %v1124 = vld [vmem:[#allocation11 + $0x2b0] sm:$0xff]
        %v1125 = vld [vmem:[#allocation11 + $0x2b8] sm:$0xff]
        %v1126 = vld [vmem:[#allocation11 + $0x2c0] sm:$0xff]
        %v1127 = vld [vmem:[#allocation11 + $0x2c8] sm:$0xff]
        %v1128 = vld [vmem:[#allocation11 + $0x2d0] sm:$0xff]
        %v1129 = vld [vmem:[#allocation11 + $0x2d8] sm:$0xff]
        %v1130 = vld [vmem:[#allocation11 + $0x2e0] sm:$0xff]
        %v1131 = vld [vmem:[#allocation11 + $0x2e8] sm:$0xff]
        %v1132 = vld [vmem:[#allocation11 + $0x2f0] sm:$0xff]
        %v1133 = vld [vmem:[#allocation11 + $0x2f8] sm:$0xff]
        %v1134 = vld [vmem:[#allocation11 + $0x300] sm:$0xff]
        %v1135 = vld [vmem:[#allocation11 + $0x308] sm:$0xff]
        %v1136 = vld [vmem:[#allocation11 + $0x310] sm:$0xff]
        %v1137 = vld [vmem:[#allocation11 + $0x318] sm:$0xff]
        %v1138 = vld [vmem:[#allocation11 + $0x320] sm:$0xff]
        %v1139 = vld [vmem:[#allocation11 + $0x328] sm:$0xff]
        %v1140 = vld [vmem:[#allocation11 + $0x330] sm:$0xff]
        %v1141 = vld [vmem:[#allocation11 + $0x338] sm:$0xff]
        %v1142 = vld [vmem:[#allocation11 + $0x340] sm:$0xff]
        %v1143 = vld [vmem:[#allocation11 + $0x348] sm:$0xff]
        %v1144 = vld [vmem:[#allocation11 + $0x350] sm:$0xff]
        %v1145 = vld [vmem:[#allocation11 + $0x358] sm:$0xff]
        %v1146 = vld [vmem:[#allocation11 + $0x360] sm:$0xff]
        %v1147 = vld [vmem:[#allocation11 + $0x368] sm:$0xff]
        %v1148 = vld [vmem:[#allocation11 + $0x370] sm:$0xff]
        %v1149 = vld [vmem:[#allocation11 + $0x378] sm:$0xff]
        %v1150 = vld [vmem:[#allocation11 + $0x380] sm:$0xff]
        %v1151 = vld [vmem:[#allocation11 + $0x388] sm:$0xff]
        %v1152 = vld [vmem:[#allocation11 + $0x390] sm:$0xff]
        %v1153 = vld [vmem:[#allocation11 + $0x398] sm:$0xff]
        %v1154 = vld [vmem:[#allocation11 + $0x3a0] sm:$0xff]
        %v1155 = vld [vmem:[#allocation11 + $0x3a8] sm:$0xff]
        %v1156 = vld [vmem:[#allocation11 + $0x3b0] sm:$0xff]
        %v1157 = vld [vmem:[#allocation11 + $0x3b8] sm:$0xff]
        %v1158 = vld [vmem:[#allocation11 + $0x3c0] sm:$0xff]
        %v1159 = vld [vmem:[#allocation11 + $0x3c8] sm:$0xff]
        %v1160 = vld [vmem:[#allocation11 + $0x3d0] sm:$0xff]
        %v1161 = vld [vmem:[#allocation11 + $0x3d8] sm:$0xff]
        %v1162 = vld [vmem:[#allocation11 + $0x3e0] sm:$0xff]
        %v1163 = vld [vmem:[#allocation11 + $0x3e8] sm:$0xff]
        %v1164 = vld [vmem:[#allocation11 + $0x3f0] sm:$0xff]
        %v1165 = vld [vmem:[#allocation11 + $0x3f8] sm:$0xff]
        %v1166 = vld [vmem:[#allocation13] sm:$0xff]
        %v1167 = vld [vmem:[#allocation13 + $0x8] sm:$0xff]
        %v1168 = vld [vmem:[#allocation13 + $0x10] sm:$0xff]
        %v1169 = vld [vmem:[#allocation13 + $0x18] sm:$0xff]
        %v1170 = vld [vmem:[#allocation13 + $0x20] sm:$0xff]
        %v1171 = vld [vmem:[#allocation13 + $0x28] sm:$0xff]
        %v1172 = vld [vmem:[#allocation13 + $0x30] sm:$0xff]
        %v1173 = vld [vmem:[#allocation13 + $0x38] sm:$0xff]
        %v1174 = vld [vmem:[#allocation13 + $0x40] sm:$0xff]
        %v1175 = vld [vmem:[#allocation13 + $0x48] sm:$0xff]
        %v1176 = vld [vmem:[#allocation13 + $0x50] sm:$0xff]
        %v1177 = vld [vmem:[#allocation13 + $0x58] sm:$0xff]
        %v1178 = vld [vmem:[#allocation13 + $0x60] sm:$0xff]
        %v1179 = vld [vmem:[#allocation13 + $0x68] sm:$0xff]
        %v1180 = vld [vmem:[#allocation13 + $0x70] sm:$0xff]
        %v1181 = vld [vmem:[#allocation13 + $0x78] sm:$0xff]
        %v1182 = vld [vmem:[#allocation13 + $0x80] sm:$0xff]
        %v1183 = vld [vmem:[#allocation13 + $0x88] sm:$0xff]
        %v1184 = vld [vmem:[#allocation13 + $0x90] sm:$0xff]
        %v1185 = vld [vmem:[#allocation13 + $0x98] sm:$0xff]
        %v1186 = vld [vmem:[#allocation13 + $0xa0] sm:$0xff]
        %v1187 = vld [vmem:[#allocation13 + $0xa8] sm:$0xff]
        %v1188 = vld [vmem:[#allocation13 + $0xb0] sm:$0xff]
        %v1189 = vld [vmem:[#allocation13 + $0xb8] sm:$0xff]
        %v1190 = vld [vmem:[#allocation13 + $0xc0] sm:$0xff]
        %v1191 = vld [vmem:[#allocation13 + $0xc8] sm:$0xff]
        %v1192 = vld [vmem:[#allocation13 + $0xd0] sm:$0xff]
        %v1193 = vld [vmem:[#allocation13 + $0xd8] sm:$0xff]
        %v1194 = vld [vmem:[#allocation13 + $0xe0] sm:$0xff]
        %v1195 = vld [vmem:[#allocation13 + $0xe8] sm:$0xff]
        %v1196 = vld [vmem:[#allocation13 + $0xf0] sm:$0xff]
        %v1197 = vld [vmem:[#allocation13 + $0xf8] sm:$0xff]
        %v1198 = vld [vmem:[#allocation13 + $0x100] sm:$0xff]
        %v1199 = vld [vmem:[#allocation13 + $0x108] sm:$0xff]
        %v1200 = vld [vmem:[#allocation13 + $0x110] sm:$0xff]
        %v1201 = vld [vmem:[#allocation13 + $0x118] sm:$0xff]
        %v1202 = vld [vmem:[#allocation13 + $0x120] sm:$0xff]
        %v1203 = vld [vmem:[#allocation13 + $0x128] sm:$0xff]
        %v1204 = vld [vmem:[#allocation13 + $0x130] sm:$0xff]
        %v1205 = vld [vmem:[#allocation13 + $0x138] sm:$0xff]
        %v1206 = vld [vmem:[#allocation13 + $0x140] sm:$0xff]
        %v1207 = vld [vmem:[#allocation13 + $0x148] sm:$0xff]
        %v1208 = vld [vmem:[#allocation13 + $0x150] sm:$0xff]
        %v1209 = vld [vmem:[#allocation13 + $0x158] sm:$0xff]
        %v1210 = vld [vmem:[#allocation13 + $0x160] sm:$0xff]
        %v1211 = vld [vmem:[#allocation13 + $0x168] sm:$0xff]
        %v1212 = vld [vmem:[#allocation13 + $0x170] sm:$0xff]
        %v1213 = vld [vmem:[#allocation13 + $0x178] sm:$0xff]
        %v1214 = vld [vmem:[#allocation13 + $0x180] sm:$0xff]
        %v1215 = vld [vmem:[#allocation13 + $0x188] sm:$0xff]
        %v1216 = vld [vmem:[#allocation13 + $0x190] sm:$0xff]
        %v1217 = vld [vmem:[#allocation13 + $0x198] sm:$0xff]
        %v1218 = vld [vmem:[#allocation13 + $0x1a0] sm:$0xff]
        %v1219 = vld [vmem:[#allocation13 + $0x1a8] sm:$0xff]
        %v1220 = vld [vmem:[#allocation13 + $0x1b0] sm:$0xff]
        %v1221 = vld [vmem:[#allocation13 + $0x1b8] sm:$0xff]
        %v1222 = vld [vmem:[#allocation13 + $0x1c0] sm:$0xff]
        %v1223 = vld [vmem:[#allocation13 + $0x1c8] sm:$0xff]
        %v1224 = vld [vmem:[#allocation13 + $0x1d0] sm:$0xff]
        %v1225 = vld [vmem:[#allocation13 + $0x1d8] sm:$0xff]
        %v1226 = vld [vmem:[#allocation13 + $0x1e0] sm:$0xff]
        %v1227 = vld [vmem:[#allocation13 + $0x1e8] sm:$0xff]
        %v1228 = vld [vmem:[#allocation13 + $0x1f0] sm:$0xff]
        %v1229 = vld [vmem:[#allocation13 + $0x1f8] sm:$0xff]
        %1230 = vmatpush.msra.mxu0 %v1196
        %1231 = vmatpush.msra.mxu0 %v1194
        %1232 = vmatpush.msra.mxu0 %v1192
        %1233 = vmatpush.msra.mxu0 %v1190
        %1234 = vmatpush.msra.mxu0 %v1188
        %1235 = vmatpush.msra.mxu0 %v1186
        %1236 = vmatpush.msra.mxu0 %v1184
        %1237 = vmatpush.msra.mxu0 %v1182
        %1238 = vmatpush.msra.mxu0 %v1180
        %1239 = vmatpush.msra.mxu0 %v1178
        %1240 = vmatpush.msra.mxu0 %v1176
        %1241 = vmatpush.msra.mxu0 %v1174
        %1242 = vmatpush.msra.mxu0 %v1172
        %1243 = vmatpush.msra.mxu0 %v1170
        %1244 = vmatpush.msra.mxu0 %v1168
        %1245 = vmatpush.msra.mxu0 %v1166
        %1246 = vmatmul.f32.gmra.mxu0 %v444
        %v1247 = vpop.f32.mrf.mxu0
        %v1248 = vadd.f32 0.0, %v1247
        %1249 = vdwg.mxu0
        %1250 = vmatpush.msra.mxu0 %v1228
        %1251 = vmatpush.msra.mxu0 %v1226
        %1252 = vmatpush.msra.mxu0 %v1224
        %1253 = vmatpush.msra.mxu0 %v1222
        %1254 = vmatpush.msra.mxu0 %v1220
        %1255 = vmatpush.msra.mxu0 %v1218
        %1256 = vmatpush.msra.mxu0 %v1216
        %1257 = vmatpush.msra.mxu0 %v1214
        %1258 = vmatpush.msra.mxu0 %v1212
        %1259 = vmatpush.msra.mxu0 %v1210
        %1260 = vmatpush.msra.mxu0 %v1208
        %1261 = vmatpush.msra.mxu0 %v1206
        %1262 = vmatpush.msra.mxu0 %v1204
        %1263 = vmatpush.msra.mxu0 %v1202
        %1264 = vmatpush.msra.mxu0 %v1200
        %1265 = vmatpush.msra.mxu0 %v1198
        %1266 = vmatmul.f32.gmra.mxu0 %v445
        %v1267 = vpop.f32.mrf.mxu0
        %v1268 = vadd.f32 %v1248, %v1267
        %1269 = vdwg.mxu0
        %1270 = vmatpush.msra.mxu0 %v1197
        %1271 = vmatpush.msra.mxu0 %v1195
        %1272 = vmatpush.msra.mxu0 %v1193
        %1273 = vmatpush.msra.mxu0 %v1191
        %1274 = vmatpush.msra.mxu0 %v1189
        %1275 = vmatpush.msra.mxu0 %v1187
        %1276 = vmatpush.msra.mxu0 %v1185
        %1277 = vmatpush.msra.mxu0 %v1183
        %1278 = vmatpush.msra.mxu0 %v1181
        %1279 = vmatpush.msra.mxu0 %v1179
        %1280 = vmatpush.msra.mxu0 %v1177
        %1281 = vmatpush.msra.mxu0 %v1175
        %1282 = vmatpush.msra.mxu0 %v1173
        %1283 = vmatpush.msra.mxu0 %v1171
        %1284 = vmatpush.msra.mxu0 %v1169
        %1285 = vmatpush.msra.mxu0 %v1167
        %1286 = vmatmul.f32.gmra.mxu0 %v444
        %v1287 = vpop.f32.mrf.mxu0
        %v1288 = vadd.f32 0.0, %v1287
        %1289 = vdwg.mxu0
        %1290 = vmatpush.msra.mxu0 %v1229
        %1291 = vmatpush.msra.mxu0 %v1227
        %1292 = vmatpush.msra.mxu0 %v1225
        %1293 = vmatpush.msra.mxu0 %v1223
        %1294 = vmatpush.msra.mxu0 %v1221
        %1295 = vmatpush.msra.mxu0 %v1219
        %1296 = vmatpush.msra.mxu0 %v1217
        %1297 = vmatpush.msra.mxu0 %v1215
        %1298 = vmatpush.msra.mxu0 %v1213
        %1299 = vmatpush.msra.mxu0 %v1211
        %1300 = vmatpush.msra.mxu0 %v1209
        %1301 = vmatpush.msra.mxu0 %v1207
        %1302 = vmatpush.msra.mxu0 %v1205
        %1303 = vmatpush.msra.mxu0 %v1203
        %1304 = vmatpush.msra.mxu0 %v1201
        %1305 = vmatpush.msra.mxu0 %v1199
        %1306 = vmatmul.f32.gmra.mxu0 %v445
        %v1307 = vpop.f32.mrf.mxu0
        %v1308 = vadd.f32 %v1288, %v1307
        %1309 = vdwg.mxu0
        %1310 = vmatpush.msra.mxu0 %v1068
        %1311 = vmatpush.msra.mxu0 %v1066
        %1312 = vmatpush.msra.mxu0 %v1064
        %1313 = vmatpush.msra.mxu0 %v1062
        %1314 = vmatpush.msra.mxu0 %v1060
        %1315 = vmatpush.msra.mxu0 %v1058
        %1316 = vmatpush.msra.mxu0 %v1056
        %1317 = vmatpush.msra.mxu0 %v1054
        %1318 = vmatpush.msra.mxu0 %v1052
        %1319 = vmatpush.msra.mxu0 %v1050
        %1320 = vmatpush.msra.mxu0 %v1048
        %1321 = vmatpush.msra.mxu0 %v1046
        %1322 = vmatpush.msra.mxu0 %v1044
        %1323 = vmatpush.msra.mxu0 %v1042
        %1324 = vmatpush.msra.mxu0 %v1040
        %1325 = vmatpush.msra.mxu0 %v1038
        %1326 = vmatmul.f32.gmra.mxu0 %v1034
        %v1327 = vpop.f32.mrf.mxu0
        %v1328 = vadd.f32 %v1268, %v1327
        %1329 = vdwg.mxu0
        %1330 = vmatpush.msra.mxu0 %v1100
        %1331 = vmatpush.msra.mxu0 %v1098
        %1332 = vmatpush.msra.mxu0 %v1096
        %1333 = vmatpush.msra.mxu0 %v1094
        %1334 = vmatpush.msra.mxu0 %v1092
        %1335 = vmatpush.msra.mxu0 %v1090
        %1336 = vmatpush.msra.mxu0 %v1088
        %1337 = vmatpush.msra.mxu0 %v1086
        %1338 = vmatpush.msra.mxu0 %v1084
        %1339 = vmatpush.msra.mxu0 %v1082
        %1340 = vmatpush.msra.mxu0 %v1080
        %1341 = vmatpush.msra.mxu0 %v1078
        %1342 = vmatpush.msra.mxu0 %v1076
        %1343 = vmatpush.msra.mxu0 %v1074
        %1344 = vmatpush.msra.mxu0 %v1072
        %1345 = vmatpush.msra.mxu0 %v1070
        %1346 = vmatmul.f32.gmra.mxu0 %v1035
        %v1347 = vpop.f32.mrf.mxu0
        %v1348 = vadd.f32 %v1328, %v1347
        %1349 = vdwg.mxu0
        %1350 = vmatpush.msra.mxu0 %v1132
        %1351 = vmatpush.msra.mxu0 %v1130
        %1352 = vmatpush.msra.mxu0 %v1128
        %1353 = vmatpush.msra.mxu0 %v1126
        %1354 = vmatpush.msra.mxu0 %v1124
        %1355 = vmatpush.msra.mxu0 %v1122
        %1356 = vmatpush.msra.mxu0 %v1120
        %1357 = vmatpush.msra.mxu0 %v1118
        %1358 = vmatpush.msra.mxu0 %v1116
        %1359 = vmatpush.msra.mxu0 %v1114
        %1360 = vmatpush.msra.mxu0 %v1112
        %1361 = vmatpush.msra.mxu0 %v1110
        %1362 = vmatpush.msra.mxu0 %v1108
        %1363 = vmatpush.msra.mxu0 %v1106
        %1364 = vmatpush.msra.mxu0 %v1104
        %1365 = vmatpush.msra.mxu0 %v1102
        %1366 = vmatmul.f32.gmra.mxu0 %v1036
        %v1367 = vpop.f32.mrf.mxu0
        %v1368 = vadd.f32 %v1348, %v1367
        %1369 = vdwg.mxu0
        %1370 = vmatpush.msra.mxu0 %v1164
        %1371 = vmatpush.msra.mxu0 %v1162
        %1372 = vmatpush.msra.mxu0 %v1160
        %1373 = vmatpush.msra.mxu0 %v1158
        %1374 = vmatpush.msra.mxu0 %v1156
        %1375 = vmatpush.msra.mxu0 %v1154
        %1376 = vmatpush.msra.mxu0 %v1152
        %1377 = vmatpush.msra.mxu0 %v1150
        %1378 = vmatpush.msra.mxu0 %v1148
        %1379 = vmatpush.msra.mxu0 %v1146
        %1380 = vmatpush.msra.mxu0 %v1144
        %1381 = vmatpush.msra.mxu0 %v1142
        %1382 = vmatpush.msra.mxu0 %v1140
        %1383 = vmatpush.msra.mxu0 %v1138
        %1384 = vmatpush.msra.mxu0 %v1136
        %1385 = vmatpush.msra.mxu0 %v1134
        %1386 = vmatmul.f32.gmra.mxu0 %v1037
        %v1387 = vpop.f32.mrf.mxu0
        %v1388 = vadd.f32 %v1368, %v1387
        %1389 = vdwg.mxu0
        %1390 = vmatpush.msra.mxu0 %v1069
        %1391 = vmatpush.msra.mxu0 %v1067
        %1392 = vmatpush.msra.mxu0 %v1065
        %1393 = vmatpush.msra.mxu0 %v1063
        %1394 = vmatpush.msra.mxu0 %v1061
        %1395 = vmatpush.msra.mxu0 %v1059
        %1396 = vmatpush.msra.mxu0 %v1057
        %1397 = vmatpush.msra.mxu0 %v1055
        %1398 = vmatpush.msra.mxu0 %v1053
        %1399 = vmatpush.msra.mxu0 %v1051
        %1400 = vmatpush.msra.mxu0 %v1049
        %1401 = vmatpush.msra.mxu0 %v1047
        %1402 = vmatpush.msra.mxu0 %v1045
        %1403 = vmatpush.msra.mxu0 %v1043
        %1404 = vmatpush.msra.mxu0 %v1041
        %1405 = vmatpush.msra.mxu0 %v1039
        %1406 = vmatmul.f32.gmra.mxu0 %v1034
        %v1407 = vpop.f32.mrf.mxu0
        %v1408 = vadd.f32 %v1308, %v1407
        %1409 = vdwg.mxu0
        %1410 = vmatpush.msra.mxu0 %v1101
        %1411 = vmatpush.msra.mxu0 %v1099
        %1412 = vmatpush.msra.mxu0 %v1097
        %1413 = vmatpush.msra.mxu0 %v1095
        %1414 = vmatpush.msra.mxu0 %v1093
        %1415 = vmatpush.msra.mxu0 %v1091
        %1416 = vmatpush.msra.mxu0 %v1089
        %1417 = vmatpush.msra.mxu0 %v1087
        %1418 = vmatpush.msra.mxu0 %v1085
        %1419 = vmatpush.msra.mxu0 %v1083
        %1420 = vmatpush.msra.mxu0 %v1081
        %1421 = vmatpush.msra.mxu0 %v1079
        %1422 = vmatpush.msra.mxu0 %v1077
        %1423 = vmatpush.msra.mxu0 %v1075
        %1424 = vmatpush.msra.mxu0 %v1073
        %1425 = vmatpush.msra.mxu0 %v1071
        %1426 = vmatmul.f32.gmra.mxu0 %v1035
        %v1427 = vpop.f32.mrf.mxu0
        %v1428 = vadd.f32 %v1408, %v1427
        %1429 = vdwg.mxu0
        %1430 = vmatpush.msra.mxu0 %v1133
        %1431 = vmatpush.msra.mxu0 %v1131
        %1432 = vmatpush.msra.mxu0 %v1129
        %1433 = vmatpush.msra.mxu0 %v1127
        %1434 = vmatpush.msra.mxu0 %v1125
        %1435 = vmatpush.msra.mxu0 %v1123
        %1436 = vmatpush.msra.mxu0 %v1121
        %1437 = vmatpush.msra.mxu0 %v1119
        %1438 = vmatpush.msra.mxu0 %v1117
        %1439 = vmatpush.msra.mxu0 %v1115
        %1440 = vmatpush.msra.mxu0 %v1113
        %1441 = vmatpush.msra.mxu0 %v1111
        %1442 = vmatpush.msra.mxu0 %v1109
        %1443 = vmatpush.msra.mxu0 %v1107
        %1444 = vmatpush.msra.mxu0 %v1105
        %1445 = vmatpush.msra.mxu0 %v1103
        %1446 = vmatmul.f32.gmra.mxu0 %v1036
        %v1447 = vpop.f32.mrf.mxu0
        %v1448 = vadd.f32 %v1428, %v1447
        %1449 = vdwg.mxu0
        %1450 = vmatpush.msra.mxu0 %v1165
        %1451 = vmatpush.msra.mxu0 %v1163
        %1452 = vmatpush.msra.mxu0 %v1161
        %1453 = vmatpush.msra.mxu0 %v1159
        %1454 = vmatpush.msra.mxu0 %v1157
        %1455 = vmatpush.msra.mxu0 %v1155
        %1456 = vmatpush.msra.mxu0 %v1153
        %1457 = vmatpush.msra.mxu0 %v1151
        %1458 = vmatpush.msra.mxu0 %v1149
        %1459 = vmatpush.msra.mxu0 %v1147
        %1460 = vmatpush.msra.mxu0 %v1145
        %1461 = vmatpush.msra.mxu0 %v1143
        %1462 = vmatpush.msra.mxu0 %v1141
        %1463 = vmatpush.msra.mxu0 %v1139
        %1464 = vmatpush.msra.mxu0 %v1137
        %1465 = vmatpush.msra.mxu0 %v1135
        %1466 = vmatmul.f32.gmra.mxu0 %v1037
        %v1467 = vpop.f32.mrf.mxu0
        %v1468 = vadd.f32 %v1448, %v1467
        %1469 = vdwg.mxu0
        %v1470 = vld [vmem:[%s7] sm:$0x3]
        %v1472 = vperm.slane %v1470, 0
        %v1473 = vperm.slane %v1470, 1
        %v1476 = vadd.f32 %v1388, %v1472
        %v1477 = vadd.f32 %v1468, %v1473
        %1478 = vst [vmem:[%s443] sm:$0xff] %v1476
        %1479 = vst [vmem:[%s443 + $0x8] sm:$0xff] %v1477
        %s1480 = sand.u32 %s216, 1
        %s1481 = scalar_lea.sflag [#allocation4], %s1480
        %s1482 = sand.u32 %s216, 1
        %s1483 = smul.addr %s1482, 16
        %s1484 = scalar_lea.vmem [#allocation14], %s1483
        // Predicated region
        $region81: #{tpu_custom_call.1} parent=51 // pred_check
          %p1485 = pneg %p226
        $region82: #{tpu_custom_call.1} parent=51 // pred_check_branch
          %1487 = sbr.rel (%p1485) target = $region84
        $region83: #{tpu_custom_call.1} parent=51 // pred_region
          %1489 = vsyncadd %s1481, 0
          %s1490 = smul.addr %s30, 2
          %s1491 = smul.addr %s1490, 8
          %s1492 = scalar_lea.hbm %s8, %s1491
          %s1494 = sshll.u32 %s1484, 4
          %s1495 = int_to_ptr.vmem [resolvable:$true] %s1494
          %s1496 = sshll.u32 %s1492, 4
          %s1497 = int_to_ptr.hbm [resolvable:$true] %s1496
          %1499 = dma.vmem_to_hbm [thread:$0]  %s1495, 256, %s1497, %s1481
        $region84: #{tpu_custom_call.1} parent=51 // pred_fallthru
          _
      $region52: #{tpu_custom_call.1} parent=5 // pred_fallthru
        _
      %p1500 = scmp.le.s32.totalorder 2, %s25
      // Predicated region
      $region85: #{tpu_custom_call.1} parent=5 // pred_check
        %p1501 = pneg %p1500
      $region86: #{tpu_custom_call.1} parent=5 // pred_check_branch
        %1503 = sbr.rel (%p1501) target = $region88
      $region87: #{tpu_custom_call.1} parent=5 // pred_region
        %s1504 = ssub.s32 %s25, 2
        // Predicated region
        $region89: #{tpu_custom_call.1} parent=87 // pred_check
          %p1505 = pneg %p232
        $region90: #{tpu_custom_call.1} parent=87 // pred_check_branch
          %1507 = sbr.rel (%p1505) target = $region92
        $region91: #{tpu_custom_call.1} parent=87 // pred_region
          %s1508 = sand.u32 %s217, 1
          %s1509 = scalar_lea.sflag [#allocation4], %s1508
          %s1510 = sand.u32 %s217, 1
          %s1511 = smul.addr %s1510, 16
          %s1512 = scalar_lea.vmem [#allocation14], %s1511
          %1514 = dma.done %s1509, 256
        $region92: #{tpu_custom_call.1} parent=87 // pred_fallthru
          _
      $region88: #{tpu_custom_call.1} parent=5 // pred_fallthru
        _
    $region6: #{tpu_custom_call.1} parent=1 // loop_footer
      %s29 = sadd.s32 1, %s25
    $region7: #{tpu_custom_call.1} parent=1 // loop_footer_branch
      %24 = sbr.rel target = $region3
    $region8: #{tpu_custom_call.1} parent=1 // loop_exit
      _
    %1515 = vsyncpa [#allocation3], 1
    %s1516 = scalar_lea.sflag [#allocation3], 1
    %1517 = vsyncpa %s1516, 1
    %1518 = vsyncpa [#allocation6], 1
    %s1519 = scalar_lea.sflag [#allocation6], 1
    %1520 = vsyncpa %s1519, 1
    %1521 = vsyncpa [#allocation9], 1
    %1522 = vsyncpa [#allocation12], 1
    %1523 = vsyncpa [#allocation4], 1
    %s1524 = scalar_lea.sflag [#allocation4], 1
    %1525 = vsyncpa %s1524, 1

// kernel: tpu_custom_call.1
$region0: #{tpu_custom_call.1}
  #allocation0 [shape = 'u32[]', space=smem, size = 0x4, offset = 0x4, fixed_abs, tag = 'smem constant byte address 0x4 - core index']
  #allocation1 [shape = 'u32[72,128]{1,0:T(1,128)}', space=vmem, size = 0x9000, scoped, tag = 'internal scratch']
  %s0 = inlined_call_operand.hbm [shape: f32[16,256], index: 0, kind: input, shape index: {}]
  %s1 = inlined_call_operand.hbm [shape: f32[16,256], index: 1, kind: input, shape index: {}]
  %s2 = inlined_call_operand.hbm [shape: f32[256,512], index: 2, kind: input, shape index: {}]
  %s3 = inlined_call_operand.hbm [shape: f32[256,512], index: 3, kind: input, shape index: {}]
  %s4 = inlined_call_operand.hbm [shape: f32[1,512], index: 4, kind: input, shape index: {}]
  %s5 = inlined_call_operand.hbm [shape: f32[512,256], index: 5, kind: input, shape index: {}]
  %s6 = inlined_call_operand.hbm [shape: f32[256,256], index: 6, kind: input, shape index: {}]
  %s7 = inlined_call_operand.vmem [shape: f32[1,256], index: 7, kind: input, shape index: {}]
  %s8 = inlined_call_operand.hbm [shape: f32[16,256], index: 8, kind: output, shape index: {}]
  %s9 = sld [smem:[#allocation0]]
  $region93: #{tpu_custom_call.1} parent=0
    _
  %s11 = ssub.s32 1, %s9
  %s12 = scalar_select 0, %s11, %s9
  $region1: #{tpu_custom_call.1} parent=0
    #allocation2 [shape = 'u8[16384]{0}', space=vmem, size = 0x4000, scoped, tag = 'input window, operand 0']
    #allocation3 [shape = 's32[2]{0}', space=sflag, size = 0x8, scoped, tag = 'scoped memory for tpu_custom_call.1']
    #allocation4 [shape = 's32[2]{0}', space=sflag, size = 0x8, scoped, tag = 'scoped memory for tpu_custom_call.1']
    #allocation5 [shape = 'u8[16384]{0}', space=vmem, size = 0x4000, scoped, tag = 'input window, operand 1']
    #allocation6 [shape = 's32[2]{0}', space=sflag, size = 0x8, scoped, tag = 'scoped memory for tpu_custom_call.1']
    #allocation7 [shape = 'u8[524288]{0}', space=vmem, size = 0x80000, scoped, tag = 'input window, operand 2, single buffered']
    #allocation8 [shape = 'u8[524288]{0}', space=vmem, size = 0x80000, scoped, tag = 'input window, operand 3, single buffered']
    #allocation9 [shape = 's32[1]{0}', space=sflag, size = 0x4, scoped, tag = 'scoped memory for tpu_custom_call.1']
    #allocation10 [shape = 'u8[2048]{0}', space=vmem, size = 0x800, scoped, tag = 'input window, operand 4, single buffered']
    #allocation11 [shape = 'u8[524288]{0}', space=vmem, size = 0x80000, scoped, tag = 'input window, operand 5, single buffered']
    #allocation12 [shape = 's32[1]{0}', space=sflag, size = 0x4, scoped, tag = 'scoped memory for tpu_custom_call.1']
    #allocation13 [shape = 'u8[262144]{0}', space=vmem, size = 0x40000, scoped, tag = 'input window, operand 6, single buffered']
    #allocation14 [shape = 'u8[16384]{0}', space=vmem, size = 0x4000, scoped, tag = 'output window, operand 0']
    %13 = vsyncpa [#allocation3], 0
    %s14 = scalar_lea.sflag [#allocation3], 1
    %15 = vsyncpa %s14, 0
    %16 = vsyncpa [#allocation6], 0
    %s17 = scalar_lea.sflag [#allocation6], 1
    %18 = vsyncpa %s17, 0
    %19 = vsyncpa [#allocation9], 0
    %20 = vsyncpa [#allocation12], 0
    %21 = vsyncpa [#allocation4], 0
    %s22 = scalar_lea.sflag [#allocation4], 1
    %23 = vsyncpa %s22, 0
    loop: start=0, step=1, limit=4
    $region2: #{tpu_custom_call.1} parent=1 // loop_pre_header
      _
    $region3: #{tpu_custom_call.1} parent=1 // loop_header
      %s25 = sphi 0, %s29
      %p26 = scmp.ge.s32.totalorder %s25, 4
      %s35 = sphi 0, %s37
      %s38 = sphi 0, %s35
      %s39 = sphi 0, %s38
      %s55 = sphi 0, %s39
      %s61 = sphi 0, %s63
      %s64 = sphi 0, %s61
      %s65 = sphi 0, %s64
      %s81 = sphi 0, %s65
      %s85 = sphi 0, %s85
      %s87 = sphi 0, %s85
      %s88 = sphi 0, %s87
      %s102 = sphi 0, %s88
      %s106 = sphi 0, %s106
      %s108 = sphi 0, %s106
      %s109 = sphi 0, %s108
      %s123 = sphi 0, %s109
      %s127 = sphi 0, %s127
      %s129 = sphi 0, %s127
      %s130 = sphi 0, %s129
      %s144 = sphi 0, %s130
      %s148 = sphi 0, %s148
      %s150 = sphi 0, %s148
      %s151 = sphi 0, %s150
      %s165 = sphi 0, %s151
      %s169 = sphi 0, %s169
      %s171 = sphi 0, %s169
      %s172 = sphi 0, %s171
      %s186 = sphi 0, %s172
      %s190 = sphi 0, %s190
      %s192 = sphi 0, %s190
      %s193 = sphi 0, %s192
      %s207 = sphi 0, %s193
      %s213 = sphi 0, %s215
      %s216 = sphi 0, %s213
      %s217 = sphi 0, %s216
      %s233 = sphi 0, %s217
    $region4: #{tpu_custom_call.1} parent=1 // loop_header_branch
      %28 = sbr.rel (%p26) target = $region8
    $region5: #{tpu_custom_call.1} parent=1 // loop_body
      %s30 = ssub.s32 %s25, 1
      %s31 = ssub.s32 %s25, 2
      %s32 = sadd.s32 %s25, 1
      %s33 = ssub.s32 %s25, %s32
      %p34 = scmp.eq.s32.totalorder %s33, 0
      %s36 = sadd.s32 %s35, 1
      %s37 = scalar_select %p34, %s35, %s36
      %p40 = pneg %p34
      %p41 = scmp.eq.s32.totalorder %s25, 1
      %p42 = por %p40, %p41
      %p43 = scmp.ne.s32.totalorder %s35, %s38
      %p44 = scmp.eq.s32.totalorder %s25, 0
      %p45 = por %p43, %p44
      %p46 = scmp.ne.s32.totalorder %s35, %s38
      %p47 = scmp.eq.s32.totalorder %s30, 1
      %p48 = por %p46, %p47
      %p49 = scmp.ne.s32.totalorder %s38, %s39
      %p50 = scmp.eq.s32.totalorder %s30, 0
      %p51 = por %p49, %p50
      %p52 = scmp.ne.s32.totalorder %s38, %s39
      %p53 = scmp.eq.s32.totalorder %s31, 1
      %p54 = por %p52, %p53
      %p56 = scmp.ne.s32.totalorder %s39, %s55
      %p57 = scmp.eq.s32.totalorder %s31, 0
      %p58 = por %p56, %p57
      %s59 = ssub.s32 %s25, %s32
      %p60 = scmp.eq.s32.totalorder %s59, 0
      %s62 = sadd.s32 %s61, 1
      %s63 = scalar_select %p60, %s61, %s62
      %p66 = pneg %p60
      %p67 = scmp.eq.s32.totalorder %s25, 1
      %p68 = por %p66, %p67
      %p69 = scmp.ne.s32.totalorder %s61, %s64
      %p70 = scmp.eq.s32.totalorder %s25, 0
      %p71 = por %p69, %p70
      %p72 = scmp.ne.s32.totalorder %s61, %s64
      %p73 = scmp.eq.s32.totalorder %s30, 1
      %p74 = por %p72, %p73
      %p75 = scmp.ne.s32.totalorder %s64, %s65
      %p76 = scmp.eq.s32.totalorder %s30, 0
      %p77 = por %p75, %p76
      %p78 = scmp.ne.s32.totalorder %s64, %s65
      %p79 = scmp.eq.s32.totalorder %s31, 1
      %p80 = por %p78, %p79
      %p82 = scmp.ne.s32.totalorder %s65, %s81
      %p83 = scmp.eq.s32.totalorder %s31, 0
      %p84 = por %p82, %p83
      %s86 = sadd.s32 %s85, 1
      %p89 = scmp.eq.s32.totalorder %s25, 1
      %p90 = scmp.ne.s32.totalorder %s85, %s87
      %p91 = scmp.eq.s32.totalorder %s25, 0
      %p92 = por %p90, %p91
      %p93 = scmp.ne.s32.totalorder %s85, %s87
      %p94 = scmp.eq.s32.totalorder %s30, 1
      %p95 = por %p93, %p94
      %p96 = scmp.ne.s32.totalorder %s87, %s88
      %p97 = scmp.eq.s32.totalorder %s30, 0
      %p98 = por %p96, %p97
      %p99 = scmp.ne.s32.totalorder %s87, %s88
      %p100 = scmp.eq.s32.totalorder %s31, 1
      %p101 = por %p99, %p100
      %p103 = scmp.ne.s32.totalorder %s88, %s102
      %p104 = scmp.eq.s32.totalorder %s31, 0
      %p105 = por %p103, %p104
      %s107 = sadd.s32 %s106, 1
      %p110 = scmp.eq.s32.totalorder %s25, 1
      %p111 = scmp.ne.s32.totalorder %s106, %s108
      %p112 = scmp.eq.s32.totalorder %s25, 0
      %p113 = por %p111, %p112
      %p114 = scmp.ne.s32.totalorder %s106, %s108
      %p115 = scmp.eq.s32.totalorder %s30, 1
      %p116 = por %p114, %p115
      %p117 = scmp.ne.s32.totalorder %s108, %s109
      %p118 = scmp.eq.s32.totalorder %s30, 0
      %p119 = por %p117, %p118
      %p120 = scmp.ne.s32.totalorder %s108, %s109
      %p121 = scmp.eq.s32.totalorder %s31, 1
      %p122 = por %p120, %p121
      %p124 = scmp.ne.s32.totalorder %s109, %s123
      %p125 = scmp.eq.s32.totalorder %s31, 0
      %p126 = por %p124, %p125
      %s128 = sadd.s32 %s127, 1
      %p131 = scmp.eq.s32.totalorder %s25, 1
      %p132 = scmp.ne.s32.totalorder %s127, %s129
      %p133 = scmp.eq.s32.totalorder %s25, 0
      %p134 = por %p132, %p133
      %p135 = scmp.ne.s32.totalorder %s127, %s129
      %p136 = scmp.eq.s32.totalorder %s30, 1
      %p137 = por %p135, %p136
      %p138 = scmp.ne.s32.totalorder %s129, %s130
      %p139 = scmp.eq.s32.totalorder %s30, 0
      %p140 = por %p138, %p139
      %p141 = scmp.ne.s32.totalorder %s129, %s130
      %p142 = scmp.eq.s32.totalorder %s31, 1
      %p143 = por %p141, %p142
      %p145 = scmp.ne.s32.totalorder %s130, %s144
      %p146 = scmp.eq.s32.totalorder %s31, 0
      %p147 = por %p145, %p146
      %s149 = sadd.s32 %s148, 1
      %p152 = scmp.eq.s32.totalorder %s25, 1
      %p153 = scmp.ne.s32.totalorder %s148, %s150
      %p154 = scmp.eq.s32.totalorder %s25, 0
      %p155 = por %p153, %p154
      %p156 = scmp.ne.s32.totalorder %s148, %s150
      %p157 = scmp.eq.s32.totalorder %s30, 1
      %p158 = por %p156, %p157
      %p159 = scmp.ne.s32.totalorder %s150, %s151
      %p160 = scmp.eq.s32.totalorder %s30, 0
      %p161 = por %p159, %p160
      %p162 = scmp.ne.s32.totalorder %s150, %s151
      %p163 = scmp.eq.s32.totalorder %s31, 1
      %p164 = por %p162, %p163
      %p166 = scmp.ne.s32.totalorder %s151, %s165
      %p167 = scmp.eq.s32.totalorder %s31, 0
      %p168 = por %p166, %p167
      %s170 = sadd.s32 %s169, 1
      %p173 = scmp.eq.s32.totalorder %s25, 1
      %p174 = scmp.ne.s32.totalorder %s169, %s171
      %p175 = scmp.eq.s32.totalorder %s25, 0
      %p176 = por %p174, %p175
      %p177 = scmp.ne.s32.totalorder %s169, %s171
      %p178 = scmp.eq.s32.totalorder %s30, 1
      %p179 = por %p177, %p178
      %p180 = scmp.ne.s32.totalorder %s171, %s172
      %p181 = scmp.eq.s32.totalorder %s30, 0
      %p182 = por %p180, %p181
      %p183 = scmp.ne.s32.totalorder %s171, %s172
      %p184 = scmp.eq.s32.totalorder %s31, 1
      %p185 = por %p183, %p184
      %p187 = scmp.ne.s32.totalorder %s172, %s186
      %p188 = scmp.eq.s32.totalorder %s31, 0
      %p189 = por %p187, %p188
      %s191 = sadd.s32 %s190, 1
      %p194 = scmp.eq.s32.totalorder %s25, 1
      %p195 = scmp.ne.s32.totalorder %s190, %s192
      %p196 = scmp.eq.s32.totalorder %s25, 0
      %p197 = por %p195, %p196
      %p198 = scmp.ne.s32.totalorder %s190, %s192
      %p199 = scmp.eq.s32.totalorder %s30, 1
      %p200 = por %p198, %p199
      %p201 = scmp.ne.s32.totalorder %s192, %s193
      %p202 = scmp.eq.s32.totalorder %s30, 0
      %p203 = por %p201, %p202
      %p204 = scmp.ne.s32.totalorder %s192, %s193
      %p205 = scmp.eq.s32.totalorder %s31, 1
      %p206 = por %p204, %p205
      %p208 = scmp.ne.s32.totalorder %s193, %s207
      %p209 = scmp.eq.s32.totalorder %s31, 0
      %p210 = por %p208, %p209
      %s211 = ssub.s32 %s25, %s32
      %p212 = scmp.eq.s32.totalorder %s211, 0
      %s214 = sadd.s32 %s213, 1
      %s215 = scalar_select %p212, %s213, %s214
      %p218 = pneg %p212
      %p219 = scmp.eq.s32.totalorder %s25, 1
      %p220 = por %p218, %p219
      %p221 = scmp.ne.s32.totalorder %s213, %s216
      %p222 = scmp.eq.s32.totalorder %s25, 0
      %p223 = por %p221, %p222
      %p224 = scmp.ne.s32.totalorder %s213, %s216
      %p225 = scmp.eq.s32.totalorder %s30, 1
      %p226 = por %p224, %p225
      %p227 = scmp.ne.s32.totalorder %s216, %s217
      %p228 = scmp.eq.s32.totalorder %s30, 0
      %p229 = por %p227, %p228
      %p230 = scmp.ne.s32.totalorder %s216, %s217
      %p231 = scmp.eq.s32.totalorder %s31, 1
      %p232 = por %p230, %p231
      %p234 = scmp.ne.s32.totalorder %s217, %s233
      %p235 = scmp.eq.s32.totalorder %s31, 0
      %p236 = por %p234, %p235
      %p237 = scmp.le.s32.totalorder 1, %s25
      %p238 = scmp.lt.s32.totalorder %s25, 3
      %p239 = pnand %p237, %p238
      %p240 = pneg %p239
      // Predicated region
      $region9: #{tpu_custom_call.1} parent=5 // pred_check
        _
      $region10: #{tpu_custom_call.1} parent=5 // pred_check_branch
        %242 = sbr.rel (%p239) target = $region12
      $region11: #{tpu_custom_call.1} parent=5 // pred_region
        %s243 = ssub.s32 %s25, 1
        // Predicated region
        $region13: #{tpu_custom_call.1} parent=11 // pred_check
          %p244 = pneg %p98
        $region14: #{tpu_custom_call.1} parent=11 // pred_check_branch
          %246 = sbr.rel (%p244) target = $region16
        $region15: #{tpu_custom_call.1} parent=11 // pred_region
          %248 = vsyncadd [#allocation6], 0
          %s249 = sshll.u32 %s2, 4
          %s250 = int_to_ptr.hbm [resolvable:$true] %s249
          %s251 = sshll.u32 [#allocation7], 4
          %s252 = int_to_ptr.vmem [resolvable:$true] %s251
          %257 = dma.hbm_to_vmem [thread:$0]  %s250, 16384, %s252, [#allocation6], 512, 512, 32
        $region16: #{tpu_custom_call.1} parent=11 // pred_fallthru
          _
        // Predicated region
        $region17: #{tpu_custom_call.1} parent=11 // pred_check
          %p258 = pneg %p119
        $region18: #{tpu_custom_call.1} parent=11 // pred_check_branch
          %260 = sbr.rel (%p258) target = $region20
        $region19: #{tpu_custom_call.1} parent=11 // pred_region
          %262 = vsyncadd [#allocation9], 0
          %s263 = sshll.u32 %s3, 4
          %s264 = int_to_ptr.hbm [resolvable:$true] %s263
          %s265 = sshll.u32 [#allocation8], 4
          %s266 = int_to_ptr.vmem [resolvable:$true] %s265
          %271 = dma.hbm_to_vmem [thread:$0]  %s264, 16384, %s266, [#allocation9], 512, 512, 32
        $region20: #{tpu_custom_call.1} parent=11 // pred_fallthru
          _
        // Predicated region
        $region21: #{tpu_custom_call.1} parent=11 // pred_check
          %p272 = pneg %p140
        $region22: #{tpu_custom_call.1} parent=11 // pred_check_branch
          %274 = sbr.rel (%p272) target = $region24
        $region23: #{tpu_custom_call.1} parent=11 // pred_region
          %276 = vsyncadd [#allocation9], 0
          %s278 = sshll.u32 %s4, 4
          %s279 = int_to_ptr.hbm [resolvable:$true] %s278
          %s280 = sshll.u32 [#allocation10], 4
          %s281 = int_to_ptr.vmem [resolvable:$true] %s280
          %283 = dma.hbm_to_vmem [thread:$0]  %s279, 64, %s281, [#allocation9]
        $region24: #{tpu_custom_call.1} parent=11 // pred_fallthru
          _
        // Predicated region
        $region25: #{tpu_custom_call.1} parent=11 // pred_check
          %p284 = pneg %p161
        $region26: #{tpu_custom_call.1} parent=11 // pred_check_branch
          %286 = sbr.rel (%p284) target = $region28
        $region27: #{tpu_custom_call.1} parent=11 // pred_region
          %288 = vsyncadd [#allocation12], 0
          %s289 = sshll.u32 %s5, 4
          %s290 = int_to_ptr.hbm [resolvable:$true] %s289
          %s291 = sshll.u32 [#allocation11], 4
          %s292 = int_to_ptr.vmem [resolvable:$true] %s291
          %297 = dma.hbm_to_vmem [thread:$0]  %s290, 16384, %s292, [#allocation12], 256, 256, 16
        $region28: #{tpu_custom_call.1} parent=11 // pred_fallthru
          _
        // Predicated region
        $region29: #{tpu_custom_call.1} parent=11 // pred_check
          %p298 = pneg %p182
        $region30: #{tpu_custom_call.1} parent=11 // pred_check_branch
          %300 = sbr.rel (%p298) target = $region32
        $region31: #{tpu_custom_call.1} parent=11 // pred_region
          %302 = vsyncadd [#allocation12], 0
          %s303 = sshll.u32 %s6, 4
          %s304 = int_to_ptr.hbm [resolvable:$true] %s303
          %s305 = sshll.u32 [#allocation13], 4
          %s306 = int_to_ptr.vmem [resolvable:$true] %s305
          %311 = dma.hbm_to_vmem [thread:$0]  %s304, 8192, %s306, [#allocation12], 256, 256, 16
        $region32: #{tpu_custom_call.1} parent=11 // pred_fallthru
          _
        // Predicated region
        $region33: #{tpu_custom_call.1} parent=11 // pred_check
          %p312 = pneg %p203
        $region34: #{tpu_custom_call.1} parent=11 // pred_check_branch
          %314 = sbr.rel (%p312) target = $region36
        $region35: #{tpu_custom_call.1} parent=11 // pred_region
          _
        $region36: #{tpu_custom_call.1} parent=11 // pred_fallthru
          _
      $region12: #{tpu_custom_call.1} parent=5 // pred_fallthru
        _
      %p315 = scmp.lt.s32.totalorder %s25, 2
      // Predicated region
      $region37: #{tpu_custom_call.1} parent=5 // pred_check
        %p316 = pneg %p315
      $region38: #{tpu_custom_call.1} parent=5 // pred_check_branch
        %318 = sbr.rel (%p316) target = $region40
      $region39: #{tpu_custom_call.1} parent=5 // pred_region
        // Predicated region
        $region41: #{tpu_custom_call.1} parent=39 // pred_check
          %p319 = pneg %p45
        $region42: #{tpu_custom_call.1} parent=39 // pred_check_branch
          %321 = sbr.rel (%p319) target = $region44
        $region43: #{tpu_custom_call.1} parent=39 // pred_region
          %s322 = sand.u32 %s35, 1
          %s323 = scalar_lea.sflag [#allocation3], %s322
          %s324 = sand.u32 %s35, 1
          %s325 = smul.addr %s324, 16
          %s326 = scalar_lea.vmem [#allocation2], %s325
          %328 = vsyncadd %s323, 0
          %s329 = smul.addr %s25, 2
          %s330 = smul.addr %s329, 8
          %s331 = scalar_lea.hbm %s0, %s330
          %s333 = sshll.u32 %s331, 4
          %s334 = int_to_ptr.hbm [resolvable:$true] %s333
          %s335 = sshll.u32 %s326, 4
          %s336 = int_to_ptr.vmem [resolvable:$true] %s335
          %338 = dma.hbm_to_vmem [thread:$0]  %s334, 256, %s336, %s323
        $region44: #{tpu_custom_call.1} parent=39 // pred_fallthru
          _
        // Predicated region
        $region45: #{tpu_custom_call.1} parent=39 // pred_check
          %p339 = pneg %p71
        $region46: #{tpu_custom_call.1} parent=39 // pred_check_branch
          %341 = sbr.rel (%p339) target = $region48
        $region47: #{tpu_custom_call.1} parent=39 // pred_region
          %s342 = sand.u32 %s25, 1
          %s343 = scalar_lea.sflag [#allocation6], %s342
          %s344 = sand.u32 %s61, 1
          %s345 = smul.addr %s344, 16
          %s346 = scalar_lea.vmem [#allocation5], %s345
          %348 = vsyncadd %s343, 0
          %s349 = smul.addr %s25, 2
          %s350 = smul.addr %s349, 8
          %s351 = scalar_lea.hbm %s1, %s350
          %s353 = sshll.u32 %s351, 4
          %s354 = int_to_ptr.hbm [resolvable:$true] %s353
          %s355 = sshll.u32 %s346, 4
          %s356 = int_to_ptr.vmem [resolvable:$true] %s355
          %358 = dma.hbm_to_vmem [thread:$0]  %s354, 256, %s356, %s343
        $region48: #{tpu_custom_call.1} parent=39 // pred_fallthru
          _
      $region40: #{tpu_custom_call.1} parent=5 // pred_fallthru
        _
      %p359 = scmp.le.s32.totalorder 1, %s25
      %p360 = scmp.lt.s32.totalorder %s25, 3
      %p361 = pnand %p359, %p360
      %p362 = pneg %p361
      // Predicated region
      $region49: #{tpu_custom_call.1} parent=5 // pred_check
        _
      $region50: #{tpu_custom_call.1} parent=5 // pred_check_branch
        %364 = sbr.rel (%p361) target = $region52
      $region51: #{tpu_custom_call.1} parent=5 // pred_region
        %s365 = ssub.s32 %s25, 1
        %s366 = sand.u32 %s38, 1
        %s367 = scalar_lea.sflag [#allocation3], %s366
        %s368 = sand.u32 %s38, 1
        %s369 = smul.addr %s368, 16
        %s370 = scalar_lea.vmem [#allocation2], %s369
        // Predicated region
        $region53: #{tpu_custom_call.1} parent=51 // pred_check
          %p371 = pneg %p51
        $region54: #{tpu_custom_call.1} parent=51 // pred_check_branch
          %373 = sbr.rel (%p371) target = $region56
        $region55: #{tpu_custom_call.1} parent=51 // pred_region
          %375 = dma.done %s367, 256
        $region56: #{tpu_custom_call.1} parent=51 // pred_fallthru
          _
        %s376 = sand.u32 %s30, 1
        %s377 = scalar_lea.sflag [#allocation6], %s376
        %s378 = sand.u32 %s64, 1
        %s379 = smul.addr %s378, 16
        %s380 = scalar_lea.vmem [#allocation5], %s379
        // Predicated region
        $region57: #{tpu_custom_call.1} parent=51 // pred_check
          %p381 = pneg %p77
        $region58: #{tpu_custom_call.1} parent=51 // pred_check_branch
          %383 = sbr.rel (%p381) target = $region60
        $region59: #{tpu_custom_call.1} parent=51 // pred_region
          %385 = dma.done %s377, 256
        $region60: #{tpu_custom_call.1} parent=51 // pred_fallthru
          _
        // Predicated region
        $region61: #{tpu_custom_call.1} parent=51 // pred_check
          %p386 = pneg %p98
        $region62: #{tpu_custom_call.1} parent=51 // pred_check_branch
          %388 = sbr.rel (%p386) target = $region64
        $region63: #{tpu_custom_call.1} parent=51 // pred_region
          %390 = dma.done [#allocation6], 16384
        $region64: #{tpu_custom_call.1} parent=51 // pred_fallthru
          _
        // Predicated region
        $region65: #{tpu_custom_call.1} parent=51 // pred_check
          %p391 = pneg %p119
        $region66: #{tpu_custom_call.1} parent=51 // pred_check_branch
          %393 = sbr.rel (%p391) target = $region68
        $region67: #{tpu_custom_call.1} parent=51 // pred_region
          %395 = dma.done [#allocation9], 16384
        $region68: #{tpu_custom_call.1} parent=51 // pred_fallthru
          _
        // Predicated region
        $region69: #{tpu_custom_call.1} parent=51 // pred_check
          %p396 = pneg %p140
        $region70: #{tpu_custom_call.1} parent=51 // pred_check_branch
          %398 = sbr.rel (%p396) target = $region72
        $region71: #{tpu_custom_call.1} parent=51 // pred_region
          %400 = dma.done [#allocation9], 64
        $region72: #{tpu_custom_call.1} parent=51 // pred_fallthru
          _
        // Predicated region
        $region73: #{tpu_custom_call.1} parent=51 // pred_check
          %p401 = pneg %p161
        $region74: #{tpu_custom_call.1} parent=51 // pred_check_branch
          %403 = sbr.rel (%p401) target = $region76
        $region75: #{tpu_custom_call.1} parent=51 // pred_region
          %405 = dma.done [#allocation12], 16384
        $region76: #{tpu_custom_call.1} parent=51 // pred_fallthru
          _
        // Predicated region
        $region77: #{tpu_custom_call.1} parent=51 // pred_check
          %p406 = pneg %p182
        $region78: #{tpu_custom_call.1} parent=51 // pred_check_branch
          %408 = sbr.rel (%p406) target = $region80
        $region79: #{tpu_custom_call.1} parent=51 // pred_region
          %410 = dma.done [#allocation12], 8192
        $region80: #{tpu_custom_call.1} parent=51 // pred_fallthru
          _
        %s411 = sand.u32 %s38, 1
        %s412 = scalar_lea.sflag [#allocation3], %s411
        %s413 = sand.u32 %s38, 1
        %s414 = smul.addr %s413, 16
        %s415 = scalar_lea.vmem [#allocation2], %s414
        %p416 = pneg %p51
        %p417 = pneg %p48
        %s418 = sand.u32 %s30, 1
        %s419 = scalar_lea.sflag [#allocation6], %s418
        %s420 = sand.u32 %s64, 1
        %s421 = smul.addr %s420, 16
        %s422 = scalar_lea.vmem [#allocation5], %s421
        %p423 = pneg %p77
        %p424 = pneg %p74
        %p425 = pneg %p98
        %p426 = pneg %p95
        %p427 = pneg %p119
        %p428 = pneg %p116
        %p429 = pneg %p140
        %p430 = pneg %p137
        %p431 = pneg %p161
        %p432 = pneg %p158
        %p433 = pneg %p182
        %p434 = pneg %p179
        %p435 = pneg %p203
        %p436 = pneg %p200
        %p437 = pneg %p229
        %p438 = pneg %p226
        %s439 = sand.u32 %s216, 1
        %s440 = scalar_lea.sflag [#allocation4], %s439
        %s441 = sand.u32 %s216, 1
        %s442 = smul.addr %s441, 16
        %s443 = scalar_lea.vmem [#allocation14], %s442
        %v444 = vld [vmem:[%s380] sm:$0xff]
        %v445 = vld [vmem:[%s380 + $0x8] sm:$0xff]
        %v446 = vld [vmem:[%s370] sm:$0xff]
        %v447 = vld [vmem:[%s370 + $0x8] sm:$0xff]
        %v448 = vld [vmem:[#allocation7] sm:$0xff]
        %v449 = vld [vmem:[#allocation7 + $0x8] sm:$0xff]
        %v450 = vld [vmem:[#allocation7 + $0x10] sm:$0xff]
        %v451 = vld [vmem:[#allocation7 + $0x18] sm:$0xff]
        %v452 = vld [vmem:[#allocation7 + $0x20] sm:$0xff]
        %v453 = vld [vmem:[#allocation7 + $0x28] sm:$0xff]
        %v454 = vld [vmem:[#allocation7 + $0x30] sm:$0xff]
        %v455 = vld [vmem:[#allocation7 + $0x38] sm:$0xff]
        %v456 = vld [vmem:[#allocation7 + $0x40] sm:$0xff]
        %v457 = vld [vmem:[#allocation7 + $0x48] sm:$0xff]
        %v458 = vld [vmem:[#allocation7 + $0x50] sm:$0xff]
        %v459 = vld [vmem:[#allocation7 + $0x58] sm:$0xff]
        %v460 = vld [vmem:[#allocation7 + $0x60] sm:$0xff]
        %v461 = vld [vmem:[#allocation7 + $0x68] sm:$0xff]
        %v462 = vld [vmem:[#allocation7 + $0x70] sm:$0xff]
        %v463 = vld [vmem:[#allocation7 + $0x78] sm:$0xff]
        %v464 = vld [vmem:[#allocation7 + $0x80] sm:$0xff]
        %v465 = vld [vmem:[#allocation7 + $0x88] sm:$0xff]
        %v466 = vld [vmem:[#allocation7 + $0x90] sm:$0xff]
        %v467 = vld [vmem:[#allocation7 + $0x98] sm:$0xff]
        %v468 = vld [vmem:[#allocation7 + $0xa0] sm:$0xff]
        %v469 = vld [vmem:[#allocation7 + $0xa8] sm:$0xff]
        %v470 = vld [vmem:[#allocation7 + $0xb0] sm:$0xff]
        %v471 = vld [vmem:[#allocation7 + $0xb8] sm:$0xff]
        %v472 = vld [vmem:[#allocation7 + $0xc0] sm:$0xff]
        %v473 = vld [vmem:[#allocation7 + $0xc8] sm:$0xff]
        %v474 = vld [vmem:[#allocation7 + $0xd0] sm:$0xff]
        %v475 = vld [vmem:[#allocation7 + $0xd8] sm:$0xff]
        %v476 = vld [vmem:[#allocation7 + $0xe0] sm:$0xff]
        %v477 = vld [vmem:[#allocation7 + $0xe8] sm:$0xff]
        %v478 = vld [vmem:[#allocation7 + $0xf0] sm:$0xff]
        %v479 = vld [vmem:[#allocation7 + $0xf8] sm:$0xff]
        %v480 = vld [vmem:[#allocation7 + $0x100] sm:$0xff]
        %v481 = vld [vmem:[#allocation7 + $0x108] sm:$0xff]
        %v482 = vld [vmem:[#allocation7 + $0x110] sm:$0xff]
        %v483 = vld [vmem:[#allocation7 + $0x118] sm:$0xff]
        %v484 = vld [vmem:[#allocation7 + $0x120] sm:$0xff]
        %v485 = vld [vmem:[#allocation7 + $0x128] sm:$0xff]
        %v486 = vld [vmem:[#allocation7 + $0x130] sm:$0xff]
        %v487 = vld [vmem:[#allocation7 + $0x138] sm:$0xff]
        %v488 = vld [vmem:[#allocation7 + $0x140] sm:$0xff]
        %v489 = vld [vmem:[#allocation7 + $0x148] sm:$0xff]
        %v490 = vld [vmem:[#allocation7 + $0x150] sm:$0xff]
        %v491 = vld [vmem:[#allocation7 + $0x158] sm:$0xff]
        %v492 = vld [vmem:[#allocation7 + $0x160] sm:$0xff]
        %v493 = vld [vmem:[#allocation7 + $0x168] sm:$0xff]
        %v494 = vld [vmem:[#allocation7 + $0x170] sm:$0xff]
        %v495 = vld [vmem:[#allocation7 + $0x178] sm:$0xff]
        %v496 = vld [vmem:[#allocation7 + $0x180] sm:$0xff]
        %v497 = vld [vmem:[#allocation7 + $0x188] sm:$0xff]
        %v498 = vld [vmem:[#allocation7 + $0x190] sm:$0xff]
        %v499 = vld [vmem:[#allocation7 + $0x198] sm:$0xff]
        %v500 = vld [vmem:[#allocation7 + $0x1a0] sm:$0xff]
        %v501 = vld [vmem:[#allocation7 + $0x1a8] sm:$0xff]
        %v502 = vld [vmem:[#allocation7 + $0x1b0] sm:$0xff]
        %v503 = vld [vmem:[#allocation7 + $0x1b8] sm:$0xff]
        %v504 = vld [vmem:[#allocation7 + $0x1c0] sm:$0xff]
        %v505 = vld [vmem:[#allocation7 + $0x1c8] sm:$0xff]
        %v506 = vld [vmem:[#allocation7 + $0x1d0] sm:$0xff]
        %v507 = vld [vmem:[#allocation7 + $0x1d8] sm:$0xff]
        %v508 = vld [vmem:[#allocation7 + $0x1e0] sm:$0xff]
        %v509 = vld [vmem:[#allocation7 + $0x1e8] sm:$0xff]
        %v510 = vld [vmem:[#allocation7 + $0x1f0] sm:$0xff]
        %v511 = vld [vmem:[#allocation7 + $0x1f8] sm:$0xff]
        %v512 = vld [vmem:[#allocation7 + $0x200] sm:$0xff]
        %v513 = vld [vmem:[#allocation7 + $0x208] sm:$0xff]
        %v514 = vld [vmem:[#allocation7 + $0x210] sm:$0xff]
        %v515 = vld [vmem:[#allocation7 + $0x218] sm:$0xff]
        %v516 = vld [vmem:[#allocation7 + $0x220] sm:$0xff]
        %v517 = vld [vmem:[#allocation7 + $0x228] sm:$0xff]
        %v518 = vld [vmem:[#allocation7 + $0x230] sm:$0xff]
        %v519 = vld [vmem:[#allocation7 + $0x238] sm:$0xff]
        %v520 = vld [vmem:[#allocation7 + $0x240] sm:$0xff]
        %v521 = vld [vmem:[#allocation7 + $0x248] sm:$0xff]
        %v522 = vld [vmem:[#allocation7 + $0x250] sm:$0xff]
        %v523 = vld [vmem:[#allocation7 + $0x258] sm:$0xff]
        %v524 = vld [vmem:[#allocation7 + $0x260] sm:$0xff]
        %v525 = vld [vmem:[#allocation7 + $0x268] sm:$0xff]
        %v526 = vld [vmem:[#allocation7 + $0x270] sm:$0xff]
        %v527 = vld [vmem:[#allocation7 + $0x278] sm:$0xff]
        %v528 = vld [vmem:[#allocation7 + $0x280] sm:$0xff]
        %v529 = vld [vmem:[#allocation7 + $0x288] sm:$0xff]
        %v530 = vld [vmem:[#allocation7 + $0x290] sm:$0xff]
        %v531 = vld [vmem:[#allocation7 + $0x298] sm:$0xff]
        %v532 = vld [vmem:[#allocation7 + $0x2a0] sm:$0xff]
        %v533 = vld [vmem:[#allocation7 + $0x2a8] sm:$0xff]
        %v534 = vld [vmem:[#allocation7 + $0x2b0] sm:$0xff]
        %v535 = vld [vmem:[#allocation7 + $0x2b8] sm:$0xff]
        %v536 = vld [vmem:[#allocation7 + $0x2c0] sm:$0xff]
        %v537 = vld [vmem:[#allocation7 + $0x2c8] sm:$0xff]
        %v538 = vld [vmem:[#allocation7 + $0x2d0] sm:$0xff]
        %v539 = vld [vmem:[#allocation7 + $0x2d8] sm:$0xff]
        %v540 = vld [vmem:[#allocation7 + $0x2e0] sm:$0xff]
        %v541 = vld [vmem:[#allocation7 + $0x2e8] sm:$0xff]
        %v542 = vld [vmem:[#allocation7 + $0x2f0] sm:$0xff]
        %v543 = vld [vmem:[#allocation7 + $0x2f8] sm:$0xff]
        %v544 = vld [vmem:[#allocation7 + $0x300] sm:$0xff]
        %v545 = vld [vmem:[#allocation7 + $0x308] sm:$0xff]
        %v546 = vld [vmem:[#allocation7 + $0x310] sm:$0xff]
        %v547 = vld [vmem:[#allocation7 + $0x318] sm:$0xff]
        %v548 = vld [vmem:[#allocation7 + $0x320] sm:$0xff]
        %v549 = vld [vmem:[#allocation7 + $0x328] sm:$0xff]
        %v550 = vld [vmem:[#allocation7 + $0x330] sm:$0xff]
        %v551 = vld [vmem:[#allocation7 + $0x338] sm:$0xff]
        %v552 = vld [vmem:[#allocation7 + $0x340] sm:$0xff]
        %v553 = vld [vmem:[#allocation7 + $0x348] sm:$0xff]
        %v554 = vld [vmem:[#allocation7 + $0x350] sm:$0xff]
        %v555 = vld [vmem:[#allocation7 + $0x358] sm:$0xff]
        %v556 = vld [vmem:[#allocation7 + $0x360] sm:$0xff]
        %v557 = vld [vmem:[#allocation7 + $0x368] sm:$0xff]
        %v558 = vld [vmem:[#allocation7 + $0x370] sm:$0xff]
        %v559 = vld [vmem:[#allocation7 + $0x378] sm:$0xff]
        %v560 = vld [vmem:[#allocation7 + $0x380] sm:$0xff]
        %v561 = vld [vmem:[#allocation7 + $0x388] sm:$0xff]
        %v562 = vld [vmem:[#allocation7 + $0x390] sm:$0xff]
        %v563 = vld [vmem:[#allocation7 + $0x398] sm:$0xff]
        %v564 = vld [vmem:[#allocation7 + $0x3a0] sm:$0xff]
        %v565 = vld [vmem:[#allocation7 + $0x3a8] sm:$0xff]
        %v566 = vld [vmem:[#allocation7 + $0x3b0] sm:$0xff]
        %v567 = vld [vmem:[#allocation7 + $0x3b8] sm:$0xff]
        %v568 = vld [vmem:[#allocation7 + $0x3c0] sm:$0xff]
        %v569 = vld [vmem:[#allocation7 + $0x3c8] sm:$0xff]
        %v570 = vld [vmem:[#allocation7 + $0x3d0] sm:$0xff]
        %v571 = vld [vmem:[#allocation7 + $0x3d8] sm:$0xff]
        %v572 = vld [vmem:[#allocation7 + $0x3e0] sm:$0xff]
        %v573 = vld [vmem:[#allocation7 + $0x3e8] sm:$0xff]
        %v574 = vld [vmem:[#allocation7 + $0x3f0] sm:$0xff]
        %v575 = vld [vmem:[#allocation7 + $0x3f8] sm:$0xff]
        %v576 = vld [vmem:[#allocation8] sm:$0xff]
        %v577 = vld [vmem:[#allocation8 + $0x8] sm:$0xff]
        %v578 = vld [vmem:[#allocation8 + $0x10] sm:$0xff]
        %v579 = vld [vmem:[#allocation8 + $0x18] sm:$0xff]
        %v580 = vld [vmem:[#allocation8 + $0x20] sm:$0xff]
        %v581 = vld [vmem:[#allocation8 + $0x28] sm:$0xff]
        %v582 = vld [vmem:[#allocation8 + $0x30] sm:$0xff]
        %v583 = vld [vmem:[#allocation8 + $0x38] sm:$0xff]
        %v584 = vld [vmem:[#allocation8 + $0x40] sm:$0xff]
        %v585 = vld [vmem:[#allocation8 + $0x48] sm:$0xff]
        %v586 = vld [vmem:[#allocation8 + $0x50] sm:$0xff]
        %v587 = vld [vmem:[#allocation8 + $0x58] sm:$0xff]
        %v588 = vld [vmem:[#allocation8 + $0x60] sm:$0xff]
        %v589 = vld [vmem:[#allocation8 + $0x68] sm:$0xff]
        %v590 = vld [vmem:[#allocation8 + $0x70] sm:$0xff]
        %v591 = vld [vmem:[#allocation8 + $0x78] sm:$0xff]
        %v592 = vld [vmem:[#allocation8 + $0x80] sm:$0xff]
        %v593 = vld [vmem:[#allocation8 + $0x88] sm:$0xff]
        %v594 = vld [vmem:[#allocation8 + $0x90] sm:$0xff]
        %v595 = vld [vmem:[#allocation8 + $0x98] sm:$0xff]
        %v596 = vld [vmem:[#allocation8 + $0xa0] sm:$0xff]
        %v597 = vld [vmem:[#allocation8 + $0xa8] sm:$0xff]
        %v598 = vld [vmem:[#allocation8 + $0xb0] sm:$0xff]
        %v599 = vld [vmem:[#allocation8 + $0xb8] sm:$0xff]
        %v600 = vld [vmem:[#allocation8 + $0xc0] sm:$0xff]
        %v601 = vld [vmem:[#allocation8 + $0xc8] sm:$0xff]
        %v602 = vld [vmem:[#allocation8 + $0xd0] sm:$0xff]
        %v603 = vld [vmem:[#allocation8 + $0xd8] sm:$0xff]
        %v604 = vld [vmem:[#allocation8 + $0xe0] sm:$0xff]
        %v605 = vld [vmem:[#allocation8 + $0xe8] sm:$0xff]
        %v606 = vld [vmem:[#allocation8 + $0xf0] sm:$0xff]
        %v607 = vld [vmem:[#allocation8 + $0xf8] sm:$0xff]
        %v608 = vld [vmem:[#allocation8 + $0x100] sm:$0xff]
        %v609 = vld [vmem:[#allocation8 + $0x108] sm:$0xff]
        %v610 = vld [vmem:[#allocation8 + $0x110] sm:$0xff]
        %v611 = vld [vmem:[#allocation8 + $0x118] sm:$0xff]
        %v612 = vld [vmem:[#allocation8 + $0x120] sm:$0xff]
        %v613 = vld [vmem:[#allocation8 + $0x128] sm:$0xff]
        %v614 = vld [vmem:[#allocation8 + $0x130] sm:$0xff]
        %v615 = vld [vmem:[#allocation8 + $0x138] sm:$0xff]
        %v616 = vld [vmem:[#allocation8 + $0x140] sm:$0xff]
        %v617 = vld [vmem:[#allocation8 + $0x148] sm:$0xff]
        %v618 = vld [vmem:[#allocation8 + $0x150] sm:$0xff]
        %v619 = vld [vmem:[#allocation8 + $0x158] sm:$0xff]
        %v620 = vld [vmem:[#allocation8 + $0x160] sm:$0xff]
        %v621 = vld [vmem:[#allocation8 + $0x168] sm:$0xff]
        %v622 = vld [vmem:[#allocation8 + $0x170] sm:$0xff]
        %v623 = vld [vmem:[#allocation8 + $0x178] sm:$0xff]
        %v624 = vld [vmem:[#allocation8 + $0x180] sm:$0xff]
        %v625 = vld [vmem:[#allocation8 + $0x188] sm:$0xff]
        %v626 = vld [vmem:[#allocation8 + $0x190] sm:$0xff]
        %v627 = vld [vmem:[#allocation8 + $0x198] sm:$0xff]
        %v628 = vld [vmem:[#allocation8 + $0x1a0] sm:$0xff]
        %v629 = vld [vmem:[#allocation8 + $0x1a8] sm:$0xff]
        %v630 = vld [vmem:[#allocation8 + $0x1b0] sm:$0xff]
        %v631 = vld [vmem:[#allocation8 + $0x1b8] sm:$0xff]
        %v632 = vld [vmem:[#allocation8 + $0x1c0] sm:$0xff]
        %v633 = vld [vmem:[#allocation8 + $0x1c8] sm:$0xff]
        %v634 = vld [vmem:[#allocation8 + $0x1d0] sm:$0xff]
        %v635 = vld [vmem:[#allocation8 + $0x1d8] sm:$0xff]
        %v636 = vld [vmem:[#allocation8 + $0x1e0] sm:$0xff]
        %v637 = vld [vmem:[#allocation8 + $0x1e8] sm:$0xff]
        %v638 = vld [vmem:[#allocation8 + $0x1f0] sm:$0xff]
        %v639 = vld [vmem:[#allocation8 + $0x1f8] sm:$0xff]
        %v640 = vld [vmem:[#allocation8 + $0x200] sm:$0xff]
        %v641 = vld [vmem:[#allocation8 + $0x208] sm:$0xff]
        %v642 = vld [vmem:[#allocation8 + $0x210] sm:$0xff]
        %v643 = vld [vmem:[#allocation8 + $0x218] sm:$0xff]
        %v644 = vld [vmem:[#allocation8 + $0x220] sm:$0xff]
        %v645 = vld [vmem:[#allocation8 + $0x228] sm:$0xff]
        %v646 = vld [vmem:[#allocation8 + $0x230] sm:$0xff]
        %v647 = vld [vmem:[#allocation8 + $0x238] sm:$0xff]
        %v648 = vld [vmem:[#allocation8 + $0x240] sm:$0xff]
        %v649 = vld [vmem:[#allocation8 + $0x248] sm:$0xff]
        %v650 = vld [vmem:[#allocation8 + $0x250] sm:$0xff]
        %v651 = vld [vmem:[#allocation8 + $0x258] sm:$0xff]
        %v652 = vld [vmem:[#allocation8 + $0x260] sm:$0xff]
        %v653 = vld [vmem:[#allocation8 + $0x268] sm:$0xff]
        %v654 = vld [vmem:[#allocation8 + $0x270] sm:$0xff]
        %v655 = vld [vmem:[#allocation8 + $0x278] sm:$0xff]
        %v656 = vld [vmem:[#allocation8 + $0x280] sm:$0xff]
        %v657 = vld [vmem:[#allocation8 + $0x288] sm:$0xff]
        %v658 = vld [vmem:[#allocation8 + $0x290] sm:$0xff]
        %v659 = vld [vmem:[#allocation8 + $0x298] sm:$0xff]
        %v660 = vld [vmem:[#allocation8 + $0x2a0] sm:$0xff]
        %v661 = vld [vmem:[#allocation8 + $0x2a8] sm:$0xff]
        %v662 = vld [vmem:[#allocation8 + $0x2b0] sm:$0xff]
        %v663 = vld [vmem:[#allocation8 + $0x2b8] sm:$0xff]
        %v664 = vld [vmem:[#allocation8 + $0x2c0] sm:$0xff]
        %v665 = vld [vmem:[#allocation8 + $0x2c8] sm:$0xff]
        %v666 = vld [vmem:[#allocation8 + $0x2d0] sm:$0xff]
        %v667 = vld [vmem:[#allocation8 + $0x2d8] sm:$0xff]
        %v668 = vld [vmem:[#allocation8 + $0x2e0] sm:$0xff]
        %v669 = vld [vmem:[#allocation8 + $0x2e8] sm:$0xff]
        %v670 = vld [vmem:[#allocation8 + $0x2f0] sm:$0xff]
        %v671 = vld [vmem:[#allocation8 + $0x2f8] sm:$0xff]
        %v672 = vld [vmem:[#allocation8 + $0x300] sm:$0xff]
        %v673 = vld [vmem:[#allocation8 + $0x308] sm:$0xff]
        %v674 = vld [vmem:[#allocation8 + $0x310] sm:$0xff]
        %v675 = vld [vmem:[#allocation8 + $0x318] sm:$0xff]
        %v676 = vld [vmem:[#allocation8 + $0x320] sm:$0xff]
        %v677 = vld [vmem:[#allocation8 + $0x328] sm:$0xff]
        %v678 = vld [vmem:[#allocation8 + $0x330] sm:$0xff]
        %v679 = vld [vmem:[#allocation8 + $0x338] sm:$0xff]
        %v680 = vld [vmem:[#allocation8 + $0x340] sm:$0xff]
        %v681 = vld [vmem:[#allocation8 + $0x348] sm:$0xff]
        %v682 = vld [vmem:[#allocation8 + $0x350] sm:$0xff]
        %v683 = vld [vmem:[#allocation8 + $0x358] sm:$0xff]
        %v684 = vld [vmem:[#allocation8 + $0x360] sm:$0xff]
        %v685 = vld [vmem:[#allocation8 + $0x368] sm:$0xff]
        %v686 = vld [vmem:[#allocation8 + $0x370] sm:$0xff]
        %v687 = vld [vmem:[#allocation8 + $0x378] sm:$0xff]
        %v688 = vld [vmem:[#allocation8 + $0x380] sm:$0xff]
        %v689 = vld [vmem:[#allocation8 + $0x388] sm:$0xff]
        %v690 = vld [vmem:[#allocation8 + $0x390] sm:$0xff]
        %v691 = vld [vmem:[#allocation8 + $0x398] sm:$0xff]
        %v692 = vld [vmem:[#allocation8 + $0x3a0] sm:$0xff]
        %v693 = vld [vmem:[#allocation8 + $0x3a8] sm:$0xff]
        %v694 = vld [vmem:[#allocation8 + $0x3b0] sm:$0xff]
        %v695 = vld [vmem:[#allocation8 + $0x3b8] sm:$0xff]
        %v696 = vld [vmem:[#allocation8 + $0x3c0] sm:$0xff]
        %v697 = vld [vmem:[#allocation8 + $0x3c8] sm:$0xff]
        %v698 = vld [vmem:[#allocation8 + $0x3d0] sm:$0xff]
        %v699 = vld [vmem:[#allocation8 + $0x3d8] sm:$0xff]
        %v700 = vld [vmem:[#allocation8 + $0x3e0] sm:$0xff]
        %v701 = vld [vmem:[#allocation8 + $0x3e8] sm:$0xff]
        %v702 = vld [vmem:[#allocation8 + $0x3f0] sm:$0xff]
        %v703 = vld [vmem:[#allocation8 + $0x3f8] sm:$0xff]
        %704 = vmatpush.msra.mxu0 %v636
        %705 = vmatpush.msra.mxu0 %v632
        %706 = vmatpush.msra.mxu0 %v628
        %707 = vmatpush.msra.mxu0 %v624
        %708 = vmatpush.msra.mxu0 %v620
        %709 = vmatpush.msra.mxu0 %v616
        %710 = vmatpush.msra.mxu0 %v612
        %711 = vmatpush.msra.mxu0 %v608
        %712 = vmatpush.msra.mxu0 %v604
        %713 = vmatpush.msra.mxu0 %v600
        %714 = vmatpush.msra.mxu0 %v596
        %715 = vmatpush.msra.mxu0 %v592
        %716 = vmatpush.msra.mxu0 %v588
        %717 = vmatpush.msra.mxu0 %v584
        %718 = vmatpush.msra.mxu0 %v580
        %719 = vmatpush.msra.mxu0 %v576
        %720 = vmatmul.f32.gmra.mxu0 %v444
        %v721 = vpop.f32.mrf.mxu0
        %v722 = vadd.f32 0.0, %v721
        %723 = vdwg.mxu0
        %724 = vmatpush.msra.mxu0 %v700
        %725 = vmatpush.msra.mxu0 %v696
        %726 = vmatpush.msra.mxu0 %v692
        %727 = vmatpush.msra.mxu0 %v688
        %728 = vmatpush.msra.mxu0 %v684
        %729 = vmatpush.msra.mxu0 %v680
        %730 = vmatpush.msra.mxu0 %v676
        %731 = vmatpush.msra.mxu0 %v672
        %732 = vmatpush.msra.mxu0 %v668
        %733 = vmatpush.msra.mxu0 %v664
        %734 = vmatpush.msra.mxu0 %v660
        %735 = vmatpush.msra.mxu0 %v656
        %736 = vmatpush.msra.mxu0 %v652
        %737 = vmatpush.msra.mxu0 %v648
        %738 = vmatpush.msra.mxu0 %v644
        %739 = vmatpush.msra.mxu0 %v640
        %740 = vmatmul.f32.gmra.mxu0 %v445
        %v741 = vpop.f32.mrf.mxu0
        %v742 = vadd.f32 %v722, %v741
        %743 = vdwg.mxu0
        %744 = vmatpush.msra.mxu0 %v637
        %745 = vmatpush.msra.mxu0 %v633
        %746 = vmatpush.msra.mxu0 %v629
        %747 = vmatpush.msra.mxu0 %v625
        %748 = vmatpush.msra.mxu0 %v621
        %749 = vmatpush.msra.mxu0 %v617
        %750 = vmatpush.msra.mxu0 %v613
        %751 = vmatpush.msra.mxu0 %v609
        %752 = vmatpush.msra.mxu0 %v605
        %753 = vmatpush.msra.mxu0 %v601
        %754 = vmatpush.msra.mxu0 %v597
        %755 = vmatpush.msra.mxu0 %v593
        %756 = vmatpush.msra.mxu0 %v589
        %757 = vmatpush.msra.mxu0 %v585
        %758 = vmatpush.msra.mxu0 %v581
        %759 = vmatpush.msra.mxu0 %v577
        %760 = vmatmul.f32.gmra.mxu0 %v444
        %v761 = vpop.f32.mrf.mxu0
        %v762 = vadd.f32 0.0, %v761
        %763 = vdwg.mxu0
        %764 = vmatpush.msra.mxu0 %v701
        %765 = vmatpush.msra.mxu0 %v697
        %766 = vmatpush.msra.mxu0 %v693
        %767 = vmatpush.msra.mxu0 %v689
        %768 = vmatpush.msra.mxu0 %v685
        %769 = vmatpush.msra.mxu0 %v681
        %770 = vmatpush.msra.mxu0 %v677
        %771 = vmatpush.msra.mxu0 %v673
        %772 = vmatpush.msra.mxu0 %v669
        %773 = vmatpush.msra.mxu0 %v665
        %774 = vmatpush.msra.mxu0 %v661
        %775 = vmatpush.msra.mxu0 %v657
        %776 = vmatpush.msra.mxu0 %v653
        %777 = vmatpush.msra.mxu0 %v649
        %778 = vmatpush.msra.mxu0 %v645
        %779 = vmatpush.msra.mxu0 %v641
        %780 = vmatmul.f32.gmra.mxu0 %v445
        %v781 = vpop.f32.mrf.mxu0
        %v782 = vadd.f32 %v762, %v781
        %783 = vdwg.mxu0
        %784 = vmatpush.msra.mxu0 %v638
        %785 = vmatpush.msra.mxu0 %v634
        %786 = vmatpush.msra.mxu0 %v630
        %787 = vmatpush.msra.mxu0 %v626
        %788 = vmatpush.msra.mxu0 %v622
        %789 = vmatpush.msra.mxu0 %v618
        %790 = vmatpush.msra.mxu0 %v614
        %791 = vmatpush.msra.mxu0 %v610
        %792 = vmatpush.msra.mxu0 %v606
        %793 = vmatpush.msra.mxu0 %v602
        %794 = vmatpush.msra.mxu0 %v598
        %795 = vmatpush.msra.mxu0 %v594
        %796 = vmatpush.msra.mxu0 %v590
        %797 = vmatpush.msra.mxu0 %v586
        %798 = vmatpush.msra.mxu0 %v582
        %799 = vmatpush.msra.mxu0 %v578
        %800 = vmatmul.f32.gmra.mxu0 %v444
        %v801 = vpop.f32.mrf.mxu0
        %v802 = vadd.f32 0.0, %v801
        %803 = vdwg.mxu0
        %804 = vmatpush.msra.mxu0 %v702
        %805 = vmatpush.msra.mxu0 %v698
        %806 = vmatpush.msra.mxu0 %v694
        %807 = vmatpush.msra.mxu0 %v690
        %808 = vmatpush.msra.mxu0 %v686
        %809 = vmatpush.msra.mxu0 %v682
        %810 = vmatpush.msra.mxu0 %v678
        %811 = vmatpush.msra.mxu0 %v674
        %812 = vmatpush.msra.mxu0 %v670
        %813 = vmatpush.msra.mxu0 %v666
        %814 = vmatpush.msra.mxu0 %v662
        %815 = vmatpush.msra.mxu0 %v658
        %816 = vmatpush.msra.mxu0 %v654
        %817 = vmatpush.msra.mxu0 %v650
        %818 = vmatpush.msra.mxu0 %v646
        %819 = vmatpush.msra.mxu0 %v642
        %820 = vmatmul.f32.gmra.mxu0 %v445
        %v821 = vpop.f32.mrf.mxu0
        %v822 = vadd.f32 %v802, %v821
        %823 = vdwg.mxu0
        %824 = vmatpush.msra.mxu0 %v639
        %825 = vmatpush.msra.mxu0 %v635
        %826 = vmatpush.msra.mxu0 %v631
        %827 = vmatpush.msra.mxu0 %v627
        %828 = vmatpush.msra.mxu0 %v623
        %829 = vmatpush.msra.mxu0 %v619
        %830 = vmatpush.msra.mxu0 %v615
        %831 = vmatpush.msra.mxu0 %v611
        %832 = vmatpush.msra.mxu0 %v607
        %833 = vmatpush.msra.mxu0 %v603
        %834 = vmatpush.msra.mxu0 %v599
        %835 = vmatpush.msra.mxu0 %v595
        %836 = vmatpush.msra.mxu0 %v591
        %837 = vmatpush.msra.mxu0 %v587
        %838 = vmatpush.msra.mxu0 %v583
        %839 = vmatpush.msra.mxu0 %v579
        %840 = vmatmul.f32.gmra.mxu0 %v444
        %v841 = vpop.f32.mrf.mxu0
        %v842 = vadd.f32 0.0, %v841
        %843 = vdwg.mxu0
        %844 = vmatpush.msra.mxu0 %v703
        %845 = vmatpush.msra.mxu0 %v699
        %846 = vmatpush.msra.mxu0 %v695
        %847 = vmatpush.msra.mxu0 %v691
        %848 = vmatpush.msra.mxu0 %v687
        %849 = vmatpush.msra.mxu0 %v683
        %850 = vmatpush.msra.mxu0 %v679
        %851 = vmatpush.msra.mxu0 %v675
        %852 = vmatpush.msra.mxu0 %v671
        %853 = vmatpush.msra.mxu0 %v667
        %854 = vmatpush.msra.mxu0 %v663
        %855 = vmatpush.msra.mxu0 %v659
        %856 = vmatpush.msra.mxu0 %v655
        %857 = vmatpush.msra.mxu0 %v651
        %858 = vmatpush.msra.mxu0 %v647
        %859 = vmatpush.msra.mxu0 %v643
        %860 = vmatmul.f32.gmra.mxu0 %v445
        %v861 = vpop.f32.mrf.mxu0
        %v862 = vadd.f32 %v842, %v861
        %863 = vdwg.mxu0
        %864 = vmatpush.msra.mxu0 %v508
        %865 = vmatpush.msra.mxu0 %v504
        %866 = vmatpush.msra.mxu0 %v500
        %867 = vmatpush.msra.mxu0 %v496
        %868 = vmatpush.msra.mxu0 %v492
        %869 = vmatpush.msra.mxu0 %v488
        %870 = vmatpush.msra.mxu0 %v484
        %871 = vmatpush.msra.mxu0 %v480
        %872 = vmatpush.msra.mxu0 %v476
        %873 = vmatpush.msra.mxu0 %v472
        %874 = vmatpush.msra.mxu0 %v468
        %875 = vmatpush.msra.mxu0 %v464
        %876 = vmatpush.msra.mxu0 %v460
        %877 = vmatpush.msra.mxu0 %v456
        %878 = vmatpush.msra.mxu0 %v452
        %879 = vmatpush.msra.mxu0 %v448
        %880 = vmatmul.f32.gmra.mxu0 %v446
        %v881 = vpop.f32.mrf.mxu0
        %v882 = vadd.f32 %v742, %v881
        %883 = vdwg.mxu0
        %884 = vmatpush.msra.mxu0 %v572
        %885 = vmatpush.msra.mxu0 %v568
        %886 = vmatpush.msra.mxu0 %v564
        %887 = vmatpush.msra.mxu0 %v560
        %888 = vmatpush.msra.mxu0 %v556
        %889 = vmatpush.msra.mxu0 %v552
        %890 = vmatpush.msra.mxu0 %v548
        %891 = vmatpush.msra.mxu0 %v544
        %892 = vmatpush.msra.mxu0 %v540
        %893 = vmatpush.msra.mxu0 %v536
        %894 = vmatpush.msra.mxu0 %v532
        %895 = vmatpush.msra.mxu0 %v528
        %896 = vmatpush.msra.mxu0 %v524
        %897 = vmatpush.msra.mxu0 %v520
        %898 = vmatpush.msra.mxu0 %v516
        %899 = vmatpush.msra.mxu0 %v512
        %900 = vmatmul.f32.gmra.mxu0 %v447
        %v901 = vpop.f32.mrf.mxu0
        %v902 = vadd.f32 %v882, %v901
        %903 = vdwg.mxu0
        %904 = vmatpush.msra.mxu0 %v509
        %905 = vmatpush.msra.mxu0 %v505
        %906 = vmatpush.msra.mxu0 %v501
        %907 = vmatpush.msra.mxu0 %v497
        %908 = vmatpush.msra.mxu0 %v493
        %909 = vmatpush.msra.mxu0 %v489
        %910 = vmatpush.msra.mxu0 %v485
        %911 = vmatpush.msra.mxu0 %v481
        %912 = vmatpush.msra.mxu0 %v477
        %913 = vmatpush.msra.mxu0 %v473
        %914 = vmatpush.msra.mxu0 %v469
        %915 = vmatpush.msra.mxu0 %v465
        %916 = vmatpush.msra.mxu0 %v461
        %917 = vmatpush.msra.mxu0 %v457
        %918 = vmatpush.msra.mxu0 %v453
        %919 = vmatpush.msra.mxu0 %v449
        %920 = vmatmul.f32.gmra.mxu0 %v446
        %v921 = vpop.f32.mrf.mxu0
        %v922 = vadd.f32 %v782, %v921
        %923 = vdwg.mxu0
        %924 = vmatpush.msra.mxu0 %v573
        %925 = vmatpush.msra.mxu0 %v569
        %926 = vmatpush.msra.mxu0 %v565
        %927 = vmatpush.msra.mxu0 %v561
        %928 = vmatpush.msra.mxu0 %v557
        %929 = vmatpush.msra.mxu0 %v553
        %930 = vmatpush.msra.mxu0 %v549
        %931 = vmatpush.msra.mxu0 %v545
        %932 = vmatpush.msra.mxu0 %v541
        %933 = vmatpush.msra.mxu0 %v537
        %934 = vmatpush.msra.mxu0 %v533
        %935 = vmatpush.msra.mxu0 %v529
        %936 = vmatpush.msra.mxu0 %v525
        %937 = vmatpush.msra.mxu0 %v521
        %938 = vmatpush.msra.mxu0 %v517
        %939 = vmatpush.msra.mxu0 %v513
        %940 = vmatmul.f32.gmra.mxu0 %v447
        %v941 = vpop.f32.mrf.mxu0
        %v942 = vadd.f32 %v922, %v941
        %943 = vdwg.mxu0
        %944 = vmatpush.msra.mxu0 %v510
        %945 = vmatpush.msra.mxu0 %v506
        %946 = vmatpush.msra.mxu0 %v502
        %947 = vmatpush.msra.mxu0 %v498
        %948 = vmatpush.msra.mxu0 %v494
        %949 = vmatpush.msra.mxu0 %v490
        %950 = vmatpush.msra.mxu0 %v486
        %951 = vmatpush.msra.mxu0 %v482
        %952 = vmatpush.msra.mxu0 %v478
        %953 = vmatpush.msra.mxu0 %v474
        %954 = vmatpush.msra.mxu0 %v470
        %955 = vmatpush.msra.mxu0 %v466
        %956 = vmatpush.msra.mxu0 %v462
        %957 = vmatpush.msra.mxu0 %v458
        %958 = vmatpush.msra.mxu0 %v454
        %959 = vmatpush.msra.mxu0 %v450
        %960 = vmatmul.f32.gmra.mxu0 %v446
        %v961 = vpop.f32.mrf.mxu0
        %v962 = vadd.f32 %v822, %v961
        %963 = vdwg.mxu0
        %964 = vmatpush.msra.mxu0 %v574
        %965 = vmatpush.msra.mxu0 %v570
        %966 = vmatpush.msra.mxu0 %v566
        %967 = vmatpush.msra.mxu0 %v562
        %968 = vmatpush.msra.mxu0 %v558
        %969 = vmatpush.msra.mxu0 %v554
        %970 = vmatpush.msra.mxu0 %v550
        %971 = vmatpush.msra.mxu0 %v546
        %972 = vmatpush.msra.mxu0 %v542
        %973 = vmatpush.msra.mxu0 %v538
        %974 = vmatpush.msra.mxu0 %v534
        %975 = vmatpush.msra.mxu0 %v530
        %976 = vmatpush.msra.mxu0 %v526
        %977 = vmatpush.msra.mxu0 %v522
        %978 = vmatpush.msra.mxu0 %v518
        %979 = vmatpush.msra.mxu0 %v514
        %980 = vmatmul.f32.gmra.mxu0 %v447
        %v981 = vpop.f32.mrf.mxu0
        %v982 = vadd.f32 %v962, %v981
        %983 = vdwg.mxu0
        %984 = vmatpush.msra.mxu0 %v511
        %985 = vmatpush.msra.mxu0 %v507
        %986 = vmatpush.msra.mxu0 %v503
        %987 = vmatpush.msra.mxu0 %v499
        %988 = vmatpush.msra.mxu0 %v495
        %989 = vmatpush.msra.mxu0 %v491
        %990 = vmatpush.msra.mxu0 %v487
        %991 = vmatpush.msra.mxu0 %v483
        %992 = vmatpush.msra.mxu0 %v479
        %993 = vmatpush.msra.mxu0 %v475
        %994 = vmatpush.msra.mxu0 %v471
        %995 = vmatpush.msra.mxu0 %v467
        %996 = vmatpush.msra.mxu0 %v463
        %997 = vmatpush.msra.mxu0 %v459
        %998 = vmatpush.msra.mxu0 %v455
        %999 = vmatpush.msra.mxu0 %v451
        %1000 = vmatmul.f32.gmra.mxu0 %v446
        %v1001 = vpop.f32.mrf.mxu0
        %v1002 = vadd.f32 %v862, %v1001
        %1003 = vdwg.mxu0
        %1004 = vmatpush.msra.mxu0 %v575
        %1005 = vmatpush.msra.mxu0 %v571
        %1006 = vmatpush.msra.mxu0 %v567
        %1007 = vmatpush.msra.mxu0 %v563
        %1008 = vmatpush.msra.mxu0 %v559
        %1009 = vmatpush.msra.mxu0 %v555
        %1010 = vmatpush.msra.mxu0 %v551
        %1011 = vmatpush.msra.mxu0 %v547
        %1012 = vmatpush.msra.mxu0 %v543
        %1013 = vmatpush.msra.mxu0 %v539
        %1014 = vmatpush.msra.mxu0 %v535
        %1015 = vmatpush.msra.mxu0 %v531
        %1016 = vmatpush.msra.mxu0 %v527
        %1017 = vmatpush.msra.mxu0 %v523
        %1018 = vmatpush.msra.mxu0 %v519
        %1019 = vmatpush.msra.mxu0 %v515
        %1020 = vmatmul.f32.gmra.mxu0 %v447
        %v1021 = vpop.f32.mrf.mxu0
        %v1022 = vadd.f32 %v1002, %v1021
        %1023 = vdwg.mxu0
        %v1024 = vld [vmem:[#allocation10] sm:$0xf]
        %v1026 = vperm.slane %v1024, 0
        %v1027 = vperm.slane %v1024, 1
        %v1028 = vperm.slane %v1024, 2
        %v1029 = vperm.slane %v1024, 3
        %v1034 = vadd.f32 %v902, %v1026
        %v1035 = vadd.f32 %v942, %v1027
        %v1036 = vadd.f32 %v982, %v1028
        %v1037 = vadd.f32 %v1022, %v1029
        %v1038 = vld [vmem:[#allocation11] sm:$0xff]
        %v1039 = vld [vmem:[#allocation11 + $0x8] sm:$0xff]
        %v1040 = vld [vmem:[#allocation11 + $0x10] sm:$0xff]
        %v1041 = vld [vmem:[#allocation11 + $0x18] sm:$0xff]
        %v1042 = vld [vmem:[#allocation11 + $0x20] sm:$0xff]
        %v1043 = vld [vmem:[#allocation11 + $0x28] sm:$0xff]
        %v1044 = vld [vmem:[#allocation11 + $0x30] sm:$0xff]
        %v1045 = vld [vmem:[#allocation11 + $0x38] sm:$0xff]
        %v1046 = vld [vmem:[#allocation11 + $0x40] sm:$0xff]
        %v1047 = vld [vmem:[#allocation11 + $0x48] sm:$0xff]
        %v1048 = vld [vmem:[#allocation11 + $0x50] sm:$0xff]
        %v1049 = vld [vmem:[#allocation11 + $0x58] sm:$0xff]
        %v1050 = vld [vmem:[#allocation11 + $0x60] sm:$0xff]
        %v1051 = vld [vmem:[#allocation11 + $0x68] sm:$0xff]
        %v1052 = vld [vmem:[#allocation11 + $0x70] sm:$0xff]
        %v1053 = vld [vmem:[#allocation11 + $0x78] sm:$0xff]
        %v1054 = vld [vmem:[#allocation11 + $0x80] sm:$0xff]
        %v1055 = vld [vmem:[#allocation11 + $0x88] sm:$0xff]
        %v1056 = vld [vmem:[#allocation11 + $0x90] sm:$0xff]
        %v1057 = vld [vmem:[#allocation11 + $0x98] sm:$0xff]
        %v1058 = vld [vmem:[#allocation11 + $0xa0] sm:$0xff]
        %v1059 = vld [vmem:[#allocation11 + $0xa8] sm:$0xff]
        %v1060 = vld [vmem:[#allocation11 + $0xb0] sm:$0xff]
        %v1061 = vld [vmem:[#allocation11 + $0xb8] sm:$0xff]
        %v1062 = vld [vmem:[#allocation11 + $0xc0] sm:$0xff]
        %v1063 = vld [vmem:[#allocation11 + $0xc8] sm:$0xff]
        %v1064 = vld [vmem:[#allocation11 + $0xd0] sm:$0xff]
        %v1065 = vld [vmem:[#allocation11 + $0xd8] sm:$0xff]
        %v1066 = vld [vmem:[#allocation11 + $0xe0] sm:$0xff]
        %v1067 = vld [vmem:[#allocation11 + $0xe8] sm:$0xff]
        %v1068 = vld [vmem:[#allocation11 + $0xf0] sm:$0xff]
        %v1069 = vld [vmem:[#allocation11 + $0xf8] sm:$0xff]
        %v1070 = vld [vmem:[#allocation11 + $0x100] sm:$0xff]
        %v1071 = vld [vmem:[#allocation11 + $0x108] sm:$0xff]
        %v1072 = vld [vmem:[#allocation11 + $0x110] sm:$0xff]
        %v1073 = vld [vmem:[#allocation11 + $0x118] sm:$0xff]
        %v1074 = vld [vmem:[#allocation11 + $0x120] sm:$0xff]
        %v1075 = vld [vmem:[#allocation11 + $0x128] sm:$0xff]
        %v1076 = vld [vmem:[#allocation11 + $0x130] sm:$0xff]
        %v1077 = vld [vmem:[#allocation11 + $0x138] sm:$0xff]
        %v1078 = vld [vmem:[#allocation11 + $0x140] sm:$0xff]
        %v1079 = vld [vmem:[#allocation11 + $0x148] sm:$0xff]
        %v1080 = vld [vmem:[#allocation11 + $0x150] sm:$0xff]
        %v1081 = vld [vmem:[#allocation11 + $0x158] sm:$0xff]
        %v1082 = vld [vmem:[#allocation11 + $0x160] sm:$0xff]
        %v1083 = vld [vmem:[#allocation11 + $0x168] sm:$0xff]
        %v1084 = vld [vmem:[#allocation11 + $0x170] sm:$0xff]
        %v1085 = vld [vmem:[#allocation11 + $0x178] sm:$0xff]
        %v1086 = vld [vmem:[#allocation11 + $0x180] sm:$0xff]
        %v1087 = vld [vmem:[#allocation11 + $0x188] sm:$0xff]
        %v1088 = vld [vmem:[#allocation11 + $0x190] sm:$0xff]
        %v1089 = vld [vmem:[#allocation11 + $0x198] sm:$0xff]
        %v1090 = vld [vmem:[#allocation11 + $0x1a0] sm:$0xff]
        %v1091 = vld [vmem:[#allocation11 + $0x1a8] sm:$0xff]
        %v1092 = vld [vmem:[#allocation11 + $0x1b0] sm:$0xff]
        %v1093 = vld [vmem:[#allocation11 + $0x1b8] sm:$0xff]
        %v1094 = vld [vmem:[#allocation11 + $0x1c0] sm:$0xff]
        %v1095 = vld [vmem:[#allocation11 + $0x1c8] sm:$0xff]
        %v1096 = vld [vmem:[#allocation11 + $0x1d0] sm:$0xff]
        %v1097 = vld [vmem:[#allocation11 + $0x1d8] sm:$0xff]
        %v1098 = vld [vmem:[#allocation11 + $0x1e0] sm:$0xff]
        %v1099 = vld [vmem:[#allocation11 + $0x1e8] sm:$0xff]
        %v1100 = vld [vmem:[#allocation11 + $0x1f0] sm:$0xff]
        %v1101 = vld [vmem:[#allocation11 + $0x1f8] sm:$0xff]
        %v1102 = vld [vmem:[#allocation11 + $0x200] sm:$0xff]
        %v1103 = vld [vmem:[#allocation11 + $0x208] sm:$0xff]
        %v1104 = vld [vmem:[#allocation11 + $0x210] sm:$0xff]
        %v1105 = vld [vmem:[#allocation11 + $0x218] sm:$0xff]
        %v1106 = vld [vmem:[#allocation11 + $0x220] sm:$0xff]
        %v1107 = vld [vmem:[#allocation11 + $0x228] sm:$0xff]
        %v1108 = vld [vmem:[#allocation11 + $0x230] sm:$0xff]
        %v1109 = vld [vmem:[#allocation11 + $0x238] sm:$0xff]
        %v1110 = vld [vmem:[#allocation11 + $0x240] sm:$0xff]
        %v1111 = vld [vmem:[#allocation11 + $0x248] sm:$0xff]
        %v1112 = vld [vmem:[#allocation11 + $0x250] sm:$0xff]
        %v1113 = vld [vmem:[#allocation11 + $0x258] sm:$0xff]
        %v1114 = vld [vmem:[#allocation11 + $0x260] sm:$0xff]
        %v1115 = vld [vmem:[#allocation11 + $0x268] sm:$0xff]
        %v1116 = vld [vmem:[#allocation11 + $0x270] sm:$0xff]
        %v1117 = vld [vmem:[#allocation11 + $0x278] sm:$0xff]
        %v1118 = vld [vmem:[#allocation11 + $0x280] sm:$0xff]
        %v1119 = vld [vmem:[#allocation11 + $0x288] sm:$0xff]
        %v1120 = vld [vmem:[#allocation11 + $0x290] sm:$0xff]
        %v1121 = vld [vmem:[#allocation11 + $0x298] sm:$0xff]
        %v1122 = vld [vmem:[#allocation11 + $0x2a0] sm:$0xff]
        %v1123 = vld [vmem:[#allocation11 + $0x2a8] sm:$0xff]
        %v1124 = vld [vmem:[#allocation11 + $0x2b0] sm:$0xff]
        %v1125 = vld [vmem:[#allocation11 + $0x2b8] sm:$0xff]
        %v1126 = vld [vmem:[#allocation11 + $0x2c0] sm:$0xff]
        %v1127 = vld [vmem:[#allocation11 + $0x2c8] sm:$0xff]
        %v1128 = vld [vmem:[#allocation11 + $0x2d0] sm:$0xff]
        %v1129 = vld [vmem:[#allocation11 + $0x2d8] sm:$0xff]
        %v1130 = vld [vmem:[#allocation11 + $0x2e0] sm:$0xff]
        %v1131 = vld [vmem:[#allocation11 + $0x2e8] sm:$0xff]
        %v1132 = vld [vmem:[#allocation11 + $0x2f0] sm:$0xff]
        %v1133 = vld [vmem:[#allocation11 + $0x2f8] sm:$0xff]
        %v1134 = vld [vmem:[#allocation11 + $0x300] sm:$0xff]
        %v1135 = vld [vmem:[#allocation11 + $0x308] sm:$0xff]
        %v1136 = vld [vmem:[#allocation11 + $0x310] sm:$0xff]
        %v1137 = vld [vmem:[#allocation11 + $0x318] sm:$0xff]
        %v1138 = vld [vmem:[#allocation11 + $0x320] sm:$0xff]
        %v1139 = vld [vmem:[#allocation11 + $0x328] sm:$0xff]
        %v1140 = vld [vmem:[#allocation11 + $0x330] sm:$0xff]
        %v1141 = vld [vmem:[#allocation11 + $0x338] sm:$0xff]
        %v1142 = vld [vmem:[#allocation11 + $0x340] sm:$0xff]
        %v1143 = vld [vmem:[#allocation11 + $0x348] sm:$0xff]
        %v1144 = vld [vmem:[#allocation11 + $0x350] sm:$0xff]
        %v1145 = vld [vmem:[#allocation11 + $0x358] sm:$0xff]
        %v1146 = vld [vmem:[#allocation11 + $0x360] sm:$0xff]
        %v1147 = vld [vmem:[#allocation11 + $0x368] sm:$0xff]
        %v1148 = vld [vmem:[#allocation11 + $0x370] sm:$0xff]
        %v1149 = vld [vmem:[#allocation11 + $0x378] sm:$0xff]
        %v1150 = vld [vmem:[#allocation11 + $0x380] sm:$0xff]
        %v1151 = vld [vmem:[#allocation11 + $0x388] sm:$0xff]
        %v1152 = vld [vmem:[#allocation11 + $0x390] sm:$0xff]
        %v1153 = vld [vmem:[#allocation11 + $0x398] sm:$0xff]
        %v1154 = vld [vmem:[#allocation11 + $0x3a0] sm:$0xff]
        %v1155 = vld [vmem:[#allocation11 + $0x3a8] sm:$0xff]
        %v1156 = vld [vmem:[#allocation11 + $0x3b0] sm:$0xff]
        %v1157 = vld [vmem:[#allocation11 + $0x3b8] sm:$0xff]
        %v1158 = vld [vmem:[#allocation11 + $0x3c0] sm:$0xff]
        %v1159 = vld [vmem:[#allocation11 + $0x3c8] sm:$0xff]
        %v1160 = vld [vmem:[#allocation11 + $0x3d0] sm:$0xff]
        %v1161 = vld [vmem:[#allocation11 + $0x3d8] sm:$0xff]
        %v1162 = vld [vmem:[#allocation11 + $0x3e0] sm:$0xff]
        %v1163 = vld [vmem:[#allocation11 + $0x3e8] sm:$0xff]
        %v1164 = vld [vmem:[#allocation11 + $0x3f0] sm:$0xff]
        %v1165 = vld [vmem:[#allocation11 + $0x3f8] sm:$0xff]
        %v1166 = vld [vmem:[#allocation13] sm:$0xff]
        %v1167 = vld [vmem:[#allocation13 + $0x8] sm:$0xff]
        %v1168 = vld [vmem:[#allocation13 + $0x10] sm:$0xff]
        %v1169 = vld [vmem:[#allocation13 + $0x18] sm:$0xff]
        %v1170 = vld [vmem:[#allocation13 + $0x20] sm:$0xff]
        %v1171 = vld [vmem:[#allocation13 + $0x28] sm:$0xff]
        %v1172 = vld [vmem:[#allocation13 + $0x30] sm:$0xff]
        %v1173 = vld [vmem:[#allocation13 + $0x38] sm:$0xff]
        %v1174 = vld [vmem:[#allocation13 + $0x40] sm:$0xff]
        %v1175 = vld [vmem:[#allocation13 + $0x48] sm:$0xff]
        %v1176 = vld [vmem:[#allocation13 + $0x50] sm:$0xff]
        %v1177 = vld [vmem:[#allocation13 + $0x58] sm:$0xff]
        %v1178 = vld [vmem:[#allocation13 + $0x60] sm:$0xff]
        %v1179 = vld [vmem:[#allocation13 + $0x68] sm:$0xff]
        %v1180 = vld [vmem:[#allocation13 + $0x70] sm:$0xff]
        %v1181 = vld [vmem:[#allocation13 + $0x78] sm:$0xff]
        %v1182 = vld [vmem:[#allocation13 + $0x80] sm:$0xff]
        %v1183 = vld [vmem:[#allocation13 + $0x88] sm:$0xff]
        %v1184 = vld [vmem:[#allocation13 + $0x90] sm:$0xff]
        %v1185 = vld [vmem:[#allocation13 + $0x98] sm:$0xff]
        %v1186 = vld [vmem:[#allocation13 + $0xa0] sm:$0xff]
        %v1187 = vld [vmem:[#allocation13 + $0xa8] sm:$0xff]
        %v1188 = vld [vmem:[#allocation13 + $0xb0] sm:$0xff]
        %v1189 = vld [vmem:[#allocation13 + $0xb8] sm:$0xff]
        %v1190 = vld [vmem:[#allocation13 + $0xc0] sm:$0xff]
        %v1191 = vld [vmem:[#allocation13 + $0xc8] sm:$0xff]
        %v1192 = vld [vmem:[#allocation13 + $0xd0] sm:$0xff]
        %v1193 = vld [vmem:[#allocation13 + $0xd8] sm:$0xff]
        %v1194 = vld [vmem:[#allocation13 + $0xe0] sm:$0xff]
        %v1195 = vld [vmem:[#allocation13 + $0xe8] sm:$0xff]
        %v1196 = vld [vmem:[#allocation13 + $0xf0] sm:$0xff]
        %v1197 = vld [vmem:[#allocation13 + $0xf8] sm:$0xff]
        %v1198 = vld [vmem:[#allocation13 + $0x100] sm:$0xff]
        %v1199 = vld [vmem:[#allocation13 + $0x108] sm:$0xff]
        %v1200 = vld [vmem:[#allocation13 + $0x110] sm:$0xff]
        %v1201 = vld [vmem:[#allocation13 + $0x118] sm:$0xff]
        %v1202 = vld [vmem:[#allocation13 + $0x120] sm:$0xff]
        %v1203 = vld [vmem:[#allocation13 + $0x128] sm:$0xff]
        %v1204 = vld [vmem:[#allocation13 + $0x130] sm:$0xff]
        %v1205 = vld [vmem:[#allocation13 + $0x138] sm:$0xff]
        %v1206 = vld [vmem:[#allocation13 + $0x140] sm:$0xff]
        %v1207 = vld [vmem:[#allocation13 + $0x148] sm:$0xff]
        %v1208 = vld [vmem:[#allocation13 + $0x150] sm:$0xff]
        %v1209 = vld [vmem:[#allocation13 + $0x158] sm:$0xff]
        %v1210 = vld [vmem:[#allocation13 + $0x160] sm:$0xff]
        %v1211 = vld [vmem:[#allocation13 + $0x168] sm:$0xff]
        %v1212 = vld [vmem:[#allocation13 + $0x170] sm:$0xff]
        %v1213 = vld [vmem:[#allocation13 + $0x178] sm:$0xff]
        %v1214 = vld [vmem:[#allocation13 + $0x180] sm:$0xff]
        %v1215 = vld [vmem:[#allocation13 + $0x188] sm:$0xff]
        %v1216 = vld [vmem:[#allocation13 + $0x190] sm:$0xff]
        %v1217 = vld [vmem:[#allocation13 + $0x198] sm:$0xff]
        %v1218 = vld [vmem:[#allocation13 + $0x1a0] sm:$0xff]
        %v1219 = vld [vmem:[#allocation13 + $0x1a8] sm:$0xff]
        %v1220 = vld [vmem:[#allocation13 + $0x1b0] sm:$0xff]
        %v1221 = vld [vmem:[#allocation13 + $0x1b8] sm:$0xff]
        %v1222 = vld [vmem:[#allocation13 + $0x1c0] sm:$0xff]
        %v1223 = vld [vmem:[#allocation13 + $0x1c8] sm:$0xff]
        %v1224 = vld [vmem:[#allocation13 + $0x1d0] sm:$0xff]
        %v1225 = vld [vmem:[#allocation13 + $0x1d8] sm:$0xff]
        %v1226 = vld [vmem:[#allocation13 + $0x1e0] sm:$0xff]
        %v1227 = vld [vmem:[#allocation13 + $0x1e8] sm:$0xff]
        %v1228 = vld [vmem:[#allocation13 + $0x1f0] sm:$0xff]
        %v1229 = vld [vmem:[#allocation13 + $0x1f8] sm:$0xff]
        %1230 = vmatpush.msra.mxu0 %v1196
        %1231 = vmatpush.msra.mxu0 %v1194
        %1232 = vmatpush.msra.mxu0 %v1192
        %1233 = vmatpush.msra.mxu0 %v1190
        %1234 = vmatpush.msra.mxu0 %v1188
        %1235 = vmatpush.msra.mxu0 %v1186
        %1236 = vmatpush.msra.mxu0 %v1184
        %1237 = vmatpush.msra.mxu0 %v1182
        %1238 = vmatpush.msra.mxu0 %v1180
        %1239 = vmatpush.msra.mxu0 %v1178
        %1240 = vmatpush.msra.mxu0 %v1176
        %1241 = vmatpush.msra.mxu0 %v1174
        %1242 = vmatpush.msra.mxu0 %v1172
        %1243 = vmatpush.msra.mxu0 %v1170
        %1244 = vmatpush.msra.mxu0 %v1168
        %1245 = vmatpush.msra.mxu0 %v1166
        %1246 = vmatmul.f32.gmra.mxu0 %v444
        %v1247 = vpop.f32.mrf.mxu0
        %v1248 = vadd.f32 0.0, %v1247
        %1249 = vdwg.mxu0
        %1250 = vmatpush.msra.mxu0 %v1228
        %1251 = vmatpush.msra.mxu0 %v1226
        %1252 = vmatpush.msra.mxu0 %v1224
        %1253 = vmatpush.msra.mxu0 %v1222
        %1254 = vmatpush.msra.mxu0 %v1220
        %1255 = vmatpush.msra.mxu0 %v1218
        %1256 = vmatpush.msra.mxu0 %v1216
        %1257 = vmatpush.msra.mxu0 %v1214
        %1258 = vmatpush.msra.mxu0 %v1212
        %1259 = vmatpush.msra.mxu0 %v1210
        %1260 = vmatpush.msra.mxu0 %v1208
        %1261 = vmatpush.msra.mxu0 %v1206
        %1262 = vmatpush.msra.mxu0 %v1204
        %1263 = vmatpush.msra.mxu0 %v1202
        %1264 = vmatpush.msra.mxu0 %v1200
        %1265 = vmatpush.msra.mxu0 %v1198
        %1266 = vmatmul.f32.gmra.mxu0 %v445
        %v1267 = vpop.f32.mrf.mxu0
        %v1268 = vadd.f32 %v1248, %v1267
        %1269 = vdwg.mxu0
        %1270 = vmatpush.msra.mxu0 %v1197
        %1271 = vmatpush.msra.mxu0 %v1195
        %1272 = vmatpush.msra.mxu0 %v1193
        %1273 = vmatpush.msra.mxu0 %v1191
        %1274 = vmatpush.msra.mxu0 %v1189
        %1275 = vmatpush.msra.mxu0 %v1187
        %1276 = vmatpush.msra.mxu0 %v1185
        %1277 = vmatpush.msra.mxu0 %v1183
        %1278 = vmatpush.msra.mxu0 %v1181
        %1279 = vmatpush.msra.mxu0 %v1179
        %1280 = vmatpush.msra.mxu0 %v1177
        %1281 = vmatpush.msra.mxu0 %v1175
        %1282 = vmatpush.msra.mxu0 %v1173
        %1283 = vmatpush.msra.mxu0 %v1171
        %1284 = vmatpush.msra.mxu0 %v1169
        %1285 = vmatpush.msra.mxu0 %v1167
        %1286 = vmatmul.f32.gmra.mxu0 %v444
        %v1287 = vpop.f32.mrf.mxu0
        %v1288 = vadd.f32 0.0, %v1287
        %1289 = vdwg.mxu0
        %1290 = vmatpush.msra.mxu0 %v1229
        %1291 = vmatpush.msra.mxu0 %v1227
        %1292 = vmatpush.msra.mxu0 %v1225
        %1293 = vmatpush.msra.mxu0 %v1223
        %1294 = vmatpush.msra.mxu0 %v1221
        %1295 = vmatpush.msra.mxu0 %v1219
        %1296 = vmatpush.msra.mxu0 %v1217
        %1297 = vmatpush.msra.mxu0 %v1215
        %1298 = vmatpush.msra.mxu0 %v1213
        %1299 = vmatpush.msra.mxu0 %v1211
        %1300 = vmatpush.msra.mxu0 %v1209
        %1301 = vmatpush.msra.mxu0 %v1207
        %1302 = vmatpush.msra.mxu0 %v1205
        %1303 = vmatpush.msra.mxu0 %v1203
        %1304 = vmatpush.msra.mxu0 %v1201
        %1305 = vmatpush.msra.mxu0 %v1199
        %1306 = vmatmul.f32.gmra.mxu0 %v445
        %v1307 = vpop.f32.mrf.mxu0
        %v1308 = vadd.f32 %v1288, %v1307
        %1309 = vdwg.mxu0
        %1310 = vmatpush.msra.mxu0 %v1068
        %1311 = vmatpush.msra.mxu0 %v1066
        %1312 = vmatpush.msra.mxu0 %v1064
        %1313 = vmatpush.msra.mxu0 %v1062
        %1314 = vmatpush.msra.mxu0 %v1060
        %1315 = vmatpush.msra.mxu0 %v1058
        %1316 = vmatpush.msra.mxu0 %v1056
        %1317 = vmatpush.msra.mxu0 %v1054
        %1318 = vmatpush.msra.mxu0 %v1052
        %1319 = vmatpush.msra.mxu0 %v1050
        %1320 = vmatpush.msra.mxu0 %v1048
        %1321 = vmatpush.msra.mxu0 %v1046
        %1322 = vmatpush.msra.mxu0 %v1044
        %1323 = vmatpush.msra.mxu0 %v1042
        %1324 = vmatpush.msra.mxu0 %v1040
        %1325 = vmatpush.msra.mxu0 %v1038
        %1326 = vmatmul.f32.gmra.mxu0 %v1034
        %v1327 = vpop.f32.mrf.mxu0
        %v1328 = vadd.f32 %v1268, %v1327
        %1329 = vdwg.mxu0
        %1330 = vmatpush.msra.mxu0 %v1100
        %1331 = vmatpush.msra.mxu0 %v1098
        %1332 = vmatpush.msra.mxu0 %v1096
        %1333 = vmatpush.msra.mxu0 %v1094
        %1334 = vmatpush.msra.mxu0 %v1092
        %1335 = vmatpush.msra.mxu0 %v1090
        %1336 = vmatpush.msra.mxu0 %v1088
        %1337 = vmatpush.msra.mxu0 %v1086
        %1338 = vmatpush.msra.mxu0 %v1084
        %1339 = vmatpush.msra.mxu0 %v1082
        %1340 = vmatpush.msra.mxu0 %v1080
        %1341 = vmatpush.msra.mxu0 %v1078
        %1342 = vmatpush.msra.mxu0 %v1076
        %1343 = vmatpush.msra.mxu0 %v1074
        %1344 = vmatpush.msra.mxu0 %v1072
        %1345 = vmatpush.msra.mxu0 %v1070
        %1346 = vmatmul.f32.gmra.mxu0 %v1035
        %v1347 = vpop.f32.mrf.mxu0
        %v1348 = vadd.f32 %v1328, %v1347
        %1349 = vdwg.mxu0
        %1350 = vmatpush.msra.mxu0 %v1132
        %1351 = vmatpush.msra.mxu0 %v1130
        %1352 = vmatpush.msra.mxu0 %v1128
        %1353 = vmatpush.msra.mxu0 %v1126
        %1354 = vmatpush.msra.mxu0 %v1124
        %1355 = vmatpush.msra.mxu0 %v1122
        %1356 = vmatpush.msra.mxu0 %v1120
        %1357 = vmatpush.msra.mxu0 %v1118
        %1358 = vmatpush.msra.mxu0 %v1116
        %1359 = vmatpush.msra.mxu0 %v1114
        %1360 = vmatpush.msra.mxu0 %v1112
        %1361 = vmatpush.msra.mxu0 %v1110
        %1362 = vmatpush.msra.mxu0 %v1108
        %1363 = vmatpush.msra.mxu0 %v1106
        %1364 = vmatpush.msra.mxu0 %v1104
        %1365 = vmatpush.msra.mxu0 %v1102
        %1366 = vmatmul.f32.gmra.mxu0 %v1036
        %v1367 = vpop.f32.mrf.mxu0
        %v1368 = vadd.f32 %v1348, %v1367
        %1369 = vdwg.mxu0
        %1370 = vmatpush.msra.mxu0 %v1164
        %1371 = vmatpush.msra.mxu0 %v1162
        %1372 = vmatpush.msra.mxu0 %v1160
        %1373 = vmatpush.msra.mxu0 %v1158
        %1374 = vmatpush.msra.mxu0 %v1156
        %1375 = vmatpush.msra.mxu0 %v1154
        %1376 = vmatpush.msra.mxu0 %v1152
        %1377 = vmatpush.msra.mxu0 %v1150
        %1378 = vmatpush.msra.mxu0 %v1148
        %1379 = vmatpush.msra.mxu0 %v1146
        %1380 = vmatpush.msra.mxu0 %v1144
        %1381 = vmatpush.msra.mxu0 %v1142
        %1382 = vmatpush.msra.mxu0 %v1140
        %1383 = vmatpush.msra.mxu0 %v1138
        %1384 = vmatpush.msra.mxu0 %v1136
        %1385 = vmatpush.msra.mxu0 %v1134
        %1386 = vmatmul.f32.gmra.mxu0 %v1037
        %v1387 = vpop.f32.mrf.mxu0
        %v1388 = vadd.f32 %v1368, %v1387
        %1389 = vdwg.mxu0
        %1390 = vmatpush.msra.mxu0 %v1069
        %1391 = vmatpush.msra.mxu0 %v1067
        %1392 = vmatpush.msra.mxu0 %v1065
        %1393 = vmatpush.msra.mxu0 %v1063
        %1394 = vmatpush.msra.mxu0 %v1061
        %1395 = vmatpush.msra.mxu0 %v1059
        %1396 = vmatpush.msra.mxu0 %v1057
        %1397 = vmatpush.msra.mxu0 %v1055
        %1398 = vmatpush.msra.mxu0 %v1053
        %1399 = vmatpush.msra.mxu0 %v1051
        %1400 = vmatpush.msra.mxu0 %v1049
        %1401 = vmatpush.msra.mxu0 %v1047
        %1402 = vmatpush.msra.mxu0 %v1045
        %1403 = vmatpush.msra.mxu0 %v1043
        %1404 = vmatpush.msra.mxu0 %v1041
        %1405 = vmatpush.msra.mxu0 %v1039
        %1406 = vmatmul.f32.gmra.mxu0 %v1034
        %v1407 = vpop.f32.mrf.mxu0
        %v1408 = vadd.f32 %v1308, %v1407
        %1409 = vdwg.mxu0
        %1410 = vmatpush.msra.mxu0 %v1101
        %1411 = vmatpush.msra.mxu0 %v1099
        %1412 = vmatpush.msra.mxu0 %v1097
        %1413 = vmatpush.msra.mxu0 %v1095
        %1414 = vmatpush.msra.mxu0 %v1093
        %1415 = vmatpush.msra.mxu0 %v1091
        %1416 = vmatpush.msra.mxu0 %v1089
        %1417 = vmatpush.msra.mxu0 %v1087
        %1418 = vmatpush.msra.mxu0 %v1085
        %1419 = vmatpush.msra.mxu0 %v1083
        %1420 = vmatpush.msra.mxu0 %v1081
        %1421 = vmatpush.msra.mxu0 %v1079
        %1422 = vmatpush.msra.mxu0 %v1077
        %1423 = vmatpush.msra.mxu0 %v1075
        %1424 = vmatpush.msra.mxu0 %v1073
        %1425 = vmatpush.msra.mxu0 %v1071
        %1426 = vmatmul.f32.gmra.mxu0 %v1035
        %v1427 = vpop.f32.mrf.mxu0
        %v1428 = vadd.f32 %v1408, %v1427
        %1429 = vdwg.mxu0
        %1430 = vmatpush.msra.mxu0 %v1133
        %1431 = vmatpush.msra.mxu0 %v1131
        %1432 = vmatpush.msra.mxu0 %v1129
        %1433 = vmatpush.msra.mxu0 %v1127
        %1434 = vmatpush.msra.mxu0 %v1125
        %1435 = vmatpush.msra.mxu0 %v1123
        %1436 = vmatpush.msra.mxu0 %v1121
        %1437 = vmatpush.msra.mxu0 %v1119
        %1438 = vmatpush.msra.mxu0 %v1117
        %1439 = vmatpush.msra.mxu0 %v1115
        %1440 = vmatpush.msra.mxu0 %v1113
        %1441 = vmatpush.msra.mxu0 %v1111
        %1442 = vmatpush.msra.mxu0 %v1109
        %1443 = vmatpush.msra.mxu0 %v1107
        %1444 = vmatpush.msra.mxu0 %v1105
        %1445 = vmatpush.msra.mxu0 %v1103
        %1446 = vmatmul.f32.gmra.mxu0 %v1036
        %v1447 = vpop.f32.mrf.mxu0
        %v1448 = vadd.f32 %v1428, %v1447
        %1449 = vdwg.mxu0
        %1450 = vmatpush.msra.mxu0 %v1165
        %1451 = vmatpush.msra.mxu0 %v1163
        %1452 = vmatpush.msra.mxu0 %v1161
        %1453 = vmatpush.msra.mxu0 %v1159
        %1454 = vmatpush.msra.mxu0 %v1157
        %1455 = vmatpush.msra.mxu0 %v1155
        %1456 = vmatpush.msra.mxu0 %v1153
        %1457 = vmatpush.msra.mxu0 %v1151
        %1458 = vmatpush.msra.mxu0 %v1149
        %1459 = vmatpush.msra.mxu0 %v1147
        %1460 = vmatpush.msra.mxu0 %v1145
        %1461 = vmatpush.msra.mxu0 %v1143
        %1462 = vmatpush.msra.mxu0 %v1141
        %1463 = vmatpush.msra.mxu0 %v1139
        %1464 = vmatpush.msra.mxu0 %v1137
        %1465 = vmatpush.msra.mxu0 %v1135
        %1466 = vmatmul.f32.gmra.mxu0 %v1037
        %v1467 = vpop.f32.mrf.mxu0
        %v1468 = vadd.f32 %v1448, %v1467
        %1469 = vdwg.mxu0
        %v1470 = vld [vmem:[%s7] sm:$0x3]
        %v1472 = vperm.slane %v1470, 0
        %v1473 = vperm.slane %v1470, 1
        %v1476 = vadd.f32 %v1388, %v1472
        %v1477 = vadd.f32 %v1468, %v1473
        %1478 = vst [vmem:[%s443] sm:$0xff] %v1476
        %1479 = vst [vmem:[%s443 + $0x8] sm:$0xff] %v1477
        %s1480 = sand.u32 %s216, 1
        %s1481 = scalar_lea.sflag [#allocation4], %s1480
        %s1482 = sand.u32 %s216, 1
        %s1483 = smul.addr %s1482, 16
        %s1484 = scalar_lea.vmem [#allocation14], %s1483
        // Predicated region
        $region81: #{tpu_custom_call.1} parent=51 // pred_check
          %p1485 = pneg %p226
        $region82: #{tpu_custom_call.1} parent=51 // pred_check_branch
          %1487 = sbr.rel (%p1485) target = $region84
        $region83: #{tpu_custom_call.1} parent=51 // pred_region
          %1489 = vsyncadd %s1481, 0
          %s1490 = smul.addr %s30, 2
          %s1491 = smul.addr %s1490, 8
          %s1492 = scalar_lea.hbm %s8, %s1491
          %s1494 = sshll.u32 %s1484, 4
          %s1495 = int_to_ptr.vmem [resolvable:$true] %s1494
          %s1496 = sshll.u32 %s1492, 4
          %s1497 = int_to_ptr.hbm [resolvable:$true] %s1496
          %1499 = dma.vmem_to_hbm [thread:$0]  %s1495, 256, %s1497, %s1481
        $region84: #{tpu_custom_call.1} parent=51 // pred_fallthru
          _
      $region52: #{tpu_custom_call.1} parent=5 // pred_fallthru
        _
      %p1500 = scmp.le.s32.totalorder 2, %s25
      // Predicated region
      $region85: #{tpu_custom_call.1} parent=5 // pred_check
        %p1501 = pneg %p1500
      $region86: #{tpu_custom_call.1} parent=5 // pred_check_branch
        %1503 = sbr.rel (%p1501) target = $region88
      $region87: #{tpu_custom_call.1} parent=5 // pred_region
        %s1504 = ssub.s32 %s25, 2
        // Predicated region
        $region89: #{tpu_custom_call.1} parent=87 // pred_check
          %p1505 = pneg %p232
        $region90: #{tpu_custom_call.1} parent=87 // pred_check_branch
          %1507 = sbr.rel (%p1505) target = $region92
        $region91: #{tpu_custom_call.1} parent=87 // pred_region
          %s1508 = sand.u32 %s217, 1
          %s1509 = scalar_lea.sflag [#allocation4], %s1508
          %s1510 = sand.u32 %s217, 1
          %s1511 = smul.addr %s1510, 16
          %s1512 = scalar_lea.vmem [#allocation14], %s1511
          %1514 = dma.done %s1509, 256
        $region92: #{tpu_custom_call.1} parent=87 // pred_fallthru
          _
      $region88: #{tpu_custom_call.1} parent=5 // pred_fallthru
        _
    $region6: #{tpu_custom_call.1} parent=1 // loop_footer
      %s29 = sadd.s32 1, %s25
    $region7: #{tpu_custom_call.1} parent=1 // loop_footer_branch
      %24 = sbr.rel target = $region3
    $region8: #{tpu_custom_call.1} parent=1 // loop_exit
      _
    %1515 = vsyncpa [#allocation3], 1
    %s1516 = scalar_lea.sflag [#allocation3], 1
    %1517 = vsyncpa %s1516, 1
    %1518 = vsyncpa [#allocation6], 1
    %s1519 = scalar_lea.sflag [#allocation6], 1
    %1520 = vsyncpa %s1519, 1
    %1521 = vsyncpa [#allocation9], 1
    %1522 = vsyncpa [#allocation12], 1
    %1523 = vsyncpa [#allocation4], 1
    %s1524 = scalar_lea.sflag [#allocation4], 1
    %1525 = vsyncpa %s1524, 1

</llo_original>
